<compile_context>
chip_gen: v5e
topology: v5e:2x2
jax: 0.10.0
libtpu: 0.0.40
codegen_flags: <defaults>
</compile_context>

<pallas_src>
import functools

import jax
import jax.numpy as jnp
import numpy as np
from jax.experimental import pallas as pl
from jax.experimental.pallas import tpu as pltpu

_LANES = 128


def _round_up(n, m):
    return ((n + m - 1) // m) * m


def _subsample(v, rows, cols, s):
    """v: [rows*s, cols*s, C] -> [rows, cols, C], taking every s-th row/col."""
    if s == 1:
        return v
    c = v.shape[-1]
    return v.reshape(rows, s, cols, s, c)[:, 0, :, 0, :]


def _read_window(ref, r0, nrows, c0, ncols, stride):
    v = ref[pl.ds(r0, nrows * stride), pl.ds(c0, ncols * stride), :]
    return _subsample(v, nrows, ncols, stride)


def _bottleneck_kernel(x_ref, w1_ref, s1_ref, b1_ref,
                       w2_ref, s2_ref, b2_ref,
                       w3_ref, s3_ref, b3_ref,
                       *rest,
                       H, W, Cin, P, Cout, stride, TR, has_proj):
    if has_proj:
        wsc_ref, ssc_ref, bsc_ref, out_ref, hp_ref = rest
    else:
        out_ref, hp_ref = rest

    f32, bf16 = jnp.float32, jnp.bfloat16
    Wo = W // stride                     # wrapper enforces W % stride == 0
    Sp = TR * stride + 2                 # h1 rows held in the padded scratch

    rb = pl.program_id(1)
    X0 = pl.multiple_of(rb * (TR * stride), TR * stride)   # first interior x row

    def conv1_rows(x_rows):
        # x_rows: [r, W, Cin] f32 -> ReLU(BN1(conv1(x))) as [r, W, P] f32
        r = x_rows.shape[0]
        h = jnp.dot(x_rows.reshape(r * W, Cin).astype(bf16), w1_ref[...],
                    preferred_element_type=f32)
        h = jnp.maximum(h * s1_ref[...] + b1_ref[...], 0.0)
        return h.reshape(r, W, P)

    # ---- conv1 + BN1 + ReLU into zero-padded scratch [Sp, W+2, P] ----------
    # interior rows of this block (always in range)
    hp_ref[1:Sp - 1, 1:W + 1, :] = conv1_rows(x_ref[pl.ds(X0, Sp - 2), :, :])
    # left / right zero-padding columns only (no full-buffer zero fill)
    hp_ref[:, 0:1, :] = jnp.zeros((Sp, 1, P), f32)
    hp_ref[:, W + 1:W + 2, :] = jnp.zeros((Sp, 1, P), f32)

    # top halo row: conv zero-padding for the first block, real h1 row otherwise
    @pl.when(rb == 0)
    def _():
        hp_ref[0:1, :, :] = jnp.zeros((1, W + 2, P), f32)

    @pl.when(rb > 0)
    def _():
        hp_ref[0:1, 1:W + 1, :] = conv1_rows(x_ref[pl.ds(X0 - 1, 1), :, :])

    # bottom halo row
    bot_valid = (X0 + Sp - 2) <= (H - 1)

    @pl.when(jnp.logical_not(bot_valid))
    def _():
        hp_ref[Sp - 1:Sp, :, :] = jnp.zeros((1, W + 2, P), f32)

    @pl.when(bot_valid)
    def _():
        hp_ref[Sp - 1:Sp, 1:W + 1, :] = conv1_rows(
            x_ref[pl.ds(X0 + Sp - 2, 1), :, :])

    # ---- conv2 (3x3, stride, pad=1) as 9 shifted matmuls + BN2 + ReLU ------
    acc = jnp.zeros((TR * Wo, P), f32)
    for ky in range(3):
        for kx in range(3):
            win = _read_window(hp_ref, ky, TR, kx, Wo, stride)
            acc = acc + jnp.dot(win.reshape(TR * Wo, P).astype(bf16),
                                w2_ref[ky * 3 + kx],
                                preferred_element_type=f32)
    h2 = jnp.maximum(acc * s2_ref[...] + b2_ref[...], 0.0)

    # ---- conv3 (1x1) + BN3 -------------------------------------------------
    h3 = jnp.dot(h2.astype(bf16), w3_ref[...], preferred_element_type=f32)
    h3 = h3 * s3_ref[...] + b3_ref[...]

    # ---- shortcut ------------------------------------------------------------
    if has_proj:
        xs = _read_window(x_ref, X0, TR, 0, Wo, stride)
        sc = jnp.dot(xs.reshape(TR * Wo, Cin).astype(bf16), wsc_ref[...],
                     preferred_element_type=f32)
        sc = sc * ssc_ref[...] + bsc_ref[...]
    else:
        # identity: stride == 1 and Cin == Cout
        sc = x_ref[pl.ds(X0, TR), :, :].reshape(TR * Wo, Cout)

    out_ref[...] = jnp.maximum(h3 + sc, 0.0).reshape(TR, Wo, Cout)


def bottleneck_forward(x_nchw, params, *, in_planes, planes, stride, row_block=8):
    expansion = 4
    Cout = expansion * planes
    N, C, H, W = x_nchw.shape
    assert C == in_planes
    if stride > 1:
        # TODO(synk): general H/W not divisible by stride (standard ResNet shapes are)
        assert H % stride == 0 and W % stride == 0
    Ho = (H + 2 - 3) // stride + 1
    Wo = (W + 2 - 3) // stride + 1
    has_proj = (stride != 1) or (in_planes != Cout)

    # lane-dense channel widths
    Cin_p = _round_up(in_planes, _LANES)
    P_p = _round_up(planes, _LANES)
    Cout_p = _round_up(Cout, _LANES)

    # output-row block size: largest divisor of Ho that is <= row_block
    TR = min(Ho, row_block)
    while Ho % TR:
        TR -= 1
    Sp = TR * stride + 2

    # NCHW -> NHWC, zero-pad channels
    x = jnp.transpose(x_nchw, (0, 2, 3, 1)).astype(jnp.float32)
    x = jnp.pad(x, ((0, 0), (0, 0), (0, 0), (0, Cin_p - in_planes)))

    eps = 1e-5

    def fold(bn, cpad):
        g, b, m, v = bn
        s = (g / jnp.sqrt(v + eps)).astype(jnp.float32)
        t = (b - m * s).astype(jnp.float32)
        s = jnp.pad(s, (0, cpad - s.shape[0])).reshape(1, -1)
        t = jnp.pad(t, (0, cpad - t.shape[0])).reshape(1, -1)
        return s, t

    def pad2(a, r, c):
        return jnp.pad(a, ((0, r - a.shape[0]), (0, c - a.shape[1])))

    # conv weights (PyTorch OIHW) -> (in, out) matmul form, zero-padded, bf16
    w1 = pad2(params['conv1_w'][:, :, 0, 0].T, Cin_p, P_p).astype(jnp.bfloat16)
    s1, b1 = fold(params['bn1'], P_p)
    w2 = jnp.stack([pad2(params['conv2_w'][:, :, ky, kx].T, P_p, P_p)
                    for ky in range(3) for kx in range(3)],
                   axis=0).astype(jnp.bfloat16)
    s2, b2 = fold(params['bn2'], P_p)
    w3 = pad2(params['conv3_w'][:, :, 0, 0].T, P_p, Cout_p).astype(jnp.bfloat16)
    s3, b3 = fold(params['bn3'], Cout_p)

    args = [x, w1, s1, b1, w2, s2, b2, w3, s3, b3]
    if has_proj:
        wsc = pad2(params['sc_w'][:, :, 0, 0].T, Cin_p, Cout_p).astype(jnp.bfloat16)
        ssc, bsc = fold(params['sc_bn'], Cout_p)
        args += [wsc, ssc, bsc]

    kernel = functools.partial(
        _bottleneck_kernel, H=H, W=W, Cin=Cin_p, P=P_p, Cout=Cout_p,
        stride=stride, TR=TR, has_proj=has_proj)

    def full_spec(a):
        nd = a.ndim
        return pl.BlockSpec(a.shape, lambda n, rb, _nd=nd: (0,) * _nd)

    in_specs = [pl.BlockSpec((None, H, W, Cin_p), lambda n, rb: (n, 0, 0, 0))]
    in_specs += [full_spec(a) for a in args[1:]]
    out_specs = pl.BlockSpec((None, TR, Wo, Cout_p), lambda n, rb: (n, rb, 0, 0))

    n_rb = Ho // TR

    # advisory cost estimate so XLA schedules around the call
    flops = 2 * N * (H * W * Cin_p * P_p
                     + Ho * Wo * 9 * P_p * P_p
                     + Ho * Wo * P_p * Cout_p
                     + (Ho * Wo * Cin_p * Cout_p if has_proj else 0))
    bytes_accessed = int(x.size * 4
                         + sum(a.size * a.dtype.itemsize for a in args[1:])
                         + N * Ho * Wo * Cout_p * 4)
    cost = pl.CostEstimate(flops=int(flops), transcendentals=0,
                           bytes_accessed=bytes_accessed)

    # explicit VMEM budget (v7x: 64 MiB physical / 32 MiB scoped default)
    x_blk = H * W * Cin_p * 4
    out_blk = TR * Wo * Cout_p * 4
    w_bytes = sum(a.size * a.dtype.itemsize for a in args[1:])
    scratch_bytes = Sp * (W + 2) * P_p * 4
    vmem_est = 2 * (x_blk + out_blk + w_bytes) + scratch_bytes
    vmem_limit = int(min(max(2 * vmem_est, 16 * 1024 * 1024), 32 * 1024 * 1024))

    out_padded = pl.pallas_call(
        kernel,
        out_shape=jax.ShapeDtypeStruct((N, Ho, Wo, Cout_p), jnp.float32),
        grid_spec=pltpu.PrefetchScalarGridSpec(
            num_scalar_prefetch=0,
            grid=(N, n_rb),
            in_specs=in_specs,
            out_specs=out_specs,
            scratch_shapes=[pltpu.VMEM((Sp, W + 2, P_p), jnp.float32)]),
        compiler_params=pltpu.CompilerParams(
            dimension_semantics=("parallel", "parallel"),
            vmem_limit_bytes=vmem_limit),
        cost_estimate=cost,
    )(*args)

    # drop channel padding, back to NCHW
    return jnp.transpose(out_padded[..., :Cout], (0, 3, 1, 2))


def bottleneck_ref(x, params, *, in_planes, planes, stride, bf16_matmuls=False):
    """Pure-JAX NCHW reference mirroring the PyTorch module (eval-mode BN).

    With bf16_matmuls=True conv operands are rounded to bfloat16 with f32
    accumulation, matching the Pallas kernel's MXU precision.
    """
    eps = 1e-5
    expansion = 4
    cdt = jnp.bfloat16 if bf16_matmuls else jnp.float32

    def conv(x, w, s=1, p=0):
        return jax.lax.conv_general_dilated(
            x.astype(cdt), w.astype(cdt), (s, s), [(p, p), (p, p)],
            dimension_numbers=('NCHW', 'OIHW', 'NCHW'),
            preferred_element_type=jnp.float32)

    def bn(x, bnp):
        g, b, m, v = bnp
        sc = g / jnp.sqrt(v + eps)
        return x * sc[None, :, None, None] + (b - m * sc)[None, :, None, None]

    out = jax.nn.relu(bn(conv(x, params['conv1_w']), params['bn1']))
    out = jax.nn.relu(bn(conv(out, params['conv2_w'], s=stride, p=1), params['bn2']))
    out = bn(conv(out, params['conv3_w']), params['bn3'])
    if stride != 1 or in_planes != expansion * planes:
        sc = bn(conv(x, params['sc_w'], s=stride), params['sc_bn'])
    else:
        sc = x
    return jax.nn.relu(out + sc)


if __name__ == "__main__":
    N, H, W = 2, 16, 16
    expansion = 4

    def bn_params(k, c):
        k1, k2, k3, k4 = jax.random.split(k, 4)
        return (jax.random.uniform(k1, (c,), jnp.float32, 0.5, 1.5),   # gamma
                jax.random.normal(k2, (c,), jnp.float32) * 0.1,        # beta
                jax.random.normal(k3, (c,), jnp.float32) * 0.1,        # running_mean
                jax.random.uniform(k4, (c,), jnp.float32, 0.5, 1.5))   # running_var

    def make_case(key, in_planes, planes):
        cout = expansion * planes
        ks = jax.random.split(key, 9)
        params = {
            'conv1_w': jax.random.normal(ks[0], (planes, in_planes, 1, 1), jnp.float32) * 0.2,
            'bn1': bn_params(ks[1], planes),
            'conv2_w': jax.random.normal(ks[2], (planes, planes, 3, 3), jnp.float32) * 0.2,
            'bn2': bn_params(ks[3], planes),
            'conv3_w': jax.random.normal(ks[4], (cout, planes, 1, 1), jnp.float32) * 0.2,
            'bn3': bn_params(ks[5], cout),
            'sc_w': jax.random.normal(ks[6], (cout, in_planes, 1, 1), jnp.float32) * 0.2,
            'sc_bn': bn_params(ks[7], cout),
        }
        x = jax.random.normal(ks[8], (N, in_planes, H, W), jnp.float32)
        return params, x

    key = jax.random.PRNGKey(0)
    cases = [
        (8, 4, 1),    # projection shortcut (channel change), stride 1
        (16, 4, 1),   # identity shortcut
        (16, 8, 2),   # projection shortcut with stride 2
    ]
    for i, (in_planes, planes, stride) in enumerate(cases):
        params, x = make_case(jax.random.fold_in(key, i), in_planes, planes)
        out = bottleneck_forward(x, params, in_planes=in_planes, planes=planes,
                                 stride=stride)
        out = jax.block_until_ready(out)

        ref_lo = bottleneck_ref(x, params, in_planes=in_planes, planes=planes,
                                stride=stride, bf16_matmuls=True)
        ref_hi = bottleneck_ref(x, params, in_planes=in_planes, planes=planes,
                                stride=stride, bf16_matmuls=False)
        assert out.shape == ref_hi.shape, (out.shape, ref_hi.shape)
        # tight check against a reference matching the kernel's MXU precision
        np.testing.assert_allclose(np.asarray(out), np.asarray(ref_lo),
                                   rtol=1e-2, atol=1e-2)
        # coarse sanity check against the exact f32 reference (bf16 MXU rounding
        # introduces ~1% relative error)
        np.testing.assert_allclose(np.asarray(out), np.asarray(ref_hi),
                                   rtol=5e-2, atol=2e-1)

    print("KERNEL_OK")
</pallas_src>

<mosaic_0001>
module attributes {stable_mosaic.version = 11 : i64} {
  func.func @_bottleneck_kernel(%arg0: i32, %arg1: i32, %arg2: memref<1x16x16x128xf32, #tpu.memory_space<vmem>>, %arg3: memref<128x128xbf16, #tpu.memory_space<vmem>>, %arg4: memref<1x128xf32, #tpu.memory_space<vmem>>, %arg5: memref<1x128xf32, #tpu.memory_space<vmem>>, %arg6: memref<9x128x128xbf16, #tpu.memory_space<vmem>>, %arg7: memref<1x128xf32, #tpu.memory_space<vmem>>, %arg8: memref<1x128xf32, #tpu.memory_space<vmem>>, %arg9: memref<128x128xbf16, #tpu.memory_space<vmem>>, %arg10: memref<1x128xf32, #tpu.memory_space<vmem>>, %arg11: memref<1x128xf32, #tpu.memory_space<vmem>>, %arg12: memref<128x128xbf16, #tpu.memory_space<vmem>>, %arg13: memref<1x128xf32, #tpu.memory_space<vmem>>, %arg14: memref<1x128xf32, #tpu.memory_space<vmem>>, %arg15: memref<1x8x16x128xf32, #tpu.memory_space<vmem>>, %arg16: memref<10x18x128xf32, #tpu.memory_space<vmem>>) attributes {dimension_semantics = [#tpu.dimension_semantics<parallel>, #tpu.dimension_semantics<parallel>], iteration_bounds = array<i64: 2, 2>, scalar_prefetch = 0 : i64, scratch_operands = 1 : i64, tpu.core_type = #tpu.core_type<tc>, window_params = [{transform_indices = @transform_0, window_bounds = array<i64: 1, 16, 16, 128>}, {pipeline_mode = #tpu.pipeline_mode<synchronous>, transform_indices = @transform_1, window_bounds = array<i64: 128, 128>}, {pipeline_mode = #tpu.pipeline_mode<synchronous>, transform_indices = @transform_2, window_bounds = array<i64: 1, 128>}, {pipeline_mode = #tpu.pipeline_mode<synchronous>, transform_indices = @transform_3, window_bounds = array<i64: 1, 128>}, {pipeline_mode = #tpu.pipeline_mode<synchronous>, transform_indices = @transform_4, window_bounds = array<i64: 9, 128, 128>}, {pipeline_mode = #tpu.pipeline_mode<synchronous>, transform_indices = @transform_5, window_bounds = array<i64: 1, 128>}, {pipeline_mode = #tpu.pipeline_mode<synchronous>, transform_indices = @transform_6, window_bounds = array<i64: 1, 128>}, {pipeline_mode = #tpu.pipeline_mode<synchronous>, transform_indices = @transform_7, window_bounds = array<i64: 128, 128>}, {pipeline_mode = #tpu.pipeline_mode<synchronous>, transform_indices = @transform_8, window_bounds = array<i64: 1, 128>}, {pipeline_mode = #tpu.pipeline_mode<synchronous>, transform_indices = @transform_9, window_bounds = array<i64: 1, 128>}, {pipeline_mode = #tpu.pipeline_mode<synchronous>, transform_indices = @transform_10, window_bounds = array<i64: 128, 128>}, {pipeline_mode = #tpu.pipeline_mode<synchronous>, transform_indices = @transform_11, window_bounds = array<i64: 1, 128>}, {pipeline_mode = #tpu.pipeline_mode<synchronous>, transform_indices = @transform_12, window_bounds = array<i64: 1, 128>}, {transform_indices = @transform_13, window_bounds = array<i64: 1, 8, 16, 128>}]} {
    %c8_i32 = arith.constant 8 : i32
    %0 = arith.muli %arg1, %c8_i32 : i32
    %1 = tpu.assume_multiple %0, 8 : i32
    %c0 = arith.constant 0 : index
    %2 = arith.index_cast %1 : i32 to index
    %c0_0 = arith.constant 0 : index
    %c0_1 = arith.constant 0 : index
    %3 = vector.load %arg2[%c0, %2, %c0_0, %c0_1] : memref<1x16x16x128xf32, #tpu.memory_space<vmem>>, vector<1x8x16x128xf32>
    %4 = vector.shape_cast %3 : vector<1x8x16x128xf32> to vector<8x16x128xf32>
    %5 = vector.shape_cast %4 : vector<8x16x128xf32> to vector<128x128xf32>
    %6 = arith.truncf %5 : vector<128x128xf32> to vector<128x128xbf16>
    %c0_2 = arith.constant 0 : index
    %c0_3 = arith.constant 0 : index
    %7 = vector.load %arg3[%c0_2, %c0_3] : memref<128x128xbf16, #tpu.memory_space<vmem>>, vector<128x128xbf16>
    %cst = arith.constant dense<0.000000e+00> : vector<128x128xf32>
    %8 = tpu.matmul %6, %7, %cst {dimension_numbers = #tpu.dot_dimension_numbers<[1], [0], [0], [1], [0, 0, 1, 1], [], []>} : vector<128x128xbf16>, vector<128x128xbf16>, vector<128x128xf32> -> vector<128x128xf32>
    %c0_4 = arith.constant 0 : index
    %c0_5 = arith.constant 0 : index
    %9 = vector.load %arg4[%c0_4, %c0_5] : memref<1x128xf32, #tpu.memory_space<vmem>>, vector<1x128xf32>
    %10 = vector.broadcast %9 : vector<1x128xf32> to vector<128x128xf32>
    %11 = arith.mulf %8, %10 : vector<128x128xf32>
    %c0_6 = arith.constant 0 : index
    %c0_7 = arith.constant 0 : index
    %12 = vector.load %arg5[%c0_6, %c0_7] : memref<1x128xf32, #tpu.memory_space<vmem>>, vector<1x128xf32>
    %13 = vector.broadcast %12 : vector<1x128xf32> to vector<128x128xf32>
    %14 = arith.addf %11, %13 : vector<128x128xf32>
    %cst_8 = arith.constant 0.000000e+00 : f32
    %15 = vector.broadcast %cst_8 : f32 to vector<128x128xf32>
    %16 = arith.maximumf %14, %15 : vector<128x128xf32>
    %17 = vector.shape_cast %16 : vector<128x128xf32> to vector<8x16x128xf32>
    %c1 = arith.constant 1 : index
    %c1_9 = arith.constant 1 : index
    %c0_10 = arith.constant 0 : index
    %18 = vector.load %arg16[%c1, %c1_9, %c0_10] : memref<10x18x128xf32, #tpu.memory_space<vmem>>, vector<8x16x128xf32>
    tpu.vector_store %arg16[%c1, %c1_9, %c0_10], %17 {strides = array<i32>} : memref<10x18x128xf32, #tpu.memory_space<vmem>>, vector<8x16x128xf32>,
    %cst_11 = arith.constant 0.000000e+00 : f32
    %19 = vector.broadcast %cst_11 : f32 to vector<10x1x128xf32>
    %c0_12 = arith.constant 0 : index
    %c0_13 = arith.constant 0 : index
    %c0_14 = arith.constant 0 : index
    %20 = vector.load %arg16[%c0_12, %c0_13, %c0_14] : memref<10x18x128xf32, #tpu.memory_space<vmem>>, vector<10x1x128xf32>
    tpu.vector_store %arg16[%c0_12, %c0_13, %c0_14], %19 {strides = array<i32>} : memref<10x18x128xf32, #tpu.memory_space<vmem>>, vector<10x1x128xf32>,
    %cst_15 = arith.constant 0.000000e+00 : f32
    %21 = vector.broadcast %cst_15 : f32 to vector<10x1x128xf32>
    %c0_16 = arith.constant 0 : index
    %c17 = arith.constant 17 : index
    %c0_17 = arith.constant 0 : index
    %22 = vector.load %arg16[%c0_16, %c17, %c0_17] : memref<10x18x128xf32, #tpu.memory_space<vmem>>, vector<10x1x128xf32>
    tpu.vector_store %arg16[%c0_16, %c17, %c0_17], %21 {strides = array<i32>} : memref<10x18x128xf32, #tpu.memory_space<vmem>>, vector<10x1x128xf32>,
    %c0_i32 = arith.constant 0 : i32
    %23 = arith.cmpi eq, %arg1, %c0_i32 : i32
    %24 = arith.extui %23 : i1 to i32
    %c0_i32_18 = arith.constant 0 : i32
    %25 = arith.cmpi ne, %24, %c0_i32_18 : i32
    scf.if %25 {
      %cst_107 = arith.constant 0.000000e+00 : f32
      %138 = vector.broadcast %cst_107 : f32 to vector<1x18x128xf32>
      %c0_108 = arith.constant 0 : index
      %c0_109 = arith.constant 0 : index
      %c0_110 = arith.constant 0 : index
      %139 = vector.load %arg16[%c0_108, %c0_109, %c0_110] : memref<10x18x128xf32, #tpu.memory_space<vmem>>, vector<1x18x128xf32>
      tpu.vector_store %arg16[%c0_108, %c0_109, %c0_110], %138 {strides = array<i32>} : memref<10x18x128xf32, #tpu.memory_space<vmem>>, vector<1x18x128xf32>,
    } else {
    }
    %c0_i32_19 = arith.constant 0 : i32
    %26 = arith.cmpi sgt, %arg1, %c0_i32_19 : i32
    %27 = arith.extui %26 : i1 to i32
    %c0_i32_20 = arith.constant 0 : i32
    %28 = arith.cmpi ne, %27, %c0_i32_20 : i32
    scf.if %28 {
      %c1_i32 = arith.constant 1 : i32
      %138 = arith.subi %1, %c1_i32 : i32
      %c0_107 = arith.constant 0 : index
      %139 = arith.index_cast %138 : i32 to index
      %c0_108 = arith.constant 0 : index
      %c0_109 = arith.constant 0 : index
      %140 = vector.load %arg2[%c0_107, %139, %c0_108, %c0_109] : memref<1x16x16x128xf32, #tpu.memory_space<vmem>>, vector<1x1x16x128xf32>
      %141 = vector.shape_cast %140 : vector<1x1x16x128xf32> to vector<1x16x128xf32>
      %142 = vector.shape_cast %141 : vector<1x16x128xf32> to vector<16x128xf32>
      %143 = arith.truncf %142 : vector<16x128xf32> to vector<16x128xbf16>
      %c0_110 = arith.constant 0 : index
      %c0_111 = arith.constant 0 : index
      %144 = vector.load %arg3[%c0_110, %c0_111] : memref<128x128xbf16, #tpu.memory_space<vmem>>, vector<128x128xbf16>
      %cst_112 = arith.constant dense<0.000000e+00> : vector<16x128xf32>
      %145 = tpu.matmul %143, %144, %cst_112 {dimension_numbers = #tpu.dot_dimension_numbers<[1], [0], [0], [1], [0, 0, 1, 1], [], []>} : vector<16x128xbf16>, vector<128x128xbf16>, vector<16x128xf32> -> vector<16x128xf32>
      %c0_113 = arith.constant 0 : index
      %c0_114 = arith.constant 0 : index
      %146 = vector.load %arg4[%c0_113, %c0_114] : memref<1x128xf32, #tpu.memory_space<vmem>>, vector<1x128xf32>
      %147 = vector.broadcast %146 : vector<1x128xf32> to vector<16x128xf32>
      %148 = arith.mulf %145, %147 : vector<16x128xf32>
      %c0_115 = arith.constant 0 : index
      %c0_116 = arith.constant 0 : index
      %149 = vector.load %arg5[%c0_115, %c0_116] : memref<1x128xf32, #tpu.memory_space<vmem>>, vector<1x128xf32>
      %150 = vector.broadcast %149 : vector<1x128xf32> to vector<16x128xf32>
      %151 = arith.addf %148, %150 : vector<16x128xf32>
      %cst_117 = arith.constant 0.000000e+00 : f32
      %152 = vector.broadcast %cst_117 : f32 to vector<16x128xf32>
      %153 = arith.maximumf %151, %152 : vector<16x128xf32>
      %154 = vector.shape_cast %153 : vector<16x128xf32> to vector<1x16x128xf32>
      %c0_118 = arith.constant 0 : index
      %c1_119 = arith.constant 1 : index
      %c0_120 = arith.constant 0 : index
      %155 = vector.load %arg16[%c0_118, %c1_119, %c0_120] : memref<10x18x128xf32, #tpu.memory_space<vmem>>, vector<1x16x128xf32>
      tpu.vector_store %arg16[%c0_118, %c1_119, %c0_120], %154 {strides = array<i32>} : memref<10x18x128xf32, #tpu.memory_space<vmem>>, vector<1x16x128xf32>,
    } else {
    }
    %c10_i32 = arith.constant 10 : i32
    %29 = arith.addi %1, %c10_i32 : i32
    %c2_i32 = arith.constant 2 : i32
    %30 = arith.subi %29, %c2_i32 : i32
    %c15_i32 = arith.constant 15 : i32
    %31 = arith.cmpi sle, %30, %c15_i32 : i32
    %true = arith.constant true
    %32 = arith.xori %31, %true : i1
    %33 = arith.extui %32 : i1 to i32
    %c0_i32_21 = arith.constant 0 : i32
    %34 = arith.cmpi ne, %33, %c0_i32_21 : i32
    scf.if %34 {
      %cst_107 = arith.constant 0.000000e+00 : f32
      %138 = vector.broadcast %cst_107 : f32 to vector<1x18x128xf32>
      %c9 = arith.constant 9 : index
      %c0_108 = arith.constant 0 : index
      %c0_109 = arith.constant 0 : index
      %139 = vector.load %arg16[%c9, %c0_108, %c0_109] : memref<10x18x128xf32, #tpu.memory_space<vmem>>, vector<1x18x128xf32>
      tpu.vector_store %arg16[%c9, %c0_108, %c0_109], %138 {strides = array<i32>} : memref<10x18x128xf32, #tpu.memory_space<vmem>>, vector<1x18x128xf32>,
    } else {
    }
    %35 = arith.extui %31 : i1 to i32
    %c0_i32_22 = arith.constant 0 : i32
    %36 = arith.cmpi ne, %35, %c0_i32_22 : i32
    scf.if %36 {
      %c10_i32_107 = arith.constant 10 : i32
      %138 = arith.addi %1, %c10_i32_107 : i32
      %c2_i32_108 = arith.constant 2 : i32
      %139 = arith.subi %138, %c2_i32_108 : i32
      %c0_109 = arith.constant 0 : index
      %140 = arith.index_cast %139 : i32 to index
      %c0_110 = arith.constant 0 : index
      %c0_111 = arith.constant 0 : index
      %141 = vector.load %arg2[%c0_109, %140, %c0_110, %c0_111] : memref<1x16x16x128xf32, #tpu.memory_space<vmem>>, vector<1x1x16x128xf32>
      %142 = vector.shape_cast %141 : vector<1x1x16x128xf32> to vector<1x16x128xf32>
      %143 = vector.shape_cast %142 : vector<1x16x128xf32> to vector<16x128xf32>
      %144 = arith.truncf %143 : vector<16x128xf32> to vector<16x128xbf16>
      %c0_112 = arith.constant 0 : index
      %c0_113 = arith.constant 0 : index
      %145 = vector.load %arg3[%c0_112, %c0_113] : memref<128x128xbf16, #tpu.memory_space<vmem>>, vector<128x128xbf16>
      %cst_114 = arith.constant dense<0.000000e+00> : vector<16x128xf32>
      %146 = tpu.matmul %144, %145, %cst_114 {dimension_numbers = #tpu.dot_dimension_numbers<[1], [0], [0], [1], [0, 0, 1, 1], [], []>} : vector<16x128xbf16>, vector<128x128xbf16>, vector<16x128xf32> -> vector<16x128xf32>
      %c0_115 = arith.constant 0 : index
      %c0_116 = arith.constant 0 : index
      %147 = vector.load %arg4[%c0_115, %c0_116] : memref<1x128xf32, #tpu.memory_space<vmem>>, vector<1x128xf32>
      %148 = vector.broadcast %147 : vector<1x128xf32> to vector<16x128xf32>
      %149 = arith.mulf %146, %148 : vector<16x128xf32>
      %c0_117 = arith.constant 0 : index
      %c0_118 = arith.constant 0 : index
      %150 = vector.load %arg5[%c0_117, %c0_118] : memref<1x128xf32, #tpu.memory_space<vmem>>, vector<1x128xf32>
      %151 = vector.broadcast %150 : vector<1x128xf32> to vector<16x128xf32>
      %152 = arith.addf %149, %151 : vector<16x128xf32>
      %cst_119 = arith.constant 0.000000e+00 : f32
      %153 = vector.broadcast %cst_119 : f32 to vector<16x128xf32>
      %154 = arith.maximumf %152, %153 : vector<16x128xf32>
      %155 = vector.shape_cast %154 : vector<16x128xf32> to vector<1x16x128xf32>
      %c9 = arith.constant 9 : index
      %c1_120 = arith.constant 1 : index
      %c0_121 = arith.constant 0 : index
      %156 = vector.load %arg16[%c9, %c1_120, %c0_121] : memref<10x18x128xf32, #tpu.memory_space<vmem>>, vector<1x16x128xf32>
      tpu.vector_store %arg16[%c9, %c1_120, %c0_121], %155 {strides = array<i32>} : memref<10x18x128xf32, #tpu.memory_space<vmem>>, vector<1x16x128xf32>,
    } else {
    }
    %cst_23 = arith.constant 0.000000e+00 : f32
    %37 = vector.broadcast %cst_23 : f32 to vector<128x128xf32>
    %c0_24 = arith.constant 0 : index
    %c0_25 = arith.constant 0 : index
    %c0_26 = arith.constant 0 : index
    %38 = vector.load %arg16[%c0_24, %c0_25, %c0_26] : memref<10x18x128xf32, #tpu.memory_space<vmem>>, vector<8x16x128xf32>
    %39 = vector.shape_cast %38 : vector<8x16x128xf32> to vector<128x128xf32>
    %40 = arith.truncf %39 : vector<128x128xf32> to vector<128x128xbf16>
    %c0_27 = arith.constant 0 : index
    %c0_28 = arith.constant 0 : index
    %c0_29 = arith.constant 0 : index
    %41 = vector.load %arg6[%c0_27, %c0_28, %c0_29] : memref<9x128x128xbf16, #tpu.memory_space<vmem>>, vector<1x128x128xbf16>
    %42 = vector.shape_cast %41 : vector<1x128x128xbf16> to vector<128x128xbf16>
    %cst_30 = arith.constant dense<0.000000e+00> : vector<128x128xf32>
    %43 = tpu.matmul %40, %42, %cst_30 {dimension_numbers = #tpu.dot_dimension_numbers<[1], [0], [0], [1], [0, 0, 1, 1], [], []>} : vector<128x128xbf16>, vector<128x128xbf16>, vector<128x128xf32> -> vector<128x128xf32>
    %44 = arith.addf %37, %43 : vector<128x128xf32>
    %c0_31 = arith.constant 0 : index
    %c1_32 = arith.constant 1 : index
    %c0_33 = arith.constant 0 : index
    %45 = vector.load %arg16[%c0_31, %c1_32, %c0_33] : memref<10x18x128xf32, #tpu.memory_space<vmem>>, vector<8x16x128xf32>
    %46 = vector.shape_cast %45 : vector<8x16x128xf32> to vector<128x128xf32>
    %47 = arith.truncf %46 : vector<128x128xf32> to vector<128x128xbf16>
    %c1_34 = arith.constant 1 : index
    %c0_35 = arith.constant 0 : index
    %c0_36 = arith.constant 0 : index
    %48 = vector.load %arg6[%c1_34, %c0_35, %c0_36] : memref<9x128x128xbf16, #tpu.memory_space<vmem>>, vector<1x128x128xbf16>
    %49 = vector.shape_cast %48 : vector<1x128x128xbf16> to vector<128x128xbf16>
    %cst_37 = arith.constant dense<0.000000e+00> : vector<128x128xf32>
    %50 = tpu.matmul %47, %49, %cst_37 {dimension_numbers = #tpu.dot_dimension_numbers<[1], [0], [0], [1], [0, 0, 1, 1], [], []>} : vector<128x128xbf16>, vector<128x128xbf16>, vector<128x128xf32> -> vector<128x128xf32>
    %51 = arith.addf %44, %50 : vector<128x128xf32>
    %c0_38 = arith.constant 0 : index
    %c2 = arith.constant 2 : index
    %c0_39 = arith.constant 0 : index
    %52 = vector.load %arg16[%c0_38, %c2, %c0_39] : memref<10x18x128xf32, #tpu.memory_space<vmem>>, vector<8x16x128xf32>
    %53 = vector.shape_cast %52 : vector<8x16x128xf32> to vector<128x128xf32>
    %54 = arith.truncf %53 : vector<128x128xf32> to vector<128x128xbf16>
    %c2_40 = arith.constant 2 : index
    %c0_41 = arith.constant 0 : index
    %c0_42 = arith.constant 0 : index
    %55 = vector.load %arg6[%c2_40, %c0_41, %c0_42] : memref<9x128x128xbf16, #tpu.memory_space<vmem>>, vector<1x128x128xbf16>
    %56 = vector.shape_cast %55 : vector<1x128x128xbf16> to vector<128x128xbf16>
    %cst_43 = arith.constant dense<0.000000e+00> : vector<128x128xf32>
    %57 = tpu.matmul %54, %56, %cst_43 {dimension_numbers = #tpu.dot_dimension_numbers<[1], [0], [0], [1], [0, 0, 1, 1], [], []>} : vector<128x128xbf16>, vector<128x128xbf16>, vector<128x128xf32> -> vector<128x128xf32>
    %58 = arith.addf %51, %57 : vector<128x128xf32>
    %c1_44 = arith.constant 1 : index
    %c0_45 = arith.constant 0 : index
    %c0_46 = arith.constant 0 : index
    %59 = vector.load %arg16[%c1_44, %c0_45, %c0_46] : memref<10x18x128xf32, #tpu.memory_space<vmem>>, vector<8x16x128xf32>
    %60 = vector.shape_cast %59 : vector<8x16x128xf32> to vector<128x128xf32>
    %61 = arith.truncf %60 : vector<128x128xf32> to vector<128x128xbf16>
    %c3 = arith.constant 3 : index
    %c0_47 = arith.constant 0 : index
    %c0_48 = arith.constant 0 : index
    %62 = vector.load %arg6[%c3, %c0_47, %c0_48] : memref<9x128x128xbf16, #tpu.memory_space<vmem>>, vector<1x128x128xbf16>
    %63 = vector.shape_cast %62 : vector<1x128x128xbf16> to vector<128x128xbf16>
    %cst_49 = arith.constant dense<0.000000e+00> : vector<128x128xf32>
    %64 = tpu.matmul %61, %63, %cst_49 {dimension_numbers = #tpu.dot_dimension_numbers<[1], [0], [0], [1], [0, 0, 1, 1], [], []>} : vector<128x128xbf16>, vector<128x128xbf16>, vector<128x128xf32> -> vector<128x128xf32>
    %65 = arith.addf %58, %64 : vector<128x128xf32>
    %c1_50 = arith.constant 1 : index
    %c1_51 = arith.constant 1 : index
    %c0_52 = arith.constant 0 : index
    %66 = vector.load %arg16[%c1_50, %c1_51, %c0_52] : memref<10x18x128xf32, #tpu.memory_space<vmem>>, vector<8x16x128xf32>
    %67 = vector.shape_cast %66 : vector<8x16x128xf32> to vector<128x128xf32>
    %68 = arith.truncf %67 : vector<128x128xf32> to vector<128x128xbf16>
    %c4 = arith.constant 4 : index
    %c0_53 = arith.constant 0 : index
    %c0_54 = arith.constant 0 : index
    %69 = vector.load %arg6[%c4, %c0_53, %c0_54] : memref<9x128x128xbf16, #tpu.memory_space<vmem>>, vector<1x128x128xbf16>
    %70 = vector.shape_cast %69 : vector<1x128x128xbf16> to vector<128x128xbf16>
    %cst_55 = arith.constant dense<0.000000e+00> : vector<128x128xf32>
    %71 = tpu.matmul %68, %70, %cst_55 {dimension_numbers = #tpu.dot_dimension_numbers<[1], [0], [0], [1], [0, 0, 1, 1], [], []>} : vector<128x128xbf16>, vector<128x128xbf16>, vector<128x128xf32> -> vector<128x128xf32>
    %72 = arith.addf %65, %71 : vector<128x128xf32>
    %c1_56 = arith.constant 1 : index
    %c2_57 = arith.constant 2 : index
    %c0_58 = arith.constant 0 : index
    %73 = vector.load %arg16[%c1_56, %c2_57, %c0_58] : memref<10x18x128xf32, #tpu.memory_space<vmem>>, vector<8x16x128xf32>
    %74 = vector.shape_cast %73 : vector<8x16x128xf32> to vector<128x128xf32>
    %75 = arith.truncf %74 : vector<128x128xf32> to vector<128x128xbf16>
    %c5 = arith.constant 5 : index
    %c0_59 = arith.constant 0 : index
    %c0_60 = arith.constant 0 : index
    %76 = vector.load %arg6[%c5, %c0_59, %c0_60] : memref<9x128x128xbf16, #tpu.memory_space<vmem>>, vector<1x128x128xbf16>
    %77 = vector.shape_cast %76 : vector<1x128x128xbf16> to vector<128x128xbf16>
    %cst_61 = arith.constant dense<0.000000e+00> : vector<128x128xf32>
    %78 = tpu.matmul %75, %77, %cst_61 {dimension_numbers = #tpu.dot_dimension_numbers<[1], [0], [0], [1], [0, 0, 1, 1], [], []>} : vector<128x128xbf16>, vector<128x128xbf16>, vector<128x128xf32> -> vector<128x128xf32>
    %79 = arith.addf %72, %78 : vector<128x128xf32>
    %c2_62 = arith.constant 2 : index
    %c0_63 = arith.constant 0 : index
    %c0_64 = arith.constant 0 : index
    %80 = vector.load %arg16[%c2_62, %c0_63, %c0_64] : memref<10x18x128xf32, #tpu.memory_space<vmem>>, vector<8x16x128xf32>
    %81 = vector.shape_cast %80 : vector<8x16x128xf32> to vector<128x128xf32>
    %82 = arith.truncf %81 : vector<128x128xf32> to vector<128x128xbf16>
    %c6 = arith.constant 6 : index
    %c0_65 = arith.constant 0 : index
    %c0_66 = arith.constant 0 : index
    %83 = vector.load %arg6[%c6, %c0_65, %c0_66] : memref<9x128x128xbf16, #tpu.memory_space<vmem>>, vector<1x128x128xbf16>
    %84 = vector.shape_cast %83 : vector<1x128x128xbf16> to vector<128x128xbf16>
    %cst_67 = arith.constant dense<0.000000e+00> : vector<128x128xf32>
    %85 = tpu.matmul %82, %84, %cst_67 {dimension_numbers = #tpu.dot_dimension_numbers<[1], [0], [0], [1], [0, 0, 1, 1], [], []>} : vector<128x128xbf16>, vector<128x128xbf16>, vector<128x128xf32> -> vector<128x128xf32>
    %86 = arith.addf %79, %85 : vector<128x128xf32>
    %c2_68 = arith.constant 2 : index
    %c1_69 = arith.constant 1 : index
    %c0_70 = arith.constant 0 : index
    %87 = vector.load %arg16[%c2_68, %c1_69, %c0_70] : memref<10x18x128xf32, #tpu.memory_space<vmem>>, vector<8x16x128xf32>
    %88 = vector.shape_cast %87 : vector<8x16x128xf32> to vector<128x128xf32>
    %89 = arith.truncf %88 : vector<128x128xf32> to vector<128x128xbf16>
    %c7 = arith.constant 7 : index
    %c0_71 = arith.constant 0 : index
    %c0_72 = arith.constant 0 : index
    %90 = vector.load %arg6[%c7, %c0_71, %c0_72] : memref<9x128x128xbf16, #tpu.memory_space<vmem>>, vector<1x128x128xbf16>
    %91 = vector.shape_cast %90 : vector<1x128x128xbf16> to vector<128x128xbf16>
    %cst_73 = arith.constant dense<0.000000e+00> : vector<128x128xf32>
    %92 = tpu.matmul %89, %91, %cst_73 {dimension_numbers = #tpu.dot_dimension_numbers<[1], [0], [0], [1], [0, 0, 1, 1], [], []>} : vector<128x128xbf16>, vector<128x128xbf16>, vector<128x128xf32> -> vector<128x128xf32>
    %93 = arith.addf %86, %92 : vector<128x128xf32>
    %c2_74 = arith.constant 2 : index
    %c2_75 = arith.constant 2 : index
    %c0_76 = arith.constant 0 : index
    %94 = vector.load %arg16[%c2_74, %c2_75, %c0_76] : memref<10x18x128xf32, #tpu.memory_space<vmem>>, vector<8x16x128xf32>
    %95 = vector.shape_cast %94 : vector<8x16x128xf32> to vector<128x128xf32>
    %96 = arith.truncf %95 : vector<128x128xf32> to vector<128x128xbf16>
    %c8 = arith.constant 8 : index
    %c0_77 = arith.constant 0 : index
    %c0_78 = arith.constant 0 : index
    %97 = vector.load %arg6[%c8, %c0_77, %c0_78] : memref<9x128x128xbf16, #tpu.memory_space<vmem>>, vector<1x128x128xbf16>
    %98 = vector.shape_cast %97 : vector<1x128x128xbf16> to vector<128x128xbf16>
    %cst_79 = arith.constant dense<0.000000e+00> : vector<128x128xf32>
    %99 = tpu.matmul %96, %98, %cst_79 {dimension_numbers = #tpu.dot_dimension_numbers<[1], [0], [0], [1], [0, 0, 1, 1], [], []>} : vector<128x128xbf16>, vector<128x128xbf16>, vector<128x128xf32> -> vector<128x128xf32>
    %100 = arith.addf %93, %99 : vector<128x128xf32>
    %c0_80 = arith.constant 0 : index
    %c0_81 = arith.constant 0 : index
    %101 = vector.load %arg7[%c0_80, %c0_81] : memref<1x128xf32, #tpu.memory_space<vmem>>, vector<1x128xf32>
    %102 = vector.broadcast %101 : vector<1x128xf32> to vector<128x128xf32>
    %103 = arith.mulf %100, %102 : vector<128x128xf32>
    %c0_82 = arith.constant 0 : index
    %c0_83 = arith.constant 0 : index
    %104 = vector.load %arg8[%c0_82, %c0_83] : memref<1x128xf32, #tpu.memory_space<vmem>>, vector<1x128xf32>
    %105 = vector.broadcast %104 : vector<1x128xf32> to vector<128x128xf32>
    %106 = arith.addf %103, %105 : vector<128x128xf32>
    %cst_84 = arith.constant 0.000000e+00 : f32
    %107 = vector.broadcast %cst_84 : f32 to vector<128x128xf32>
    %108 = arith.maximumf %106, %107 : vector<128x128xf32>
    %109 = arith.truncf %108 : vector<128x128xf32> to vector<128x128xbf16>
    %c0_85 = arith.constant 0 : index
    %c0_86 = arith.constant 0 : index
    %110 = vector.load %arg9[%c0_85, %c0_86] : memref<128x128xbf16, #tpu.memory_space<vmem>>, vector<128x128xbf16>
    %cst_87 = arith.constant dense<0.000000e+00> : vector<128x128xf32>
    %111 = tpu.matmul %109, %110, %cst_87 {dimension_numbers = #tpu.dot_dimension_numbers<[1], [0], [0], [1], [0, 0, 1, 1], [], []>} : vector<128x128xbf16>, vector<128x128xbf16>, vector<128x128xf32> -> vector<128x128xf32>
    %c0_88 = arith.constant 0 : index
    %c0_89 = arith.constant 0 : index
    %112 = vector.load %arg10[%c0_88, %c0_89] : memref<1x128xf32, #tpu.memory_space<vmem>>, vector<1x128xf32>
    %113 = vector.broadcast %112 : vector<1x128xf32> to vector<128x128xf32>
    %114 = arith.mulf %111, %113 : vector<128x128xf32>
    %c0_90 = arith.constant 0 : index
    %c0_91 = arith.constant 0 : index
    %115 = vector.load %arg11[%c0_90, %c0_91] : memref<1x128xf32, #tpu.memory_space<vmem>>, vector<1x128xf32>
    %116 = vector.broadcast %115 : vector<1x128xf32> to vector<128x128xf32>
    %117 = arith.addf %114, %116 : vector<128x128xf32>
    %c0_92 = arith.constant 0 : index
    %118 = arith.index_cast %1 : i32 to index
    %c0_93 = arith.constant 0 : index
    %c0_94 = arith.constant 0 : index
    %119 = vector.load %arg2[%c0_92, %118, %c0_93, %c0_94] : memref<1x16x16x128xf32, #tpu.memory_space<vmem>>, vector<1x8x16x128xf32>
    %120 = vector.shape_cast %119 : vector<1x8x16x128xf32> to vector<8x16x128xf32>
    %121 = vector.shape_cast %120 : vector<8x16x128xf32> to vector<128x128xf32>
    %122 = arith.truncf %121 : vector<128x128xf32> to vector<128x128xbf16>
    %c0_95 = arith.constant 0 : index
    %c0_96 = arith.constant 0 : index
    %123 = vector.load %arg12[%c0_95, %c0_96] : memref<128x128xbf16, #tpu.memory_space<vmem>>, vector<128x128xbf16>
    %cst_97 = arith.constant dense<0.000000e+00> : vector<128x128xf32>
    %124 = tpu.matmul %122, %123, %cst_97 {dimension_numbers = #tpu.dot_dimension_numbers<[1], [0], [0], [1], [0, 0, 1, 1], [], []>} : vector<128x128xbf16>, vector<128x128xbf16>, vector<128x128xf32> -> vector<128x128xf32>
    %c0_98 = arith.constant 0 : index
    %c0_99 = arith.constant 0 : index
    %125 = vector.load %arg13[%c0_98, %c0_99] : memref<1x128xf32, #tpu.memory_space<vmem>>, vector<1x128xf32>
    %126 = vector.broadcast %125 : vector<1x128xf32> to vector<128x128xf32>
    %127 = arith.mulf %124, %126 : vector<128x128xf32>
    %c0_100 = arith.constant 0 : index
    %c0_101 = arith.constant 0 : index
    %128 = vector.load %arg14[%c0_100, %c0_101] : memref<1x128xf32, #tpu.memory_space<vmem>>, vector<1x128xf32>
    %129 = vector.broadcast %128 : vector<1x128xf32> to vector<128x128xf32>
    %130 = arith.addf %127, %129 : vector<128x128xf32>
    %131 = arith.addf %117, %130 : vector<128x128xf32>
    %cst_102 = arith.constant 0.000000e+00 : f32
    %132 = vector.broadcast %cst_102 : f32 to vector<128x128xf32>
    %133 = arith.maximumf %131, %132 : vector<128x128xf32>
    %134 = vector.shape_cast %133 : vector<128x128xf32> to vector<8x16x128xf32>
    %c0_103 = arith.constant 0 : index
    %c0_104 = arith.constant 0 : index
    %c0_105 = arith.constant 0 : index
    %c0_106 = arith.constant 0 : index
    %135 = vector.load %arg15[%c0_103, %c0_104, %c0_105, %c0_106] : memref<1x8x16x128xf32, #tpu.memory_space<vmem>>, vector<1x8x16x128xf32>
    %136 = vector.shape_cast %135 : vector<1x8x16x128xf32> to vector<8x16x128xf32>
    %137 = vector.shape_cast %134 : vector<8x16x128xf32> to vector<1x8x16x128xf32>
    tpu.vector_store %arg15[%c0_103, %c0_104, %c0_105, %c0_106], %137 {strides = array<i32>} : memref<1x8x16x128xf32, #tpu.memory_space<vmem>>, vector<1x8x16x128xf32>,
    return
  }
  func.func @transform_0(%arg0: i32, %arg1: i32) -> (i32, i32, i32, i32) {
    %c0_i32 = arith.constant 0 : i32
    %c0_i32_0 = arith.constant 0 : i32
    %c0_i32_1 = arith.constant 0 : i32
    %c0_i32_2 = arith.constant 0 : i32
    return %arg0, %c0_i32, %c0_i32_0, %c0_i32_1 : i32, i32, i32, i32
  }
  func.func @transform_1(%arg0: i32, %arg1: i32) -> (i32, i32) {
    %c0_i32 = arith.constant 0 : i32
    %c0_i32_0 = arith.constant 0 : i32
    %c0_i32_1 = arith.constant 0 : i32
    return %c0_i32, %c0_i32_0 : i32, i32
  }
  func.func @transform_2(%arg0: i32, %arg1: i32) -> (i32, i32) {
    %c0_i32 = arith.constant 0 : i32
    %c0_i32_0 = arith.constant 0 : i32
    %c0_i32_1 = arith.constant 0 : i32
    return %c0_i32, %c0_i32_0 : i32, i32
  }
  func.func @transform_3(%arg0: i32, %arg1: i32) -> (i32, i32) {
    %c0_i32 = arith.constant 0 : i32
    %c0_i32_0 = arith.constant 0 : i32
    %c0_i32_1 = arith.constant 0 : i32
    return %c0_i32, %c0_i32_0 : i32, i32
  }
  func.func @transform_4(%arg0: i32, %arg1: i32) -> (i32, i32, i32) {
    %c0_i32 = arith.constant 0 : i32
    %c0_i32_0 = arith.constant 0 : i32
    %c0_i32_1 = arith.constant 0 : i32
    %c0_i32_2 = arith.constant 0 : i32
    return %c0_i32, %c0_i32_0, %c0_i32_1 : i32, i32, i32
  }
  func.func @transform_5(%arg0: i32, %arg1: i32) -> (i32, i32) {
    %c0_i32 = arith.constant 0 : i32
    %c0_i32_0 = arith.constant 0 : i32
    %c0_i32_1 = arith.constant 0 : i32
    return %c0_i32, %c0_i32_0 : i32, i32
  }
  func.func @transform_6(%arg0: i32, %arg1: i32) -> (i32, i32) {
    %c0_i32 = arith.constant 0 : i32
    %c0_i32_0 = arith.constant 0 : i32
    %c0_i32_1 = arith.constant 0 : i32
    return %c0_i32, %c0_i32_0 : i32, i32
  }
  func.func @transform_7(%arg0: i32, %arg1: i32) -> (i32, i32) {
    %c0_i32 = arith.constant 0 : i32
    %c0_i32_0 = arith.constant 0 : i32
    %c0_i32_1 = arith.constant 0 : i32
    return %c0_i32, %c0_i32_0 : i32, i32
  }
  func.func @transform_8(%arg0: i32, %arg1: i32) -> (i32, i32) {
    %c0_i32 = arith.constant 0 : i32
    %c0_i32_0 = arith.constant 0 : i32
    %c0_i32_1 = arith.constant 0 : i32
    return %c0_i32, %c0_i32_0 : i32, i32
  }
  func.func @transform_9(%arg0: i32, %arg1: i32) -> (i32, i32) {
    %c0_i32 = arith.constant 0 : i32
    %c0_i32_0 = arith.constant 0 : i32
    %c0_i32_1 = arith.constant 0 : i32
    return %c0_i32, %c0_i32_0 : i32, i32
  }
  func.func @transform_10(%arg0: i32, %arg1: i32) -> (i32, i32) {
    %c0_i32 = arith.constant 0 : i32
    %c0_i32_0 = arith.constant 0 : i32
    %c0_i32_1 = arith.constant 0 : i32
    return %c0_i32, %c0_i32_0 : i32, i32
  }
  func.func @transform_11(%arg0: i32, %arg1: i32) -> (i32, i32) {
    %c0_i32 = arith.constant 0 : i32
    %c0_i32_0 = arith.constant 0 : i32
    %c0_i32_1 = arith.constant 0 : i32
    return %c0_i32, %c0_i32_0 : i32, i32
  }
  func.func @transform_12(%arg0: i32, %arg1: i32) -> (i32, i32) {
    %c0_i32 = arith.constant 0 : i32
    %c0_i32_0 = arith.constant 0 : i32
    %c0_i32_1 = arith.constant 0 : i32
    return %c0_i32, %c0_i32_0 : i32, i32
  }
  func.func @transform_13(%arg0: i32, %arg1: i32) -> (i32, i32, i32, i32) {
    %c0_i32 = arith.constant 0 : i32
    %c0_i32_0 = arith.constant 0 : i32
    %c0_i32_1 = arith.constant 0 : i32
    return %arg0, %arg1, %c0_i32, %c0_i32_0 : i32, i32, i32, i32
  }
}

</mosaic_0001>

<llo_original>
// kernel: tpu_custom_call.1
$region0: #{tpu_custom_call.1}
  #allocation0 [shape = 'u32[]', space=smem, size = 0x4, offset = 0x4, fixed_abs, tag = 'smem constant byte address 0x4 - core index']
  #allocation1 [shape = 'u32[72,128]{1,0:T(1,128)}', space=vmem, size = 0x9000, scoped, tag = 'internal scratch']
  #allocation2 [shape = 'f32[10,18,128]{2,1,0:T(8,128)}', space=vmem, size = 0x1e000, scoped, tag = 'scratch operand']
  %s0 = inlined_call_operand.hbm [shape: f32[2,16,16,128], index: 0, kind: input, shape index: {}]
  %s1 = inlined_call_operand.hbm [shape: bf16[128,128], index: 1, kind: input, shape index: {}]
  %s2 = inlined_call_operand.vmem [shape: f32[1,128], index: 2, kind: input, shape index: {}]
  %s3 = inlined_call_operand.vmem [shape: f32[1,128], index: 3, kind: input, shape index: {}]
  %s4 = inlined_call_operand.hbm [shape: bf16[9,128,128], index: 4, kind: input, shape index: {}]
  %s5 = inlined_call_operand.vmem [shape: f32[1,128], index: 5, kind: input, shape index: {}]
  %s6 = inlined_call_operand.vmem [shape: f32[1,128], index: 6, kind: input, shape index: {}]
  %s7 = inlined_call_operand.hbm [shape: bf16[128,128], index: 7, kind: input, shape index: {}]
  %s8 = inlined_call_operand.vmem [shape: f32[1,128], index: 8, kind: input, shape index: {}]
  %s9 = inlined_call_operand.vmem [shape: f32[1,128], index: 9, kind: input, shape index: {}]
  %s10 = inlined_call_operand.hbm [shape: bf16[128,128], index: 10, kind: input, shape index: {}]
  %s11 = inlined_call_operand.vmem [shape: f32[1,128], index: 11, kind: input, shape index: {}]
  %s12 = inlined_call_operand.vmem [shape: f32[1,128], index: 12, kind: input, shape index: {}]
  %s13 = inlined_call_operand.hbm [shape: f32[2,16,16,128], index: 13, kind: output, shape index: {}]
  %s14 = sld [smem:[#allocation0]]
  $region121: #{tpu_custom_call.1} parent=0
    _
  %s16 = ssub.s32 1, %s14
  %s17 = scalar_select 0, %s16, %s14
  $region1: #{tpu_custom_call.1} parent=0
    #allocation3 [shape = 'u8[262144]{0}', space=vmem, size = 0x40000, scoped, tag = 'input window, operand 0']
    #allocation4 [shape = 's32[2]{0}', space=sflag, size = 0x8, scoped, tag = 'scoped memory for tpu_custom_call.1']
    #allocation5 [shape = 's32[2]{0}', space=sflag, size = 0x8, scoped, tag = 'scoped memory for tpu_custom_call.1']
    #allocation6 [shape = 'u8[32768]{0}', space=vmem, size = 0x8000, scoped, tag = 'input window, operand 1, single buffered']
    #allocation7 [shape = 's32[1]{0}', space=sflag, size = 0x4, scoped, tag = 'scoped memory for tpu_custom_call.1']
    #allocation8 [shape = 'u8[294912]{0}', space=vmem, size = 0x48000, scoped, tag = 'input window, operand 4, single buffered']
    #allocation9 [shape = 'u8[32768]{0}', space=vmem, size = 0x8000, scoped, tag = 'input window, operand 7, single buffered']
    #allocation10 [shape = 's32[1]{0}', space=sflag, size = 0x4, scoped, tag = 'scoped memory for tpu_custom_call.1']
    #allocation11 [shape = 'u8[32768]{0}', space=vmem, size = 0x8000, scoped, tag = 'input window, operand 10, single buffered']
    #allocation12 [shape = 'u8[131072]{0}', space=vmem, size = 0x20000, scoped, tag = 'output window, operand 0']
    %18 = vsyncpa [#allocation4], 0
    %s19 = scalar_lea.sflag [#allocation4], 1
    %20 = vsyncpa %s19, 0
    %21 = vsyncpa [#allocation7], 0
    %22 = vsyncpa [#allocation10], 0
    %23 = vsyncpa [#allocation5], 0
    %s24 = scalar_lea.sflag [#allocation5], 1
    %25 = vsyncpa %s24, 0
    loop: start=0, step=1, limit=6
    $region2: #{tpu_custom_call.1} parent=1 // loop_pre_header
      _
    $region3: #{tpu_custom_call.1} parent=1 // loop_header
      %s27 = sphi 0, %s31
      %p28 = scmp.ge.s32.totalorder %s27, 6
      %s34 = sphi 0, %s46
      %s35 = sphi 0, %s42
      %s36 = sphi 0, %s34
      %s37 = sphi 0, %s35
      %s38 = sphi 0, %s36
      %s39 = sphi 0, %s37
      %s49 = sphi 0, %s51
      %s52 = sphi 0, %s49
      %s53 = sphi 0, %s52
      %s69 = sphi 0, %s53
      %s73 = sphi 0, %s73
      %s75 = sphi 0, %s73
      %s76 = sphi 0, %s75
      %s90 = sphi 0, %s76
      %s94 = sphi 0, %s94
      %s96 = sphi 0, %s94
      %s97 = sphi 0, %s96
      %s111 = sphi 0, %s97
      %s115 = sphi 0, %s115
      %s117 = sphi 0, %s115
      %s118 = sphi 0, %s117
      %s132 = sphi 0, %s118
      %s136 = sphi 0, %s136
      %s138 = sphi 0, %s136
      %s139 = sphi 0, %s138
      %s153 = sphi 0, %s139
      %s157 = sphi 0, %s157
      %s159 = sphi 0, %s157
      %s160 = sphi 0, %s159
      %s174 = sphi 0, %s160
      %s178 = sphi 0, %s178
      %s180 = sphi 0, %s178
      %s181 = sphi 0, %s180
      %s195 = sphi 0, %s181
      %s199 = sphi 0, %s199
      %s201 = sphi 0, %s199
      %s202 = sphi 0, %s201
      %s216 = sphi 0, %s202
      %s220 = sphi 0, %s220
      %s222 = sphi 0, %s220
      %s223 = sphi 0, %s222
      %s237 = sphi 0, %s223
      %s241 = sphi 0, %s241
      %s243 = sphi 0, %s241
      %s244 = sphi 0, %s243
      %s258 = sphi 0, %s244
      %s262 = sphi 0, %s262
      %s264 = sphi 0, %s262
      %s265 = sphi 0, %s264
      %s279 = sphi 0, %s265
      %s283 = sphi 0, %s283
      %s285 = sphi 0, %s283
      %s286 = sphi 0, %s285
      %s300 = sphi 0, %s286
      %s304 = sphi 0, %s304
      %s306 = sphi 0, %s304
      %s307 = sphi 0, %s306
      %s321 = sphi 0, %s307
      %s329 = sphi 0, %s331
      %s332 = sphi 0, %s329
      %s333 = sphi 0, %s332
      %s349 = sphi 0, %s333
    $region4: #{tpu_custom_call.1} parent=1 // loop_header_branch
      %30 = sbr.rel (%p28) target = $region8
    $region5: #{tpu_custom_call.1} parent=1 // loop_body
      %s32 = ssub.s32 %s27, 1
      %s33 = ssub.s32 %s27, 2
      %s40 = sadd.s32 1, %s35
      %p41 = scmp.ge.s32.totalorder %s40, 2
      %s42 = scalar_select %p41, 0, %s40
      %s43 = sadd.s32 1, %s34
      %s44 = scalar_select %p41, %s43, %s34
      %p45 = scmp.ge.s32.totalorder %s44, 2
      %s46 = scalar_select %p45, 0, %s44
      %s47 = ssub.s32 %s34, %s46
      %p48 = scmp.eq.s32.totalorder %s47, 0
      %s50 = sadd.s32 %s49, 1
      %s51 = scalar_select %p48, %s49, %s50
      %p54 = pneg %p48
      %p55 = scmp.eq.s32.totalorder %s27, 3
      %p56 = por %p54, %p55
      %p57 = scmp.ne.s32.totalorder %s49, %s52
      %p58 = scmp.eq.s32.totalorder %s27, 0
      %p59 = por %p57, %p58
      %p60 = scmp.ne.s32.totalorder %s49, %s52
      %p61 = scmp.eq.s32.totalorder %s32, 3
      %p62 = por %p60, %p61
      %p63 = scmp.ne.s32.totalorder %s52, %s53
      %p64 = scmp.eq.s32.totalorder %s32, 0
      %p65 = por %p63, %p64
      %p66 = scmp.ne.s32.totalorder %s52, %s53
      %p67 = scmp.eq.s32.totalorder %s33, 3
      %p68 = por %p66, %p67
      %p70 = scmp.ne.s32.totalorder %s53, %s69
      %p71 = scmp.eq.s32.totalorder %s33, 0
      %p72 = por %p70, %p71
      %s74 = sadd.s32 %s73, 1
      %p77 = scmp.eq.s32.totalorder %s27, 3
      %p78 = scmp.ne.s32.totalorder %s73, %s75
      %p79 = scmp.eq.s32.totalorder %s27, 0
      %p80 = por %p78, %p79
      %p81 = scmp.ne.s32.totalorder %s73, %s75
      %p82 = scmp.eq.s32.totalorder %s32, 3
      %p83 = por %p81, %p82
      %p84 = scmp.ne.s32.totalorder %s75, %s76
      %p85 = scmp.eq.s32.totalorder %s32, 0
      %p86 = por %p84, %p85
      %p87 = scmp.ne.s32.totalorder %s75, %s76
      %p88 = scmp.eq.s32.totalorder %s33, 3
      %p89 = por %p87, %p88
      %p91 = scmp.ne.s32.totalorder %s76, %s90
      %p92 = scmp.eq.s32.totalorder %s33, 0
      %p93 = por %p91, %p92
      %s95 = sadd.s32 %s94, 1
      %p98 = scmp.eq.s32.totalorder %s27, 3
      %p99 = scmp.ne.s32.totalorder %s94, %s96
      %p100 = scmp.eq.s32.totalorder %s27, 0
      %p101 = por %p99, %p100
      %p102 = scmp.ne.s32.totalorder %s94, %s96
      %p103 = scmp.eq.s32.totalorder %s32, 3
      %p104 = por %p102, %p103
      %p105 = scmp.ne.s32.totalorder %s96, %s97
      %p106 = scmp.eq.s32.totalorder %s32, 0
      %p107 = por %p105, %p106
      %p108 = scmp.ne.s32.totalorder %s96, %s97
      %p109 = scmp.eq.s32.totalorder %s33, 3
      %p110 = por %p108, %p109
      %p112 = scmp.ne.s32.totalorder %s97, %s111
      %p113 = scmp.eq.s32.totalorder %s33, 0
      %p114 = por %p112, %p113
      %s116 = sadd.s32 %s115, 1
      %p119 = scmp.eq.s32.totalorder %s27, 3
      %p120 = scmp.ne.s32.totalorder %s115, %s117
      %p121 = scmp.eq.s32.totalorder %s27, 0
      %p122 = por %p120, %p121
      %p123 = scmp.ne.s32.totalorder %s115, %s117
      %p124 = scmp.eq.s32.totalorder %s32, 3
      %p125 = por %p123, %p124
      %p126 = scmp.ne.s32.totalorder %s117, %s118
      %p127 = scmp.eq.s32.totalorder %s32, 0
      %p128 = por %p126, %p127
      %p129 = scmp.ne.s32.totalorder %s117, %s118
      %p130 = scmp.eq.s32.totalorder %s33, 3
      %p131 = por %p129, %p130
      %p133 = scmp.ne.s32.totalorder %s118, %s132
      %p134 = scmp.eq.s32.totalorder %s33, 0
      %p135 = por %p133, %p134
      %s137 = sadd.s32 %s136, 1
      %p140 = scmp.eq.s32.totalorder %s27, 3
      %p141 = scmp.ne.s32.totalorder %s136, %s138
      %p142 = scmp.eq.s32.totalorder %s27, 0
      %p143 = por %p141, %p142
      %p144 = scmp.ne.s32.totalorder %s136, %s138
      %p145 = scmp.eq.s32.totalorder %s32, 3
      %p146 = por %p144, %p145
      %p147 = scmp.ne.s32.totalorder %s138, %s139
      %p148 = scmp.eq.s32.totalorder %s32, 0
      %p149 = por %p147, %p148
      %p150 = scmp.ne.s32.totalorder %s138, %s139
      %p151 = scmp.eq.s32.totalorder %s33, 3
      %p152 = por %p150, %p151
      %p154 = scmp.ne.s32.totalorder %s139, %s153
      %p155 = scmp.eq.s32.totalorder %s33, 0
      %p156 = por %p154, %p155
      %s158 = sadd.s32 %s157, 1
      %p161 = scmp.eq.s32.totalorder %s27, 3
      %p162 = scmp.ne.s32.totalorder %s157, %s159
      %p163 = scmp.eq.s32.totalorder %s27, 0
      %p164 = por %p162, %p163
      %p165 = scmp.ne.s32.totalorder %s157, %s159
      %p166 = scmp.eq.s32.totalorder %s32, 3
      %p167 = por %p165, %p166
      %p168 = scmp.ne.s32.totalorder %s159, %s160
      %p169 = scmp.eq.s32.totalorder %s32, 0
      %p170 = por %p168, %p169
      %p171 = scmp.ne.s32.totalorder %s159, %s160
      %p172 = scmp.eq.s32.totalorder %s33, 3
      %p173 = por %p171, %p172
      %p175 = scmp.ne.s32.totalorder %s160, %s174
      %p176 = scmp.eq.s32.totalorder %s33, 0
      %p177 = por %p175, %p176
      %s179 = sadd.s32 %s178, 1
      %p182 = scmp.eq.s32.totalorder %s27, 3
      %p183 = scmp.ne.s32.totalorder %s178, %s180
      %p184 = scmp.eq.s32.totalorder %s27, 0
      %p185 = por %p183, %p184
      %p186 = scmp.ne.s32.totalorder %s178, %s180
      %p187 = scmp.eq.s32.totalorder %s32, 3
      %p188 = por %p186, %p187
      %p189 = scmp.ne.s32.totalorder %s180, %s181
      %p190 = scmp.eq.s32.totalorder %s32, 0
      %p191 = por %p189, %p190
      %p192 = scmp.ne.s32.totalorder %s180, %s181
      %p193 = scmp.eq.s32.totalorder %s33, 3
      %p194 = por %p192, %p193
      %p196 = scmp.ne.s32.totalorder %s181, %s195
      %p197 = scmp.eq.s32.totalorder %s33, 0
      %p198 = por %p196, %p197
      %s200 = sadd.s32 %s199, 1
      %p203 = scmp.eq.s32.totalorder %s27, 3
      %p204 = scmp.ne.s32.totalorder %s199, %s201
      %p205 = scmp.eq.s32.totalorder %s27, 0
      %p206 = por %p204, %p205
      %p207 = scmp.ne.s32.totalorder %s199, %s201
      %p208 = scmp.eq.s32.totalorder %s32, 3
      %p209 = por %p207, %p208
      %p210 = scmp.ne.s32.totalorder %s201, %s202
      %p211 = scmp.eq.s32.totalorder %s32, 0
      %p212 = por %p210, %p211
      %p213 = scmp.ne.s32.totalorder %s201, %s202
      %p214 = scmp.eq.s32.totalorder %s33, 3
      %p215 = por %p213, %p214
      %p217 = scmp.ne.s32.totalorder %s202, %s216
      %p218 = scmp.eq.s32.totalorder %s33, 0
      %p219 = por %p217, %p218
      %s221 = sadd.s32 %s220, 1
      %p224 = scmp.eq.s32.totalorder %s27, 3
      %p225 = scmp.ne.s32.totalorder %s220, %s222
      %p226 = scmp.eq.s32.totalorder %s27, 0
      %p227 = por %p225, %p226
      %p228 = scmp.ne.s32.totalorder %s220, %s222
      %p229 = scmp.eq.s32.totalorder %s32, 3
      %p230 = por %p228, %p229
      %p231 = scmp.ne.s32.totalorder %s222, %s223
      %p232 = scmp.eq.s32.totalorder %s32, 0
      %p233 = por %p231, %p232
      %p234 = scmp.ne.s32.totalorder %s222, %s223
      %p235 = scmp.eq.s32.totalorder %s33, 3
      %p236 = por %p234, %p235
      %p238 = scmp.ne.s32.totalorder %s223, %s237
      %p239 = scmp.eq.s32.totalorder %s33, 0
      %p240 = por %p238, %p239
      %s242 = sadd.s32 %s241, 1
      %p245 = scmp.eq.s32.totalorder %s27, 3
      %p246 = scmp.ne.s32.totalorder %s241, %s243
      %p247 = scmp.eq.s32.totalorder %s27, 0
      %p248 = por %p246, %p247
      %p249 = scmp.ne.s32.totalorder %s241, %s243
      %p250 = scmp.eq.s32.totalorder %s32, 3
      %p251 = por %p249, %p250
      %p252 = scmp.ne.s32.totalorder %s243, %s244
      %p253 = scmp.eq.s32.totalorder %s32, 0
      %p254 = por %p252, %p253
      %p255 = scmp.ne.s32.totalorder %s243, %s244
      %p256 = scmp.eq.s32.totalorder %s33, 3
      %p257 = por %p255, %p256
      %p259 = scmp.ne.s32.totalorder %s244, %s258
      %p260 = scmp.eq.s32.totalorder %s33, 0
      %p261 = por %p259, %p260
      %s263 = sadd.s32 %s262, 1
      %p266 = scmp.eq.s32.totalorder %s27, 3
      %p267 = scmp.ne.s32.totalorder %s262, %s264
      %p268 = scmp.eq.s32.totalorder %s27, 0
      %p269 = por %p267, %p268
      %p270 = scmp.ne.s32.totalorder %s262, %s264
      %p271 = scmp.eq.s32.totalorder %s32, 3
      %p272 = por %p270, %p271
      %p273 = scmp.ne.s32.totalorder %s264, %s265
      %p274 = scmp.eq.s32.totalorder %s32, 0
      %p275 = por %p273, %p274
      %p276 = scmp.ne.s32.totalorder %s264, %s265
      %p277 = scmp.eq.s32.totalorder %s33, 3
      %p278 = por %p276, %p277
      %p280 = scmp.ne.s32.totalorder %s265, %s279
      %p281 = scmp.eq.s32.totalorder %s33, 0
      %p282 = por %p280, %p281
      %s284 = sadd.s32 %s283, 1
      %p287 = scmp.eq.s32.totalorder %s27, 3
      %p288 = scmp.ne.s32.totalorder %s283, %s285
      %p289 = scmp.eq.s32.totalorder %s27, 0
      %p290 = por %p288, %p289
      %p291 = scmp.ne.s32.totalorder %s283, %s285
      %p292 = scmp.eq.s32.totalorder %s32, 3
      %p293 = por %p291, %p292
      %p294 = scmp.ne.s32.totalorder %s285, %s286
      %p295 = scmp.eq.s32.totalorder %s32, 0
      %p296 = por %p294, %p295
      %p297 = scmp.ne.s32.totalorder %s285, %s286
      %p298 = scmp.eq.s32.totalorder %s33, 3
      %p299 = por %p297, %p298
      %p301 = scmp.ne.s32.totalorder %s286, %s300
      %p302 = scmp.eq.s32.totalorder %s33, 0
      %p303 = por %p301, %p302
      %s305 = sadd.s32 %s304, 1
      %p308 = scmp.eq.s32.totalorder %s27, 3
      %p309 = scmp.ne.s32.totalorder %s304, %s306
      %p310 = scmp.eq.s32.totalorder %s27, 0
      %p311 = por %p309, %p310
      %p312 = scmp.ne.s32.totalorder %s304, %s306
      %p313 = scmp.eq.s32.totalorder %s32, 3
      %p314 = por %p312, %p313
      %p315 = scmp.ne.s32.totalorder %s306, %s307
      %p316 = scmp.eq.s32.totalorder %s32, 0
      %p317 = por %p315, %p316
      %p318 = scmp.ne.s32.totalorder %s306, %s307
      %p319 = scmp.eq.s32.totalorder %s33, 3
      %p320 = por %p318, %p319
      %p322 = scmp.ne.s32.totalorder %s307, %s321
      %p323 = scmp.eq.s32.totalorder %s33, 0
      %p324 = por %p322, %p323
      %s325 = ssub.s32 %s34, %s46
      %s326 = ssub.s32 %s35, %s42
      %s327 = sor.u32 %s325, %s326
      %p328 = scmp.eq.s32.totalorder %s327, 0
      %s330 = sadd.s32 %s329, 1
      %s331 = scalar_select %p328, %s329, %s330
      %p334 = pneg %p328
      %p335 = scmp.eq.s32.totalorder %s27, 3
      %p336 = por %p334, %p335
      %p337 = scmp.ne.s32.totalorder %s329, %s332
      %p338 = scmp.eq.s32.totalorder %s27, 0
      %p339 = por %p337, %p338
      %p340 = scmp.ne.s32.totalorder %s329, %s332
      %p341 = scmp.eq.s32.totalorder %s32, 3
      %p342 = por %p340, %p341
      %p343 = scmp.ne.s32.totalorder %s332, %s333
      %p344 = scmp.eq.s32.totalorder %s32, 0
      %p345 = por %p343, %p344
      %p346 = scmp.ne.s32.totalorder %s332, %s333
      %p347 = scmp.eq.s32.totalorder %s33, 3
      %p348 = por %p346, %p347
      %p350 = scmp.ne.s32.totalorder %s333, %s349
      %p351 = scmp.eq.s32.totalorder %s33, 0
      %p352 = por %p350, %p351
      %p353 = scmp.le.s32.totalorder 1, %s27
      %p354 = scmp.lt.s32.totalorder %s27, 5
      %p355 = pnand %p353, %p354
      %p356 = pneg %p355
      // Predicated region
      $region9: #{tpu_custom_call.1} parent=5 // pred_check
        _
      $region10: #{tpu_custom_call.1} parent=5 // pred_check_branch
        %358 = sbr.rel (%p355) target = $region12
      $region11: #{tpu_custom_call.1} parent=5 // pred_region
        %s359 = ssub.s32 %s27, 1
        // Predicated region
        $region13: #{tpu_custom_call.1} parent=11 // pred_check
          %p360 = pneg %p86
        $region14: #{tpu_custom_call.1} parent=11 // pred_check_branch
          %362 = sbr.rel (%p360) target = $region16
        $region15: #{tpu_custom_call.1} parent=11 // pred_region
          %364 = vsyncadd [#allocation7], 0
          %s365 = sshll.u32 %s1, 4
          %s366 = int_to_ptr.hbm [resolvable:$true] %s365
          %s367 = sshll.u32 [#allocation6], 4
          %s368 = int_to_ptr.vmem [resolvable:$true] %s367
          %373 = dma.hbm_to_vmem [thread:$0]  %s366, 1024, %s368, [#allocation7], 64, 64, 4
        $region16: #{tpu_custom_call.1} parent=11 // pred_fallthru
          _
        // Predicated region
        $region17: #{tpu_custom_call.1} parent=11 // pred_check
          %p374 = pneg %p107
        $region18: #{tpu_custom_call.1} parent=11 // pred_check_branch
          %376 = sbr.rel (%p374) target = $region20
        $region19: #{tpu_custom_call.1} parent=11 // pred_region
          _
        $region20: #{tpu_custom_call.1} parent=11 // pred_fallthru
          _
        // Predicated region
        $region21: #{tpu_custom_call.1} parent=11 // pred_check
          %p377 = pneg %p128
        $region22: #{tpu_custom_call.1} parent=11 // pred_check_branch
          %379 = sbr.rel (%p377) target = $region24
        $region23: #{tpu_custom_call.1} parent=11 // pred_region
          _
        $region24: #{tpu_custom_call.1} parent=11 // pred_fallthru
          _
        // Predicated region
        $region25: #{tpu_custom_call.1} parent=11 // pred_check
          %p380 = pneg %p149
        $region26: #{tpu_custom_call.1} parent=11 // pred_check_branch
          %382 = sbr.rel (%p380) target = $region28
        $region27: #{tpu_custom_call.1} parent=11 // pred_region
          %384 = vsyncadd [#allocation7], 0
          %s385 = sshll.u32 %s4, 4
          %s386 = int_to_ptr.hbm [resolvable:$true] %s385
          %s387 = sshll.u32 [#allocation8], 4
          %s388 = int_to_ptr.vmem [resolvable:$true] %s387
          %393 = dma.hbm_to_vmem [thread:$0]  %s386, 9216, %s388, [#allocation7], 64, 64, 4
        $region28: #{tpu_custom_call.1} parent=11 // pred_fallthru
          _
        // Predicated region
        $region29: #{tpu_custom_call.1} parent=11 // pred_check
          %p394 = pneg %p170
        $region30: #{tpu_custom_call.1} parent=11 // pred_check_branch
          %396 = sbr.rel (%p394) target = $region32
        $region31: #{tpu_custom_call.1} parent=11 // pred_region
          _
        $region32: #{tpu_custom_call.1} parent=11 // pred_fallthru
          _
        // Predicated region
        $region33: #{tpu_custom_call.1} parent=11 // pred_check
          %p397 = pneg %p191
        $region34: #{tpu_custom_call.1} parent=11 // pred_check_branch
          %399 = sbr.rel (%p397) target = $region36
        $region35: #{tpu_custom_call.1} parent=11 // pred_region
          _
        $region36: #{tpu_custom_call.1} parent=11 // pred_fallthru
          _
        // Predicated region
        $region37: #{tpu_custom_call.1} parent=11 // pred_check
          %p400 = pneg %p212
        $region38: #{tpu_custom_call.1} parent=11 // pred_check_branch
          %402 = sbr.rel (%p400) target = $region40
        $region39: #{tpu_custom_call.1} parent=11 // pred_region
          %404 = vsyncadd [#allocation10], 0
          %s405 = sshll.u32 %s7, 4
          %s406 = int_to_ptr.hbm [resolvable:$true] %s405
          %s407 = sshll.u32 [#allocation9], 4
          %s408 = int_to_ptr.vmem [resolvable:$true] %s407
          %413 = dma.hbm_to_vmem [thread:$0]  %s406, 1024, %s408, [#allocation10], 64, 64, 4
        $region40: #{tpu_custom_call.1} parent=11 // pred_fallthru
          _
        // Predicated region
        $region41: #{tpu_custom_call.1} parent=11 // pred_check
          %p414 = pneg %p233
        $region42: #{tpu_custom_call.1} parent=11 // pred_check_branch
          %416 = sbr.rel (%p414) target = $region44
        $region43: #{tpu_custom_call.1} parent=11 // pred_region
          _
        $region44: #{tpu_custom_call.1} parent=11 // pred_fallthru
          _
        // Predicated region
        $region45: #{tpu_custom_call.1} parent=11 // pred_check
          %p417 = pneg %p254
        $region46: #{tpu_custom_call.1} parent=11 // pred_check_branch
          %419 = sbr.rel (%p417) target = $region48
        $region47: #{tpu_custom_call.1} parent=11 // pred_region
          _
        $region48: #{tpu_custom_call.1} parent=11 // pred_fallthru
          _
        // Predicated region
        $region49: #{tpu_custom_call.1} parent=11 // pred_check
          %p420 = pneg %p275
        $region50: #{tpu_custom_call.1} parent=11 // pred_check_branch
          %422 = sbr.rel (%p420) target = $region52
        $region51: #{tpu_custom_call.1} parent=11 // pred_region
          %424 = vsyncadd [#allocation10], 0
          %s425 = sshll.u32 %s10, 4
          %s426 = int_to_ptr.hbm [resolvable:$true] %s425
          %s427 = sshll.u32 [#allocation11], 4
          %s428 = int_to_ptr.vmem [resolvable:$true] %s427
          %433 = dma.hbm_to_vmem [thread:$0]  %s426, 1024, %s428, [#allocation10], 64, 64, 4
        $region52: #{tpu_custom_call.1} parent=11 // pred_fallthru
          _
        // Predicated region
        $region53: #{tpu_custom_call.1} parent=11 // pred_check
          %p434 = pneg %p296
        $region54: #{tpu_custom_call.1} parent=11 // pred_check_branch
          %436 = sbr.rel (%p434) target = $region56
        $region55: #{tpu_custom_call.1} parent=11 // pred_region
          _
        $region56: #{tpu_custom_call.1} parent=11 // pred_fallthru
          _
        // Predicated region
        $region57: #{tpu_custom_call.1} parent=11 // pred_check
          %p437 = pneg %p317
        $region58: #{tpu_custom_call.1} parent=11 // pred_check_branch
          %439 = sbr.rel (%p437) target = $region60
        $region59: #{tpu_custom_call.1} parent=11 // pred_region
          _
        $region60: #{tpu_custom_call.1} parent=11 // pred_fallthru
          _
      $region12: #{tpu_custom_call.1} parent=5 // pred_fallthru
        _
      %p440 = scmp.lt.s32.totalorder %s27, 4
      // Predicated region
      $region61: #{tpu_custom_call.1} parent=5 // pred_check
        %p441 = pneg %p440
      $region62: #{tpu_custom_call.1} parent=5 // pred_check_branch
        %443 = sbr.rel (%p441) target = $region64
      $region63: #{tpu_custom_call.1} parent=5 // pred_region
        // Predicated region
        $region65: #{tpu_custom_call.1} parent=63 // pred_check
          %p444 = pneg %p59
        $region66: #{tpu_custom_call.1} parent=63 // pred_check_branch
          %446 = sbr.rel (%p444) target = $region68
        $region67: #{tpu_custom_call.1} parent=63 // pred_region
          %s447 = sand.u32 %s49, 1
          %s448 = scalar_lea.sflag [#allocation4], %s447
          %s449 = sand.u32 %s49, 1
          %s450 = smul.addr %s449, 256
          %s451 = scalar_lea.vmem [#allocation3], %s450
          %453 = vsyncadd %s448, 0
          %s454 = smul.addr %s34, 32
          %s455 = smul.addr %s454, 8
          %s456 = scalar_lea.hbm %s0, %s455
          %s457 = sshll.u32 %s456, 4
          %s458 = int_to_ptr.hbm [resolvable:$true] %s457
          %s459 = sshll.u32 %s451, 4
          %s460 = int_to_ptr.vmem [resolvable:$true] %s459
          %465 = dma.hbm_to_vmem [thread:$0]  %s458, 4096, %s460, %s448, 128, 128, 8
        $region68: #{tpu_custom_call.1} parent=63 // pred_fallthru
          _
      $region64: #{tpu_custom_call.1} parent=5 // pred_fallthru
        _
      %p466 = scmp.le.s32.totalorder 1, %s27
      %p467 = scmp.lt.s32.totalorder %s27, 5
      %p468 = pnand %p466, %p467
      %p469 = pneg %p468
      // Predicated region
      $region69: #{tpu_custom_call.1} parent=5 // pred_check
        _
      $region70: #{tpu_custom_call.1} parent=5 // pred_check_branch
        %471 = sbr.rel (%p468) target = $region72
      $region71: #{tpu_custom_call.1} parent=5 // pred_region
        %s472 = ssub.s32 %s27, 1
        %s473 = sand.u32 %s52, 1
        %s474 = scalar_lea.sflag [#allocation4], %s473
        %s475 = sand.u32 %s52, 1
        %s476 = smul.addr %s475, 256
        %s477 = scalar_lea.vmem [#allocation3], %s476
        // Predicated region
        $region73: #{tpu_custom_call.1} parent=71 // pred_check
          %p478 = pneg %p65
        $region74: #{tpu_custom_call.1} parent=71 // pred_check_branch
          %480 = sbr.rel (%p478) target = $region76
        $region75: #{tpu_custom_call.1} parent=71 // pred_region
          %482 = dma.done %s474, 4096
        $region76: #{tpu_custom_call.1} parent=71 // pred_fallthru
          _
        // Predicated region
        $region77: #{tpu_custom_call.1} parent=71 // pred_check
          %p483 = pneg %p86
        $region78: #{tpu_custom_call.1} parent=71 // pred_check_branch
          %485 = sbr.rel (%p483) target = $region80
        $region79: #{tpu_custom_call.1} parent=71 // pred_region
          %487 = dma.done [#allocation7], 1024
        $region80: #{tpu_custom_call.1} parent=71 // pred_fallthru
          _
        // Predicated region
        $region81: #{tpu_custom_call.1} parent=71 // pred_check
          %p488 = pneg %p149
        $region82: #{tpu_custom_call.1} parent=71 // pred_check_branch
          %490 = sbr.rel (%p488) target = $region84
        $region83: #{tpu_custom_call.1} parent=71 // pred_region
          %492 = dma.done [#allocation7], 9216
        $region84: #{tpu_custom_call.1} parent=71 // pred_fallthru
          _
        // Predicated region
        $region85: #{tpu_custom_call.1} parent=71 // pred_check
          %p493 = pneg %p212
        $region86: #{tpu_custom_call.1} parent=71 // pred_check_branch
          %495 = sbr.rel (%p493) target = $region88
        $region87: #{tpu_custom_call.1} parent=71 // pred_region
          %497 = dma.done [#allocation10], 1024
        $region88: #{tpu_custom_call.1} parent=71 // pred_fallthru
          _
        // Predicated region
        $region89: #{tpu_custom_call.1} parent=71 // pred_check
          %p498 = pneg %p275
        $region90: #{tpu_custom_call.1} parent=71 // pred_check_branch
          %500 = sbr.rel (%p498) target = $region92
        $region91: #{tpu_custom_call.1} parent=71 // pred_region
          %502 = dma.done [#allocation10], 1024
        $region92: #{tpu_custom_call.1} parent=71 // pred_fallthru
          _
        %s503 = sand.u32 %s52, 1
        %s504 = scalar_lea.sflag [#allocation4], %s503
        %s505 = sand.u32 %s52, 1
        %s506 = smul.addr %s505, 256
        %s507 = scalar_lea.vmem [#allocation3], %s506
        %p508 = pneg %p65
        %p509 = pneg %p62
        %p510 = pneg %p86
        %p511 = pneg %p83
        %p512 = pneg %p107
        %p513 = pneg %p104
        %p514 = pneg %p128
        %p515 = pneg %p125
        %p516 = pneg %p149
        %p517 = pneg %p146
        %p518 = pneg %p170
        %p519 = pneg %p167
        %p520 = pneg %p191
        %p521 = pneg %p188
        %p522 = pneg %p212
        %p523 = pneg %p209
        %p524 = pneg %p233
        %p525 = pneg %p230
        %p526 = pneg %p254
        %p527 = pneg %p251
        %p528 = pneg %p275
        %p529 = pneg %p272
        %p530 = pneg %p296
        %p531 = pneg %p293
        %p532 = pneg %p317
        %p533 = pneg %p314
        %p534 = pneg %p345
        %p535 = pneg %p342
        %s536 = sand.u32 %s332, 1
        %s537 = scalar_lea.sflag [#allocation5], %s536
        %s538 = sand.u32 %s332, 1
        %s539 = smul.addr %s538, 128
        %s540 = scalar_lea.vmem [#allocation12], %s539
        %s541 = smul.u32 8, %s37
        %s542 = smul.u32 %s37, 8
        %s543 = smul.u32 %s542, 16
        %s544 = scalar_lea.vmem %s477, %s543 [#allocation3]
        %v545 = vld [vmem:[%s544] sm:$0xff]
        %v546 = vld [vmem:[%s544 + $0x8] sm:$0xff]
        %v547 = vld [vmem:[%s544 + $0x10] sm:$0xff]
        %v548 = vld [vmem:[%s544 + $0x18] sm:$0xff]
        %v549 = vld [vmem:[%s544 + $0x20] sm:$0xff]
        %v550 = vld [vmem:[%s544 + $0x28] sm:$0xff]
        %v551 = vld [vmem:[%s544 + $0x30] sm:$0xff]
        %v552 = vld [vmem:[%s544 + $0x38] sm:$0xff]
        %v553 = vld [vmem:[%s544 + $0x40] sm:$0xff]
        %v554 = vld [vmem:[%s544 + $0x48] sm:$0xff]
        %v555 = vld [vmem:[%s544 + $0x50] sm:$0xff]
        %v556 = vld [vmem:[%s544 + $0x58] sm:$0xff]
        %v557 = vld [vmem:[%s544 + $0x60] sm:$0xff]
        %v558 = vld [vmem:[%s544 + $0x68] sm:$0xff]
        %v559 = vld [vmem:[%s544 + $0x70] sm:$0xff]
        %v560 = vld [vmem:[%s544 + $0x78] sm:$0xff]
        %v561 = vpack.c.bf16 %v546, %v545
        %v562 = vpack.c.bf16 %v548, %v547
        %v563 = vpack.c.bf16 %v550, %v549
        %v564 = vpack.c.bf16 %v552, %v551
        %v565 = vpack.c.bf16 %v554, %v553
        %v566 = vpack.c.bf16 %v556, %v555
        %v567 = vpack.c.bf16 %v558, %v557
        %v568 = vpack.c.bf16 %v560, %v559
        %v569 = vld [vmem:[#allocation6] sm:$0xf]
        %v570 = vld [vmem:[#allocation6 + $0x4] sm:$0xf]
        %v571 = vld [vmem:[#allocation6 + $0x8] sm:$0xf]
        %v572 = vld [vmem:[#allocation6 + $0xc] sm:$0xf]
        %v573 = vld [vmem:[#allocation6 + $0x10] sm:$0xf]
        %v574 = vld [vmem:[#allocation6 + $0x14] sm:$0xf]
        %v575 = vld [vmem:[#allocation6 + $0x18] sm:$0xf]
        %v576 = vld [vmem:[#allocation6 + $0x1c] sm:$0xf]
        %v577 = vld [vmem:[#allocation6 + $0x20] sm:$0xf]
        %v578 = vld [vmem:[#allocation6 + $0x24] sm:$0xf]
        %v579 = vld [vmem:[#allocation6 + $0x28] sm:$0xf]
        %v580 = vld [vmem:[#allocation6 + $0x2c] sm:$0xf]
        %v581 = vld [vmem:[#allocation6 + $0x30] sm:$0xf]
        %v582 = vld [vmem:[#allocation6 + $0x34] sm:$0xf]
        %v583 = vld [vmem:[#allocation6 + $0x38] sm:$0xf]
        %v584 = vld [vmem:[#allocation6 + $0x3c] sm:$0xf]
        %v601 = vunpack.c.l.b16 %v569
        %v602 = vunpack.c.l.b16 %v570
        %v603 = vunpack.c.l.b16 %v571
        %v604 = vunpack.c.l.b16 %v572
        %v605 = vunpack.c.l.b16 %v573
        %v606 = vunpack.c.l.b16 %v574
        %v607 = vunpack.c.l.b16 %v575
        %v608 = vunpack.c.l.b16 %v576
        %v609 = vunpack.c.l.b16 %v577
        %v610 = vunpack.c.l.b16 %v578
        %v611 = vunpack.c.l.b16 %v579
        %v612 = vunpack.c.l.b16 %v580
        %v613 = vunpack.c.l.b16 %v581
        %v614 = vunpack.c.l.b16 %v582
        %v615 = vunpack.c.l.b16 %v583
        %v616 = vunpack.c.l.b16 %v584
        %v617 = vpack.c.b16 %v602, %v601
        %v618 = vpack.c.b16 %v604, %v603
        %v619 = vpack.c.b16 %v606, %v605
        %v620 = vpack.c.b16 %v608, %v607
        %v621 = vpack.c.b16 %v610, %v609
        %v622 = vpack.c.b16 %v612, %v611
        %v623 = vpack.c.b16 %v614, %v613
        %v624 = vpack.c.b16 %v616, %v615
        %633 = vmatpush.bf16.msra.mxu0 %v624
        %634 = vmatpush.bf16.msra.mxu0 %v623
        %635 = vmatpush.bf16.msra.mxu0 %v622
        %636 = vmatpush.bf16.msra.mxu0 %v621
        %637 = vmatpush.bf16.msra.mxu0 %v620
        %638 = vmatpush.bf16.msra.mxu0 %v619
        %639 = vmatpush.bf16.msra.mxu0 %v618
        %640 = vmatpush.bf16.msra.mxu0 %v617
        %641 = vmatmul.bf16.gmra.mxu0 %v561
        %v642 = vpop.f32.mrf.mxu0
        %v643 = vadd.f32 0.0, %v642
        %v644 = vpop.f32.mrf.mxu0
        %v645 = vadd.f32 0.0, %v644
        %646 = vmatmul.bf16.gmra.mxu0 %v562
        %v647 = vpop.f32.mrf.mxu0
        %v648 = vadd.f32 0.0, %v647
        %v649 = vpop.f32.mrf.mxu0
        %v650 = vadd.f32 0.0, %v649
        %651 = vmatmul.bf16.gmra.mxu0 %v563
        %v652 = vpop.f32.mrf.mxu0
        %v653 = vadd.f32 0.0, %v652
        %v654 = vpop.f32.mrf.mxu0
        %v655 = vadd.f32 0.0, %v654
        %656 = vmatmul.bf16.gmra.mxu0 %v564
        %v657 = vpop.f32.mrf.mxu0
        %v658 = vadd.f32 0.0, %v657
        %v659 = vpop.f32.mrf.mxu0
        %v660 = vadd.f32 0.0, %v659
        %661 = vmatmul.bf16.gmra.mxu0 %v565
        %v662 = vpop.f32.mrf.mxu0
        %v663 = vadd.f32 0.0, %v662
        %v664 = vpop.f32.mrf.mxu0
        %v665 = vadd.f32 0.0, %v664
        %666 = vmatmul.bf16.gmra.mxu0 %v566
        %v667 = vpop.f32.mrf.mxu0
        %v668 = vadd.f32 0.0, %v667
        %v669 = vpop.f32.mrf.mxu0
        %v670 = vadd.f32 0.0, %v669
        %671 = vmatmul.bf16.gmra.mxu0 %v567
        %v672 = vpop.f32.mrf.mxu0
        %v673 = vadd.f32 0.0, %v672
        %v674 = vpop.f32.mrf.mxu0
        %v675 = vadd.f32 0.0, %v674
        %676 = vmatmul.bf16.gmra.mxu0 %v568
        %v677 = vpop.f32.mrf.mxu0
        %v678 = vadd.f32 0.0, %v677
        %v679 = vpop.f32.mrf.mxu0
        %v680 = vadd.f32 0.0, %v679
        %681 = vdwg.mxu0
        %v682 = vld [vmem:[%s2] sm:$0x1]
        %v684 = vperm.slane %v682, 0
        %v686 = vmul.f32 %v643, %v684
        %v687 = vmul.f32 %v645, %v684
        %v688 = vmul.f32 %v648, %v684
        %v689 = vmul.f32 %v650, %v684
        %v690 = vmul.f32 %v653, %v684
        %v691 = vmul.f32 %v655, %v684
        %v692 = vmul.f32 %v658, %v684
        %v693 = vmul.f32 %v660, %v684
        %v694 = vmul.f32 %v663, %v684
        %v695 = vmul.f32 %v665, %v684
        %v696 = vmul.f32 %v668, %v684
        %v697 = vmul.f32 %v670, %v684
        %v698 = vmul.f32 %v673, %v684
        %v699 = vmul.f32 %v675, %v684
        %v700 = vmul.f32 %v678, %v684
        %v701 = vmul.f32 %v680, %v684
        %v702 = vld [vmem:[%s3] sm:$0x1]
        %v704 = vperm.slane %v702, 0
        %v706 = vadd.f32 %v686, %v704
        %v707 = vadd.f32 %v687, %v704
        %v708 = vadd.f32 %v688, %v704
        %v709 = vadd.f32 %v689, %v704
        %v710 = vadd.f32 %v690, %v704
        %v711 = vadd.f32 %v691, %v704
        %v712 = vadd.f32 %v692, %v704
        %v713 = vadd.f32 %v693, %v704
        %v714 = vadd.f32 %v694, %v704
        %v715 = vadd.f32 %v695, %v704
        %v716 = vadd.f32 %v696, %v704
        %v717 = vadd.f32 %v697, %v704
        %v718 = vadd.f32 %v698, %v704
        %v719 = vadd.f32 %v699, %v704
        %v720 = vadd.f32 %v700, %v704
        %v721 = vadd.f32 %v701, %v704
        %v722 = vmax.f32 %v706, 0.0
        %v723 = vmax.f32 %v707, 0.0
        %v724 = vmax.f32 %v708, 0.0
        %v725 = vmax.f32 %v709, 0.0
        %v726 = vmax.f32 %v710, 0.0
        %v727 = vmax.f32 %v711, 0.0
        %v728 = vmax.f32 %v712, 0.0
        %v729 = vmax.f32 %v713, 0.0
        %v730 = vmax.f32 %v714, 0.0
        %v731 = vmax.f32 %v715, 0.0
        %v732 = vmax.f32 %v716, 0.0
        %v733 = vmax.f32 %v717, 0.0
        %v734 = vmax.f32 %v718, 0.0
        %v735 = vmax.f32 %v719, 0.0
        %v736 = vmax.f32 %v720, 0.0
        %v737 = vmax.f32 %v721, 0.0
        %s738 = scalar_lea.vmem [#allocation2], 24
        %739 = vst [vmem:[%s738 + $0x1] sm:$0xff] %v722
        %740 = vst [vmem:[%s738 + $0x9] sm:$0xff] %v723
        %741 = vst [vmem:[%s738 + $0x19] sm:$0xff] %v724
        %742 = vst [vmem:[%s738 + $0x21] sm:$0xff] %v725
        %743 = vst [vmem:[%s738 + $0x31] sm:$0xff] %v726
        %744 = vst [vmem:[%s738 + $0x39] sm:$0xff] %v727
        %745 = vst [vmem:[%s738 + $0x49] sm:$0xff] %v728
        %746 = vst [vmem:[%s738 + $0x51] sm:$0xff] %v729
        %747 = vst [vmem:[%s738 + $0x61] sm:$0xff] %v730
        %748 = vst [vmem:[%s738 + $0x69] sm:$0xff] %v731
        %749 = vst [vmem:[%s738 + $0x79] sm:$0xff] %v732
        %750 = vst [vmem:[%s738 + $0x81] sm:$0xff] %v733
        %751 = vst [vmem:[%s738 + $0x91] sm:$0xff] %v734
        %752 = vst [vmem:[%s738 + $0x99] sm:$0xff] %v735
        %753 = vst [vmem:[%s738 + $0xa9] sm:$0xff] %v736
        %754 = vst [vmem:[%s738 + $0xb1] sm:$0xff] %v737
        %755 = vst [vmem:[#allocation2] sm:$0x1] 0.0
        %756 = vst [vmem:[#allocation2 + $0x18] sm:$0x1] 0.0
        %757 = vst [vmem:[#allocation2 + $0x30] sm:$0x1] 0.0
        %758 = vst [vmem:[#allocation2 + $0x48] sm:$0x1] 0.0
        %759 = vst [vmem:[#allocation2 + $0x60] sm:$0x1] 0.0
        %760 = vst [vmem:[#allocation2 + $0x78] sm:$0x1] 0.0
        %761 = vst [vmem:[#allocation2 + $0x90] sm:$0x1] 0.0
        %762 = vst [vmem:[#allocation2 + $0xa8] sm:$0x1] 0.0
        %763 = vst [vmem:[#allocation2 + $0xc0] sm:$0x1] 0.0
        %764 = vst [vmem:[#allocation2 + $0xd8] sm:$0x1] 0.0
        %765 = vst [vmem:[#allocation2 + $0x11] sm:$0x1] 0.0
        %766 = vst [vmem:[#allocation2 + $0x29] sm:$0x1] 0.0
        %767 = vst [vmem:[#allocation2 + $0x41] sm:$0x1] 0.0
        %768 = vst [vmem:[#allocation2 + $0x59] sm:$0x1] 0.0
        %769 = vst [vmem:[#allocation2 + $0x71] sm:$0x1] 0.0
        %770 = vst [vmem:[#allocation2 + $0x89] sm:$0x1] 0.0
        %771 = vst [vmem:[#allocation2 + $0xa1] sm:$0x1] 0.0
        %772 = vst [vmem:[#allocation2 + $0xb9] sm:$0x1] 0.0
        %773 = vst [vmem:[#allocation2 + $0xd1] sm:$0x1] 0.0
        %774 = vst [vmem:[#allocation2 + $0xe9] sm:$0x1] 0.0
        %p775 = scmp.eq.s32.totalorder %s37, 0
        // Predicated region
        $region93: #{tpu_custom_call.1} parent=71 // pred_check
          %p776 = pneg %p775
        $region94: #{tpu_custom_call.1} parent=71 // pred_check_branch
          %778 = sbr.rel (%p776) target = $region96
        $region95: #{tpu_custom_call.1} parent=71 // pred_region
          %779 = vst [vmem:[#allocation2] sm:$0xff] 0.0
          %780 = vst [vmem:[#allocation2 + $0x8] sm:$0xff] 0.0
          %781 = vst [vmem:[#allocation2 + $0x10] sm:$0x3] 0.0
        $region96: #{tpu_custom_call.1} parent=71 // pred_fallthru
          _
        %p782 = scmp.gt.s32.totalorder %s37, 0
        // Predicated region
        $region97: #{tpu_custom_call.1} parent=71 // pred_check
          %p783 = pneg %p782
        $region98: #{tpu_custom_call.1} parent=71 // pred_check_branch
          %785 = sbr.rel (%p783) target = $region100
        $region99: #{tpu_custom_call.1} parent=71 // pred_region
          %s786 = ssub.s32 %s542, 1
          %s787 = smul.u32 %s786, 16
          %s788 = scalar_lea.vmem %s477, %s787 [#allocation3]
          %v789 = vld [vmem:[%s788] sm:$0xff]
          %v790 = vld [vmem:[%s788 + $0x8] sm:$0xff]
          %v791 = vpack.c.bf16 %v790, %v789
          %v792 = vld [vmem:[#allocation6] sm:$0xf]
          %v793 = vld [vmem:[#allocation6 + $0x4] sm:$0xf]
          %v794 = vld [vmem:[#allocation6 + $0x8] sm:$0xf]
          %v795 = vld [vmem:[#allocation6 + $0xc] sm:$0xf]
          %v796 = vld [vmem:[#allocation6 + $0x10] sm:$0xf]
          %v797 = vld [vmem:[#allocation6 + $0x14] sm:$0xf]
          %v798 = vld [vmem:[#allocation6 + $0x18] sm:$0xf]
          %v799 = vld [vmem:[#allocation6 + $0x1c] sm:$0xf]
          %v800 = vld [vmem:[#allocation6 + $0x20] sm:$0xf]
          %v801 = vld [vmem:[#allocation6 + $0x24] sm:$0xf]
          %v802 = vld [vmem:[#allocation6 + $0x28] sm:$0xf]
          %v803 = vld [vmem:[#allocation6 + $0x2c] sm:$0xf]
          %v804 = vld [vmem:[#allocation6 + $0x30] sm:$0xf]
          %v805 = vld [vmem:[#allocation6 + $0x34] sm:$0xf]
          %v806 = vld [vmem:[#allocation6 + $0x38] sm:$0xf]
          %v807 = vld [vmem:[#allocation6 + $0x3c] sm:$0xf]
          %v824 = vunpack.c.l.b16 %v792
          %v825 = vunpack.c.l.b16 %v793
          %v826 = vunpack.c.l.b16 %v794
          %v827 = vunpack.c.l.b16 %v795
          %v828 = vunpack.c.l.b16 %v796
          %v829 = vunpack.c.l.b16 %v797
          %v830 = vunpack.c.l.b16 %v798
          %v831 = vunpack.c.l.b16 %v799
          %v832 = vunpack.c.l.b16 %v800
          %v833 = vunpack.c.l.b16 %v801
          %v834 = vunpack.c.l.b16 %v802
          %v835 = vunpack.c.l.b16 %v803
          %v836 = vunpack.c.l.b16 %v804
          %v837 = vunpack.c.l.b16 %v805
          %v838 = vunpack.c.l.b16 %v806
          %v839 = vunpack.c.l.b16 %v807
          %v840 = vpack.c.b16 %v825, %v824
          %v841 = vpack.c.b16 %v827, %v826
          %v842 = vpack.c.b16 %v829, %v828
          %v843 = vpack.c.b16 %v831, %v830
          %v844 = vpack.c.b16 %v833, %v832
          %v845 = vpack.c.b16 %v835, %v834
          %v846 = vpack.c.b16 %v837, %v836
          %v847 = vpack.c.b16 %v839, %v838
          %856 = vmatpush.bf16.msra.mxu0 %v847
          %857 = vmatpush.bf16.msra.mxu0 %v846
          %858 = vmatpush.bf16.msra.mxu0 %v845
          %859 = vmatpush.bf16.msra.mxu0 %v844
          %860 = vmatpush.bf16.msra.mxu0 %v843
          %861 = vmatpush.bf16.msra.mxu0 %v842
          %862 = vmatpush.bf16.msra.mxu0 %v841
          %863 = vmatpush.bf16.msra.mxu0 %v840
          %864 = vmatmul.bf16.gmra.mxu0 %v791
          %v865 = vpop.f32.mrf.mxu0
          %v866 = vadd.f32 0.0, %v865
          %v867 = vpop.f32.mrf.mxu0
          %v868 = vadd.f32 0.0, %v867
          %869 = vdwg.mxu0
          %v870 = vld [vmem:[%s2] sm:$0x1]
          %v872 = vperm.slane %v870, 0
          %v874 = vmul.f32 %v866, %v872
          %v875 = vmul.f32 %v868, %v872
          %v876 = vld [vmem:[%s3] sm:$0x1]
          %v878 = vperm.slane %v876, 0
          %v880 = vadd.f32 %v874, %v878
          %v881 = vadd.f32 %v875, %v878
          %v882 = vmax.f32 %v880, 0.0
          %v883 = vmax.f32 %v881, 0.0
          %884 = vst [vmem:[#allocation2 + $0x1] sm:$0xff] %v882
          %885 = vst [vmem:[#allocation2 + $0x9] sm:$0xff] %v883
        $region100: #{tpu_custom_call.1} parent=71 // pred_fallthru
          _
        %s886 = sadd.s32 %s542, 8
        %p887 = scmp.le.s32.totalorder %s886, 15
        %p888 = scmp.gt.s32.totalorder %s886, 15
        // Predicated region
        $region101: #{tpu_custom_call.1} parent=71 // pred_check
          %p889 = pneg %p888
        $region102: #{tpu_custom_call.1} parent=71 // pred_check_branch
          %891 = sbr.rel (%p889) target = $region104
        $region103: #{tpu_custom_call.1} parent=71 // pred_region
          %s892 = scalar_lea.vmem [#allocation2], 216
          %893 = vst [vmem:[%s892] sm:$0xff] 0.0
          %894 = vst [vmem:[%s892 + $0x8] sm:$0xff] 0.0
          %895 = vst [vmem:[%s892 + $0x10] sm:$0x3] 0.0
        $region104: #{tpu_custom_call.1} parent=71 // pred_fallthru
          _
        // Predicated region
        $region105: #{tpu_custom_call.1} parent=71 // pred_check
          %p896 = pneg %p887
        $region106: #{tpu_custom_call.1} parent=71 // pred_check_branch
          %898 = sbr.rel (%p896) target = $region108
        $region107: #{tpu_custom_call.1} parent=71 // pred_region
          %s899 = smul.u32 %s886, 16
          %s900 = scalar_lea.vmem %s477, %s899 [#allocation3]
          %v901 = vld [vmem:[%s900] sm:$0xff]
          %v902 = vld [vmem:[%s900 + $0x8] sm:$0xff]
          %v903 = vpack.c.bf16 %v902, %v901
          %v904 = vld [vmem:[#allocation6] sm:$0xf]
          %v905 = vld [vmem:[#allocation6 + $0x4] sm:$0xf]
          %v906 = vld [vmem:[#allocation6 + $0x8] sm:$0xf]
          %v907 = vld [vmem:[#allocation6 + $0xc] sm:$0xf]
          %v908 = vld [vmem:[#allocation6 + $0x10] sm:$0xf]
          %v909 = vld [vmem:[#allocation6 + $0x14] sm:$0xf]
          %v910 = vld [vmem:[#allocation6 + $0x18] sm:$0xf]
          %v911 = vld [vmem:[#allocation6 + $0x1c] sm:$0xf]
          %v912 = vld [vmem:[#allocation6 + $0x20] sm:$0xf]
          %v913 = vld [vmem:[#allocation6 + $0x24] sm:$0xf]
          %v914 = vld [vmem:[#allocation6 + $0x28] sm:$0xf]
          %v915 = vld [vmem:[#allocation6 + $0x2c] sm:$0xf]
          %v916 = vld [vmem:[#allocation6 + $0x30] sm:$0xf]
          %v917 = vld [vmem:[#allocation6 + $0x34] sm:$0xf]
          %v918 = vld [vmem:[#allocation6 + $0x38] sm:$0xf]
          %v919 = vld [vmem:[#allocation6 + $0x3c] sm:$0xf]
          %v936 = vunpack.c.l.b16 %v904
          %v937 = vunpack.c.l.b16 %v905
          %v938 = vunpack.c.l.b16 %v906
          %v939 = vunpack.c.l.b16 %v907
          %v940 = vunpack.c.l.b16 %v908
          %v941 = vunpack.c.l.b16 %v909
          %v942 = vunpack.c.l.b16 %v910
          %v943 = vunpack.c.l.b16 %v911
          %v944 = vunpack.c.l.b16 %v912
          %v945 = vunpack.c.l.b16 %v913
          %v946 = vunpack.c.l.b16 %v914
          %v947 = vunpack.c.l.b16 %v915
          %v948 = vunpack.c.l.b16 %v916
          %v949 = vunpack.c.l.b16 %v917
          %v950 = vunpack.c.l.b16 %v918
          %v951 = vunpack.c.l.b16 %v919
          %v952 = vpack.c.b16 %v937, %v936
          %v953 = vpack.c.b16 %v939, %v938
          %v954 = vpack.c.b16 %v941, %v940
          %v955 = vpack.c.b16 %v943, %v942
          %v956 = vpack.c.b16 %v945, %v944
          %v957 = vpack.c.b16 %v947, %v946
          %v958 = vpack.c.b16 %v949, %v948
          %v959 = vpack.c.b16 %v951, %v950
          %968 = vmatpush.bf16.msra.mxu0 %v959
          %969 = vmatpush.bf16.msra.mxu0 %v958
          %970 = vmatpush.bf16.msra.mxu0 %v957
          %971 = vmatpush.bf16.msra.mxu0 %v956
          %972 = vmatpush.bf16.msra.mxu0 %v955
          %973 = vmatpush.bf16.msra.mxu0 %v954
          %974 = vmatpush.bf16.msra.mxu0 %v953
          %975 = vmatpush.bf16.msra.mxu0 %v952
          %976 = vmatmul.bf16.gmra.mxu0 %v903
          %v977 = vpop.f32.mrf.mxu0
          %v978 = vadd.f32 0.0, %v977
          %v979 = vpop.f32.mrf.mxu0
          %v980 = vadd.f32 0.0, %v979
          %981 = vdwg.mxu0
          %v982 = vld [vmem:[%s2] sm:$0x1]
          %v984 = vperm.slane %v982, 0
          %v986 = vmul.f32 %v978, %v984
          %v987 = vmul.f32 %v980, %v984
          %v988 = vld [vmem:[%s3] sm:$0x1]
          %v990 = vperm.slane %v988, 0
          %v992 = vadd.f32 %v986, %v990
          %v993 = vadd.f32 %v987, %v990
          %v994 = vmax.f32 %v992, 0.0
          %v995 = vmax.f32 %v993, 0.0
          %s996 = scalar_lea.vmem [#allocation2], 216
          %997 = vst [vmem:[%s996 + $0x1] sm:$0xff] %v994
          %998 = vst [vmem:[%s996 + $0x9] sm:$0xff] %v995
        $region108: #{tpu_custom_call.1} parent=71 // pred_fallthru
          _
        %v999 = vld [vmem:[#allocation2] sm:$0xff]
        %v1000 = vld [vmem:[#allocation2 + $0x8] sm:$0xff]
        %v1001 = vld [vmem:[#allocation2 + $0x18] sm:$0xff]
        %v1002 = vld [vmem:[#allocation2 + $0x20] sm:$0xff]
        %v1003 = vld [vmem:[#allocation2 + $0x30] sm:$0xff]
        %v1004 = vld [vmem:[#allocation2 + $0x38] sm:$0xff]
        %v1005 = vld [vmem:[#allocation2 + $0x48] sm:$0xff]
        %v1006 = vld [vmem:[#allocation2 + $0x50] sm:$0xff]
        %v1007 = vld [vmem:[#allocation2 + $0x60] sm:$0xff]
        %v1008 = vld [vmem:[#allocation2 + $0x68] sm:$0xff]
        %v1009 = vld [vmem:[#allocation2 + $0x78] sm:$0xff]
        %v1010 = vld [vmem:[#allocation2 + $0x80] sm:$0xff]
        %v1011 = vld [vmem:[#allocation2 + $0x90] sm:$0xff]
        %v1012 = vld [vmem:[#allocation2 + $0x98] sm:$0xff]
        %v1013 = vld [vmem:[#allocation2 + $0xa8] sm:$0xff]
        %v1014 = vld [vmem:[#allocation2 + $0xb0] sm:$0xff]
        %v1015 = vpack.c.bf16 %v1000, %v999
        %v1016 = vpack.c.bf16 %v1002, %v1001
        %v1017 = vpack.c.bf16 %v1004, %v1003
        %v1018 = vpack.c.bf16 %v1006, %v1005
        %v1019 = vpack.c.bf16 %v1008, %v1007
        %v1020 = vpack.c.bf16 %v1010, %v1009
        %v1021 = vpack.c.bf16 %v1012, %v1011
        %v1022 = vpack.c.bf16 %v1014, %v1013
        %v1023 = vld [vmem:[#allocation8] sm:$0xf]
        %v1024 = vld [vmem:[#allocation8 + $0x4] sm:$0xf]
        %v1025 = vld [vmem:[#allocation8 + $0x8] sm:$0xf]
        %v1026 = vld [vmem:[#allocation8 + $0xc] sm:$0xf]
        %v1027 = vld [vmem:[#allocation8 + $0x10] sm:$0xf]
        %v1028 = vld [vmem:[#allocation8 + $0x14] sm:$0xf]
        %v1029 = vld [vmem:[#allocation8 + $0x18] sm:$0xf]
        %v1030 = vld [vmem:[#allocation8 + $0x1c] sm:$0xf]
        %v1031 = vld [vmem:[#allocation8 + $0x20] sm:$0xf]
        %v1032 = vld [vmem:[#allocation8 + $0x24] sm:$0xf]
        %v1033 = vld [vmem:[#allocation8 + $0x28] sm:$0xf]
        %v1034 = vld [vmem:[#allocation8 + $0x2c] sm:$0xf]
        %v1035 = vld [vmem:[#allocation8 + $0x30] sm:$0xf]
        %v1036 = vld [vmem:[#allocation8 + $0x34] sm:$0xf]
        %v1037 = vld [vmem:[#allocation8 + $0x38] sm:$0xf]
        %v1038 = vld [vmem:[#allocation8 + $0x3c] sm:$0xf]
        %v1039 = vld [vmem:[#allocation2 + $0x1] sm:$0xff]
        %v1040 = vld [vmem:[#allocation2 + $0x9] sm:$0xff]
        %v1041 = vld [vmem:[#allocation2 + $0x19] sm:$0xff]
        %v1042 = vld [vmem:[#allocation2 + $0x21] sm:$0xff]
        %v1043 = vld [vmem:[#allocation2 + $0x31] sm:$0xff]
        %v1044 = vld [vmem:[#allocation2 + $0x39] sm:$0xff]
        %v1045 = vld [vmem:[#allocation2 + $0x49] sm:$0xff]
        %v1046 = vld [vmem:[#allocation2 + $0x51] sm:$0xff]
        %v1047 = vld [vmem:[#allocation2 + $0x61] sm:$0xff]
        %v1048 = vld [vmem:[#allocation2 + $0x69] sm:$0xff]
        %v1049 = vld [vmem:[#allocation2 + $0x79] sm:$0xff]
        %v1050 = vld [vmem:[#allocation2 + $0x81] sm:$0xff]
        %v1051 = vld [vmem:[#allocation2 + $0x91] sm:$0xff]
        %v1052 = vld [vmem:[#allocation2 + $0x99] sm:$0xff]
        %v1053 = vld [vmem:[#allocation2 + $0xa9] sm:$0xff]
        %v1054 = vld [vmem:[#allocation2 + $0xb1] sm:$0xff]
        %v1055 = vpack.c.bf16 %v1040, %v1039
        %v1056 = vpack.c.bf16 %v1042, %v1041
        %v1057 = vpack.c.bf16 %v1044, %v1043
        %v1058 = vpack.c.bf16 %v1046, %v1045
        %v1059 = vpack.c.bf16 %v1048, %v1047
        %v1060 = vpack.c.bf16 %v1050, %v1049
        %v1061 = vpack.c.bf16 %v1052, %v1051
        %v1062 = vpack.c.bf16 %v1054, %v1053
        %s1063 = scalar_lea.vmem [#allocation8], 64
        %v1064 = vld [vmem:[%s1063] sm:$0xf]
        %v1065 = vld [vmem:[%s1063 + $0x4] sm:$0xf]
        %v1066 = vld [vmem:[%s1063 + $0x8] sm:$0xf]
        %v1067 = vld [vmem:[%s1063 + $0xc] sm:$0xf]
        %v1068 = vld [vmem:[%s1063 + $0x10] sm:$0xf]
        %v1069 = vld [vmem:[%s1063 + $0x14] sm:$0xf]
        %v1070 = vld [vmem:[%s1063 + $0x18] sm:$0xf]
        %v1071 = vld [vmem:[%s1063 + $0x1c] sm:$0xf]
        %v1072 = vld [vmem:[%s1063 + $0x20] sm:$0xf]
        %v1073 = vld [vmem:[%s1063 + $0x24] sm:$0xf]
        %v1074 = vld [vmem:[%s1063 + $0x28] sm:$0xf]
        %v1075 = vld [vmem:[%s1063 + $0x2c] sm:$0xf]
        %v1076 = vld [vmem:[%s1063 + $0x30] sm:$0xf]
        %v1077 = vld [vmem:[%s1063 + $0x34] sm:$0xf]
        %v1078 = vld [vmem:[%s1063 + $0x38] sm:$0xf]
        %v1079 = vld [vmem:[%s1063 + $0x3c] sm:$0xf]
        %v1096 = vunpack.c.l.b16 %v1064
        %v1097 = vunpack.c.l.b16 %v1065
        %v1098 = vunpack.c.l.b16 %v1066
        %v1099 = vunpack.c.l.b16 %v1067
        %v1100 = vunpack.c.l.b16 %v1068
        %v1101 = vunpack.c.l.b16 %v1069
        %v1102 = vunpack.c.l.b16 %v1070
        %v1103 = vunpack.c.l.b16 %v1071
        %v1104 = vunpack.c.l.b16 %v1072
        %v1105 = vunpack.c.l.b16 %v1073
        %v1106 = vunpack.c.l.b16 %v1074
        %v1107 = vunpack.c.l.b16 %v1075
        %v1108 = vunpack.c.l.b16 %v1076
        %v1109 = vunpack.c.l.b16 %v1077
        %v1110 = vunpack.c.l.b16 %v1078
        %v1111 = vunpack.c.l.b16 %v1079
        %v1112 = vpack.c.b16 %v1097, %v1096
        %v1113 = vpack.c.b16 %v1099, %v1098
        %v1114 = vpack.c.b16 %v1101, %v1100
        %v1115 = vpack.c.b16 %v1103, %v1102
        %v1116 = vpack.c.b16 %v1105, %v1104
        %v1117 = vpack.c.b16 %v1107, %v1106
        %v1118 = vpack.c.b16 %v1109, %v1108
        %v1119 = vpack.c.b16 %v1111, %v1110
        %1128 = vmatpush.bf16.msra.mxu0 %v1119
        %1129 = vmatpush.bf16.msra.mxu0 %v1118
        %1130 = vmatpush.bf16.msra.mxu0 %v1117
        %1131 = vmatpush.bf16.msra.mxu0 %v1116
        %1132 = vmatpush.bf16.msra.mxu0 %v1115
        %1133 = vmatpush.bf16.msra.mxu0 %v1114
        %1134 = vmatpush.bf16.msra.mxu0 %v1113
        %1135 = vmatpush.bf16.msra.mxu0 %v1112
        %1136 = vmatmul.bf16.gmra.mxu0 %v1055
        %v1137 = vpop.f32.mrf.mxu0
        %v1138 = vadd.f32 0.0, %v1137
        %v1139 = vpop.f32.mrf.mxu0
        %v1140 = vadd.f32 0.0, %v1139
        %1141 = vmatmul.bf16.gmra.mxu0 %v1056
        %v1142 = vpop.f32.mrf.mxu0
        %v1143 = vadd.f32 0.0, %v1142
        %v1144 = vpop.f32.mrf.mxu0
        %v1145 = vadd.f32 0.0, %v1144
        %1146 = vmatmul.bf16.gmra.mxu0 %v1057
        %v1147 = vpop.f32.mrf.mxu0
        %v1148 = vadd.f32 0.0, %v1147
        %v1149 = vpop.f32.mrf.mxu0
        %v1150 = vadd.f32 0.0, %v1149
        %1151 = vmatmul.bf16.gmra.mxu0 %v1058
        %v1152 = vpop.f32.mrf.mxu0
        %v1153 = vadd.f32 0.0, %v1152
        %v1154 = vpop.f32.mrf.mxu0
        %v1155 = vadd.f32 0.0, %v1154
        %1156 = vmatmul.bf16.gmra.mxu0 %v1059
        %v1157 = vpop.f32.mrf.mxu0
        %v1158 = vadd.f32 0.0, %v1157
        %v1159 = vpop.f32.mrf.mxu0
        %v1160 = vadd.f32 0.0, %v1159
        %1161 = vmatmul.bf16.gmra.mxu0 %v1060
        %v1162 = vpop.f32.mrf.mxu0
        %v1163 = vadd.f32 0.0, %v1162
        %v1164 = vpop.f32.mrf.mxu0
        %v1165 = vadd.f32 0.0, %v1164
        %1166 = vmatmul.bf16.gmra.mxu0 %v1061
        %v1167 = vpop.f32.mrf.mxu0
        %v1168 = vadd.f32 0.0, %v1167
        %v1169 = vpop.f32.mrf.mxu0
        %v1170 = vadd.f32 0.0, %v1169
        %1171 = vmatmul.bf16.gmra.mxu0 %v1062
        %v1172 = vpop.f32.mrf.mxu0
        %v1173 = vadd.f32 0.0, %v1172
        %v1174 = vpop.f32.mrf.mxu0
        %v1175 = vadd.f32 0.0, %v1174
        %1176 = vdwg.mxu0
        %v1193 = vunpack.c.l.b16 %v1023
        %v1194 = vunpack.c.l.b16 %v1024
        %v1195 = vunpack.c.l.b16 %v1025
        %v1196 = vunpack.c.l.b16 %v1026
        %v1197 = vunpack.c.l.b16 %v1027
        %v1198 = vunpack.c.l.b16 %v1028
        %v1199 = vunpack.c.l.b16 %v1029
        %v1200 = vunpack.c.l.b16 %v1030
        %v1201 = vunpack.c.l.b16 %v1031
        %v1202 = vunpack.c.l.b16 %v1032
        %v1203 = vunpack.c.l.b16 %v1033
        %v1204 = vunpack.c.l.b16 %v1034
        %v1205 = vunpack.c.l.b16 %v1035
        %v1206 = vunpack.c.l.b16 %v1036
        %v1207 = vunpack.c.l.b16 %v1037
        %v1208 = vunpack.c.l.b16 %v1038
        %v1209 = vpack.c.b16 %v1194, %v1193
        %v1210 = vpack.c.b16 %v1196, %v1195
        %v1211 = vpack.c.b16 %v1198, %v1197
        %v1212 = vpack.c.b16 %v1200, %v1199
        %v1213 = vpack.c.b16 %v1202, %v1201
        %v1214 = vpack.c.b16 %v1204, %v1203
        %v1215 = vpack.c.b16 %v1206, %v1205
        %v1216 = vpack.c.b16 %v1208, %v1207
        %1225 = vmatpush.bf16.msra.mxu0 %v1216
        %1226 = vmatpush.bf16.msra.mxu0 %v1215
        %1227 = vmatpush.bf16.msra.mxu0 %v1214
        %1228 = vmatpush.bf16.msra.mxu0 %v1213
        %1229 = vmatpush.bf16.msra.mxu0 %v1212
        %1230 = vmatpush.bf16.msra.mxu0 %v1211
        %1231 = vmatpush.bf16.msra.mxu0 %v1210
        %1232 = vmatpush.bf16.msra.mxu0 %v1209
        %1233 = vmatmul.bf16.gmra.mxu0 %v1015
        %v1234 = vpop.f32.mrf.mxu0
        %v1235 = vadd.f32 %v1138, %v1234
        %v1236 = vpop.f32.mrf.mxu0
        %v1237 = vadd.f32 %v1140, %v1236
        %1238 = vmatmul.bf16.gmra.mxu0 %v1016
        %v1239 = vpop.f32.mrf.mxu0
        %v1240 = vadd.f32 %v1143, %v1239
        %v1241 = vpop.f32.mrf.mxu0
        %v1242 = vadd.f32 %v1145, %v1241
        %1243 = vmatmul.bf16.gmra.mxu0 %v1017
        %v1244 = vpop.f32.mrf.mxu0
        %v1245 = vadd.f32 %v1148, %v1244
        %v1246 = vpop.f32.mrf.mxu0
        %v1247 = vadd.f32 %v1150, %v1246
        %1248 = vmatmul.bf16.gmra.mxu0 %v1018
        %v1249 = vpop.f32.mrf.mxu0
        %v1250 = vadd.f32 %v1153, %v1249
        %v1251 = vpop.f32.mrf.mxu0
        %v1252 = vadd.f32 %v1155, %v1251
        %1253 = vmatmul.bf16.gmra.mxu0 %v1019
        %v1254 = vpop.f32.mrf.mxu0
        %v1255 = vadd.f32 %v1158, %v1254
        %v1256 = vpop.f32.mrf.mxu0
        %v1257 = vadd.f32 %v1160, %v1256
        %1258 = vmatmul.bf16.gmra.mxu0 %v1020
        %v1259 = vpop.f32.mrf.mxu0
        %v1260 = vadd.f32 %v1163, %v1259
        %v1261 = vpop.f32.mrf.mxu0
        %v1262 = vadd.f32 %v1165, %v1261
        %1263 = vmatmul.bf16.gmra.mxu0 %v1021
        %v1264 = vpop.f32.mrf.mxu0
        %v1265 = vadd.f32 %v1168, %v1264
        %v1266 = vpop.f32.mrf.mxu0
        %v1267 = vadd.f32 %v1170, %v1266
        %1268 = vmatmul.bf16.gmra.mxu0 %v1022
        %v1269 = vpop.f32.mrf.mxu0
        %v1270 = vadd.f32 %v1173, %v1269
        %v1271 = vpop.f32.mrf.mxu0
        %v1272 = vadd.f32 %v1175, %v1271
        %1273 = vdwg.mxu0
        %v1274 = vld [vmem:[#allocation2 + $0x2] sm:$0xff]
        %v1275 = vld [vmem:[#allocation2 + $0xa] sm:$0xff]
        %v1276 = vld [vmem:[#allocation2 + $0x1a] sm:$0xff]
        %v1277 = vld [vmem:[#allocation2 + $0x22] sm:$0xff]
        %v1278 = vld [vmem:[#allocation2 + $0x32] sm:$0xff]
        %v1279 = vld [vmem:[#allocation2 + $0x3a] sm:$0xff]
        %v1280 = vld [vmem:[#allocation2 + $0x4a] sm:$0xff]
        %v1281 = vld [vmem:[#allocation2 + $0x52] sm:$0xff]
        %v1282 = vld [vmem:[#allocation2 + $0x62] sm:$0xff]
        %v1283 = vld [vmem:[#allocation2 + $0x6a] sm:$0xff]
        %v1284 = vld [vmem:[#allocation2 + $0x7a] sm:$0xff]
        %v1285 = vld [vmem:[#allocation2 + $0x82] sm:$0xff]
        %v1286 = vld [vmem:[#allocation2 + $0x92] sm:$0xff]
        %v1287 = vld [vmem:[#allocation2 + $0x9a] sm:$0xff]
        %v1288 = vld [vmem:[#allocation2 + $0xaa] sm:$0xff]
        %v1289 = vld [vmem:[#allocation2 + $0xb2] sm:$0xff]
        %v1290 = vpack.c.bf16 %v1275, %v1274
        %v1291 = vpack.c.bf16 %v1277, %v1276
        %v1292 = vpack.c.bf16 %v1279, %v1278
        %v1293 = vpack.c.bf16 %v1281, %v1280
        %v1294 = vpack.c.bf16 %v1283, %v1282
        %v1295 = vpack.c.bf16 %v1285, %v1284
        %v1296 = vpack.c.bf16 %v1287, %v1286
        %v1297 = vpack.c.bf16 %v1289, %v1288
        %s1298 = scalar_lea.vmem [#allocation8], 128
        %v1299 = vld [vmem:[%s1298] sm:$0xf]
        %v1300 = vld [vmem:[%s1298 + $0x4] sm:$0xf]
        %v1301 = vld [vmem:[%s1298 + $0x8] sm:$0xf]
        %v1302 = vld [vmem:[%s1298 + $0xc] sm:$0xf]
        %v1303 = vld [vmem:[%s1298 + $0x10] sm:$0xf]
        %v1304 = vld [vmem:[%s1298 + $0x14] sm:$0xf]
        %v1305 = vld [vmem:[%s1298 + $0x18] sm:$0xf]
        %v1306 = vld [vmem:[%s1298 + $0x1c] sm:$0xf]
        %v1307 = vld [vmem:[%s1298 + $0x20] sm:$0xf]
        %v1308 = vld [vmem:[%s1298 + $0x24] sm:$0xf]
        %v1309 = vld [vmem:[%s1298 + $0x28] sm:$0xf]
        %v1310 = vld [vmem:[%s1298 + $0x2c] sm:$0xf]
        %v1311 = vld [vmem:[%s1298 + $0x30] sm:$0xf]
        %v1312 = vld [vmem:[%s1298 + $0x34] sm:$0xf]
        %v1313 = vld [vmem:[%s1298 + $0x38] sm:$0xf]
        %v1314 = vld [vmem:[%s1298 + $0x3c] sm:$0xf]
        %v1331 = vunpack.c.l.b16 %v1299
        %v1332 = vunpack.c.l.b16 %v1300
        %v1333 = vunpack.c.l.b16 %v1301
        %v1334 = vunpack.c.l.b16 %v1302
        %v1335 = vunpack.c.l.b16 %v1303
        %v1336 = vunpack.c.l.b16 %v1304
        %v1337 = vunpack.c.l.b16 %v1305
        %v1338 = vunpack.c.l.b16 %v1306
        %v1339 = vunpack.c.l.b16 %v1307
        %v1340 = vunpack.c.l.b16 %v1308
        %v1341 = vunpack.c.l.b16 %v1309
        %v1342 = vunpack.c.l.b16 %v1310
        %v1343 = vunpack.c.l.b16 %v1311
        %v1344 = vunpack.c.l.b16 %v1312
        %v1345 = vunpack.c.l.b16 %v1313
        %v1346 = vunpack.c.l.b16 %v1314
        %v1347 = vpack.c.b16 %v1332, %v1331
        %v1348 = vpack.c.b16 %v1334, %v1333
        %v1349 = vpack.c.b16 %v1336, %v1335
        %v1350 = vpack.c.b16 %v1338, %v1337
        %v1351 = vpack.c.b16 %v1340, %v1339
        %v1352 = vpack.c.b16 %v1342, %v1341
        %v1353 = vpack.c.b16 %v1344, %v1343
        %v1354 = vpack.c.b16 %v1346, %v1345
        %1363 = vmatpush.bf16.msra.mxu0 %v1354
        %1364 = vmatpush.bf16.msra.mxu0 %v1353
        %1365 = vmatpush.bf16.msra.mxu0 %v1352
        %1366 = vmatpush.bf16.msra.mxu0 %v1351
        %1367 = vmatpush.bf16.msra.mxu0 %v1350
        %1368 = vmatpush.bf16.msra.mxu0 %v1349
        %1369 = vmatpush.bf16.msra.mxu0 %v1348
        %1370 = vmatpush.bf16.msra.mxu0 %v1347
        %1371 = vmatmul.bf16.gmra.mxu0 %v1290
        %v1372 = vpop.f32.mrf.mxu0
        %v1373 = vadd.f32 0.0, %v1372
        %v1374 = vpop.f32.mrf.mxu0
        %v1375 = vadd.f32 0.0, %v1374
        %1376 = vmatmul.bf16.gmra.mxu0 %v1291
        %v1377 = vpop.f32.mrf.mxu0
        %v1378 = vadd.f32 0.0, %v1377
        %v1379 = vpop.f32.mrf.mxu0
        %v1380 = vadd.f32 0.0, %v1379
        %1381 = vmatmul.bf16.gmra.mxu0 %v1292
        %v1382 = vpop.f32.mrf.mxu0
        %v1383 = vadd.f32 0.0, %v1382
        %v1384 = vpop.f32.mrf.mxu0
        %v1385 = vadd.f32 0.0, %v1384
        %1386 = vmatmul.bf16.gmra.mxu0 %v1293
        %v1387 = vpop.f32.mrf.mxu0
        %v1388 = vadd.f32 0.0, %v1387
        %v1389 = vpop.f32.mrf.mxu0
        %v1390 = vadd.f32 0.0, %v1389
        %1391 = vmatmul.bf16.gmra.mxu0 %v1294
        %v1392 = vpop.f32.mrf.mxu0
        %v1393 = vadd.f32 0.0, %v1392
        %v1394 = vpop.f32.mrf.mxu0
        %v1395 = vadd.f32 0.0, %v1394
        %1396 = vmatmul.bf16.gmra.mxu0 %v1295
        %v1397 = vpop.f32.mrf.mxu0
        %v1398 = vadd.f32 0.0, %v1397
        %v1399 = vpop.f32.mrf.mxu0
        %v1400 = vadd.f32 0.0, %v1399
        %1401 = vmatmul.bf16.gmra.mxu0 %v1296
        %v1402 = vpop.f32.mrf.mxu0
        %v1403 = vadd.f32 0.0, %v1402
        %v1404 = vpop.f32.mrf.mxu0
        %v1405 = vadd.f32 0.0, %v1404
        %1406 = vmatmul.bf16.gmra.mxu0 %v1297
        %v1407 = vpop.f32.mrf.mxu0
        %v1408 = vadd.f32 0.0, %v1407
        %v1409 = vpop.f32.mrf.mxu0
        %v1410 = vadd.f32 0.0, %v1409
        %1411 = vdwg.mxu0
        %v1412 = vadd.f32 %v1235, %v1373
        %v1413 = vadd.f32 %v1237, %v1375
        %v1414 = vadd.f32 %v1240, %v1378
        %v1415 = vadd.f32 %v1242, %v1380
        %v1416 = vadd.f32 %v1245, %v1383
        %v1417 = vadd.f32 %v1247, %v1385
        %v1418 = vadd.f32 %v1250, %v1388
        %v1419 = vadd.f32 %v1252, %v1390
        %v1420 = vadd.f32 %v1255, %v1393
        %v1421 = vadd.f32 %v1257, %v1395
        %v1422 = vadd.f32 %v1260, %v1398
        %v1423 = vadd.f32 %v1262, %v1400
        %v1424 = vadd.f32 %v1265, %v1403
        %v1425 = vadd.f32 %v1267, %v1405
        %v1426 = vadd.f32 %v1270, %v1408
        %v1427 = vadd.f32 %v1272, %v1410
        %v1428 = vld [vmem:[%s738] sm:$0xff]
        %v1429 = vld [vmem:[%s738 + $0x8] sm:$0xff]
        %v1430 = vld [vmem:[%s738 + $0x18] sm:$0xff]
        %v1431 = vld [vmem:[%s738 + $0x20] sm:$0xff]
        %v1432 = vld [vmem:[%s738 + $0x30] sm:$0xff]
        %v1433 = vld [vmem:[%s738 + $0x38] sm:$0xff]
        %v1434 = vld [vmem:[%s738 + $0x48] sm:$0xff]
        %v1435 = vld [vmem:[%s738 + $0x50] sm:$0xff]
        %v1436 = vld [vmem:[%s738 + $0x60] sm:$0xff]
        %v1437 = vld [vmem:[%s738 + $0x68] sm:$0xff]
        %v1438 = vld [vmem:[%s738 + $0x78] sm:$0xff]
        %v1439 = vld [vmem:[%s738 + $0x80] sm:$0xff]
        %v1440 = vld [vmem:[%s738 + $0x90] sm:$0xff]
        %v1441 = vld [vmem:[%s738 + $0x98] sm:$0xff]
        %v1442 = vld [vmem:[%s738 + $0xa8] sm:$0xff]
        %v1443 = vld [vmem:[%s738 + $0xb0] sm:$0xff]
        %v1444 = vpack.c.bf16 %v1429, %v1428
        %v1445 = vpack.c.bf16 %v1431, %v1430
        %v1446 = vpack.c.bf16 %v1433, %v1432
        %v1447 = vpack.c.bf16 %v1435, %v1434
        %v1448 = vpack.c.bf16 %v1437, %v1436
        %v1449 = vpack.c.bf16 %v1439, %v1438
        %v1450 = vpack.c.bf16 %v1441, %v1440
        %v1451 = vpack.c.bf16 %v1443, %v1442
        %s1452 = scalar_lea.vmem [#allocation8], 192
        %v1453 = vld [vmem:[%s1452] sm:$0xf]
        %v1454 = vld [vmem:[%s1452 + $0x4] sm:$0xf]
        %v1455 = vld [vmem:[%s1452 + $0x8] sm:$0xf]
        %v1456 = vld [vmem:[%s1452 + $0xc] sm:$0xf]
        %v1457 = vld [vmem:[%s1452 + $0x10] sm:$0xf]
        %v1458 = vld [vmem:[%s1452 + $0x14] sm:$0xf]
        %v1459 = vld [vmem:[%s1452 + $0x18] sm:$0xf]
        %v1460 = vld [vmem:[%s1452 + $0x1c] sm:$0xf]
        %v1461 = vld [vmem:[%s1452 + $0x20] sm:$0xf]
        %v1462 = vld [vmem:[%s1452 + $0x24] sm:$0xf]
        %v1463 = vld [vmem:[%s1452 + $0x28] sm:$0xf]
        %v1464 = vld [vmem:[%s1452 + $0x2c] sm:$0xf]
        %v1465 = vld [vmem:[%s1452 + $0x30] sm:$0xf]
        %v1466 = vld [vmem:[%s1452 + $0x34] sm:$0xf]
        %v1467 = vld [vmem:[%s1452 + $0x38] sm:$0xf]
        %v1468 = vld [vmem:[%s1452 + $0x3c] sm:$0xf]
        %v1485 = vunpack.c.l.b16 %v1453
        %v1486 = vunpack.c.l.b16 %v1454
        %v1487 = vunpack.c.l.b16 %v1455
        %v1488 = vunpack.c.l.b16 %v1456
        %v1489 = vunpack.c.l.b16 %v1457
        %v1490 = vunpack.c.l.b16 %v1458
        %v1491 = vunpack.c.l.b16 %v1459
        %v1492 = vunpack.c.l.b16 %v1460
        %v1493 = vunpack.c.l.b16 %v1461
        %v1494 = vunpack.c.l.b16 %v1462
        %v1495 = vunpack.c.l.b16 %v1463
        %v1496 = vunpack.c.l.b16 %v1464
        %v1497 = vunpack.c.l.b16 %v1465
        %v1498 = vunpack.c.l.b16 %v1466
        %v1499 = vunpack.c.l.b16 %v1467
        %v1500 = vunpack.c.l.b16 %v1468
        %v1501 = vpack.c.b16 %v1486, %v1485
        %v1502 = vpack.c.b16 %v1488, %v1487
        %v1503 = vpack.c.b16 %v1490, %v1489
        %v1504 = vpack.c.b16 %v1492, %v1491
        %v1505 = vpack.c.b16 %v1494, %v1493
        %v1506 = vpack.c.b16 %v1496, %v1495
        %v1507 = vpack.c.b16 %v1498, %v1497
        %v1508 = vpack.c.b16 %v1500, %v1499
        %1517 = vmatpush.bf16.msra.mxu0 %v1508
        %1518 = vmatpush.bf16.msra.mxu0 %v1507
        %1519 = vmatpush.bf16.msra.mxu0 %v1506
        %1520 = vmatpush.bf16.msra.mxu0 %v1505
        %1521 = vmatpush.bf16.msra.mxu0 %v1504
        %1522 = vmatpush.bf16.msra.mxu0 %v1503
        %1523 = vmatpush.bf16.msra.mxu0 %v1502
        %1524 = vmatpush.bf16.msra.mxu0 %v1501
        %1525 = vmatmul.bf16.gmra.mxu0 %v1444
        %v1526 = vpop.f32.mrf.mxu0
        %v1527 = vadd.f32 0.0, %v1526
        %v1528 = vpop.f32.mrf.mxu0
        %v1529 = vadd.f32 0.0, %v1528
        %1530 = vmatmul.bf16.gmra.mxu0 %v1445
        %v1531 = vpop.f32.mrf.mxu0
        %v1532 = vadd.f32 0.0, %v1531
        %v1533 = vpop.f32.mrf.mxu0
        %v1534 = vadd.f32 0.0, %v1533
        %1535 = vmatmul.bf16.gmra.mxu0 %v1446
        %v1536 = vpop.f32.mrf.mxu0
        %v1537 = vadd.f32 0.0, %v1536
        %v1538 = vpop.f32.mrf.mxu0
        %v1539 = vadd.f32 0.0, %v1538
        %1540 = vmatmul.bf16.gmra.mxu0 %v1447
        %v1541 = vpop.f32.mrf.mxu0
        %v1542 = vadd.f32 0.0, %v1541
        %v1543 = vpop.f32.mrf.mxu0
        %v1544 = vadd.f32 0.0, %v1543
        %1545 = vmatmul.bf16.gmra.mxu0 %v1448
        %v1546 = vpop.f32.mrf.mxu0
        %v1547 = vadd.f32 0.0, %v1546
        %v1548 = vpop.f32.mrf.mxu0
        %v1549 = vadd.f32 0.0, %v1548
        %1550 = vmatmul.bf16.gmra.mxu0 %v1449
        %v1551 = vpop.f32.mrf.mxu0
        %v1552 = vadd.f32 0.0, %v1551
        %v1553 = vpop.f32.mrf.mxu0
        %v1554 = vadd.f32 0.0, %v1553
        %1555 = vmatmul.bf16.gmra.mxu0 %v1450
        %v1556 = vpop.f32.mrf.mxu0
        %v1557 = vadd.f32 0.0, %v1556
        %v1558 = vpop.f32.mrf.mxu0
        %v1559 = vadd.f32 0.0, %v1558
        %1560 = vmatmul.bf16.gmra.mxu0 %v1451
        %v1561 = vpop.f32.mrf.mxu0
        %v1562 = vadd.f32 0.0, %v1561
        %v1563 = vpop.f32.mrf.mxu0
        %v1564 = vadd.f32 0.0, %v1563
        %1565 = vdwg.mxu0
        %v1566 = vadd.f32 %v1412, %v1527
        %v1567 = vadd.f32 %v1413, %v1529
        %v1568 = vadd.f32 %v1414, %v1532
        %v1569 = vadd.f32 %v1415, %v1534
        %v1570 = vadd.f32 %v1416, %v1537
        %v1571 = vadd.f32 %v1417, %v1539
        %v1572 = vadd.f32 %v1418, %v1542
        %v1573 = vadd.f32 %v1419, %v1544
        %v1574 = vadd.f32 %v1420, %v1547
        %v1575 = vadd.f32 %v1421, %v1549
        %v1576 = vadd.f32 %v1422, %v1552
        %v1577 = vadd.f32 %v1423, %v1554
        %v1578 = vadd.f32 %v1424, %v1557
        %v1579 = vadd.f32 %v1425, %v1559
        %v1580 = vadd.f32 %v1426, %v1562
        %v1581 = vadd.f32 %v1427, %v1564
        %v1582 = vld [vmem:[%s738 + $0x1] sm:$0xff]
        %v1583 = vld [vmem:[%s738 + $0x9] sm:$0xff]
        %v1584 = vld [vmem:[%s738 + $0x19] sm:$0xff]
        %v1585 = vld [vmem:[%s738 + $0x21] sm:$0xff]
        %v1586 = vld [vmem:[%s738 + $0x31] sm:$0xff]
        %v1587 = vld [vmem:[%s738 + $0x39] sm:$0xff]
        %v1588 = vld [vmem:[%s738 + $0x49] sm:$0xff]
        %v1589 = vld [vmem:[%s738 + $0x51] sm:$0xff]
        %v1590 = vld [vmem:[%s738 + $0x61] sm:$0xff]
        %v1591 = vld [vmem:[%s738 + $0x69] sm:$0xff]
        %v1592 = vld [vmem:[%s738 + $0x79] sm:$0xff]
        %v1593 = vld [vmem:[%s738 + $0x81] sm:$0xff]
        %v1594 = vld [vmem:[%s738 + $0x91] sm:$0xff]
        %v1595 = vld [vmem:[%s738 + $0x99] sm:$0xff]
        %v1596 = vld [vmem:[%s738 + $0xa9] sm:$0xff]
        %v1597 = vld [vmem:[%s738 + $0xb1] sm:$0xff]
        %v1598 = vpack.c.bf16 %v1583, %v1582
        %v1599 = vpack.c.bf16 %v1585, %v1584
        %v1600 = vpack.c.bf16 %v1587, %v1586
        %v1601 = vpack.c.bf16 %v1589, %v1588
        %v1602 = vpack.c.bf16 %v1591, %v1590
        %v1603 = vpack.c.bf16 %v1593, %v1592
        %v1604 = vpack.c.bf16 %v1595, %v1594
        %v1605 = vpack.c.bf16 %v1597, %v1596
        %s1606 = scalar_lea.vmem [#allocation8], 256
        %v1607 = vld [vmem:[%s1606] sm:$0xf]
        %v1608 = vld [vmem:[%s1606 + $0x4] sm:$0xf]
        %v1609 = vld [vmem:[%s1606 + $0x8] sm:$0xf]
        %v1610 = vld [vmem:[%s1606 + $0xc] sm:$0xf]
        %v1611 = vld [vmem:[%s1606 + $0x10] sm:$0xf]
        %v1612 = vld [vmem:[%s1606 + $0x14] sm:$0xf]
        %v1613 = vld [vmem:[%s1606 + $0x18] sm:$0xf]
        %v1614 = vld [vmem:[%s1606 + $0x1c] sm:$0xf]
        %v1615 = vld [vmem:[%s1606 + $0x20] sm:$0xf]
        %v1616 = vld [vmem:[%s1606 + $0x24] sm:$0xf]
        %v1617 = vld [vmem:[%s1606 + $0x28] sm:$0xf]
        %v1618 = vld [vmem:[%s1606 + $0x2c] sm:$0xf]
        %v1619 = vld [vmem:[%s1606 + $0x30] sm:$0xf]
        %v1620 = vld [vmem:[%s1606 + $0x34] sm:$0xf]
        %v1621 = vld [vmem:[%s1606 + $0x38] sm:$0xf]
        %v1622 = vld [vmem:[%s1606 + $0x3c] sm:$0xf]
        %v1639 = vunpack.c.l.b16 %v1607
        %v1640 = vunpack.c.l.b16 %v1608
        %v1641 = vunpack.c.l.b16 %v1609
        %v1642 = vunpack.c.l.b16 %v1610
        %v1643 = vunpack.c.l.b16 %v1611
        %v1644 = vunpack.c.l.b16 %v1612
        %v1645 = vunpack.c.l.b16 %v1613
        %v1646 = vunpack.c.l.b16 %v1614
        %v1647 = vunpack.c.l.b16 %v1615
        %v1648 = vunpack.c.l.b16 %v1616
        %v1649 = vunpack.c.l.b16 %v1617
        %v1650 = vunpack.c.l.b16 %v1618
        %v1651 = vunpack.c.l.b16 %v1619
        %v1652 = vunpack.c.l.b16 %v1620
        %v1653 = vunpack.c.l.b16 %v1621
        %v1654 = vunpack.c.l.b16 %v1622
        %v1655 = vpack.c.b16 %v1640, %v1639
        %v1656 = vpack.c.b16 %v1642, %v1641
        %v1657 = vpack.c.b16 %v1644, %v1643
        %v1658 = vpack.c.b16 %v1646, %v1645
        %v1659 = vpack.c.b16 %v1648, %v1647
        %v1660 = vpack.c.b16 %v1650, %v1649
        %v1661 = vpack.c.b16 %v1652, %v1651
        %v1662 = vpack.c.b16 %v1654, %v1653
        %1671 = vmatpush.bf16.msra.mxu0 %v1662
        %1672 = vmatpush.bf16.msra.mxu0 %v1661
        %1673 = vmatpush.bf16.msra.mxu0 %v1660
        %1674 = vmatpush.bf16.msra.mxu0 %v1659
        %1675 = vmatpush.bf16.msra.mxu0 %v1658
        %1676 = vmatpush.bf16.msra.mxu0 %v1657
        %1677 = vmatpush.bf16.msra.mxu0 %v1656
        %1678 = vmatpush.bf16.msra.mxu0 %v1655
        %1679 = vmatmul.bf16.gmra.mxu0 %v1598
        %v1680 = vpop.f32.mrf.mxu0
        %v1681 = vadd.f32 0.0, %v1680
        %v1682 = vpop.f32.mrf.mxu0
        %v1683 = vadd.f32 0.0, %v1682
        %1684 = vmatmul.bf16.gmra.mxu0 %v1599
        %v1685 = vpop.f32.mrf.mxu0
        %v1686 = vadd.f32 0.0, %v1685
        %v1687 = vpop.f32.mrf.mxu0
        %v1688 = vadd.f32 0.0, %v1687
        %1689 = vmatmul.bf16.gmra.mxu0 %v1600
        %v1690 = vpop.f32.mrf.mxu0
        %v1691 = vadd.f32 0.0, %v1690
        %v1692 = vpop.f32.mrf.mxu0
        %v1693 = vadd.f32 0.0, %v1692
        %1694 = vmatmul.bf16.gmra.mxu0 %v1601
        %v1695 = vpop.f32.mrf.mxu0
        %v1696 = vadd.f32 0.0, %v1695
        %v1697 = vpop.f32.mrf.mxu0
        %v1698 = vadd.f32 0.0, %v1697
        %1699 = vmatmul.bf16.gmra.mxu0 %v1602
        %v1700 = vpop.f32.mrf.mxu0
        %v1701 = vadd.f32 0.0, %v1700
        %v1702 = vpop.f32.mrf.mxu0
        %v1703 = vadd.f32 0.0, %v1702
        %1704 = vmatmul.bf16.gmra.mxu0 %v1603
        %v1705 = vpop.f32.mrf.mxu0
        %v1706 = vadd.f32 0.0, %v1705
        %v1707 = vpop.f32.mrf.mxu0
        %v1708 = vadd.f32 0.0, %v1707
        %1709 = vmatmul.bf16.gmra.mxu0 %v1604
        %v1710 = vpop.f32.mrf.mxu0
        %v1711 = vadd.f32 0.0, %v1710
        %v1712 = vpop.f32.mrf.mxu0
        %v1713 = vadd.f32 0.0, %v1712
        %1714 = vmatmul.bf16.gmra.mxu0 %v1605
        %v1715 = vpop.f32.mrf.mxu0
        %v1716 = vadd.f32 0.0, %v1715
        %v1717 = vpop.f32.mrf.mxu0
        %v1718 = vadd.f32 0.0, %v1717
        %1719 = vdwg.mxu0
        %v1720 = vadd.f32 %v1566, %v1681
        %v1721 = vadd.f32 %v1567, %v1683
        %v1722 = vadd.f32 %v1568, %v1686
        %v1723 = vadd.f32 %v1569, %v1688
        %v1724 = vadd.f32 %v1570, %v1691
        %v1725 = vadd.f32 %v1571, %v1693
        %v1726 = vadd.f32 %v1572, %v1696
        %v1727 = vadd.f32 %v1573, %v1698
        %v1728 = vadd.f32 %v1574, %v1701
        %v1729 = vadd.f32 %v1575, %v1703
        %v1730 = vadd.f32 %v1576, %v1706
        %v1731 = vadd.f32 %v1577, %v1708
        %v1732 = vadd.f32 %v1578, %v1711
        %v1733 = vadd.f32 %v1579, %v1713
        %v1734 = vadd.f32 %v1580, %v1716
        %v1735 = vadd.f32 %v1581, %v1718
        %v1736 = vld [vmem:[%s738 + $0x2] sm:$0xff]
        %v1737 = vld [vmem:[%s738 + $0xa] sm:$0xff]
        %v1738 = vld [vmem:[%s738 + $0x1a] sm:$0xff]
        %v1739 = vld [vmem:[%s738 + $0x22] sm:$0xff]
        %v1740 = vld [vmem:[%s738 + $0x32] sm:$0xff]
        %v1741 = vld [vmem:[%s738 + $0x3a] sm:$0xff]
        %v1742 = vld [vmem:[%s738 + $0x4a] sm:$0xff]
        %v1743 = vld [vmem:[%s738 + $0x52] sm:$0xff]
        %v1744 = vld [vmem:[%s738 + $0x62] sm:$0xff]
        %v1745 = vld [vmem:[%s738 + $0x6a] sm:$0xff]
        %v1746 = vld [vmem:[%s738 + $0x7a] sm:$0xff]
        %v1747 = vld [vmem:[%s738 + $0x82] sm:$0xff]
        %v1748 = vld [vmem:[%s738 + $0x92] sm:$0xff]
        %v1749 = vld [vmem:[%s738 + $0x9a] sm:$0xff]
        %v1750 = vld [vmem:[%s738 + $0xaa] sm:$0xff]
        %v1751 = vld [vmem:[%s738 + $0xb2] sm:$0xff]
        %v1752 = vpack.c.bf16 %v1737, %v1736
        %v1753 = vpack.c.bf16 %v1739, %v1738
        %v1754 = vpack.c.bf16 %v1741, %v1740
        %v1755 = vpack.c.bf16 %v1743, %v1742
        %v1756 = vpack.c.bf16 %v1745, %v1744
        %v1757 = vpack.c.bf16 %v1747, %v1746
        %v1758 = vpack.c.bf16 %v1749, %v1748
        %v1759 = vpack.c.bf16 %v1751, %v1750
        %s1760 = scalar_lea.vmem [#allocation8], 320
        %v1761 = vld [vmem:[%s1760] sm:$0xf]
        %v1762 = vld [vmem:[%s1760 + $0x4] sm:$0xf]
        %v1763 = vld [vmem:[%s1760 + $0x8] sm:$0xf]
        %v1764 = vld [vmem:[%s1760 + $0xc] sm:$0xf]
        %v1765 = vld [vmem:[%s1760 + $0x10] sm:$0xf]
        %v1766 = vld [vmem:[%s1760 + $0x14] sm:$0xf]
        %v1767 = vld [vmem:[%s1760 + $0x18] sm:$0xf]
        %v1768 = vld [vmem:[%s1760 + $0x1c] sm:$0xf]
        %v1769 = vld [vmem:[%s1760 + $0x20] sm:$0xf]
        %v1770 = vld [vmem:[%s1760 + $0x24] sm:$0xf]
        %v1771 = vld [vmem:[%s1760 + $0x28] sm:$0xf]
        %v1772 = vld [vmem:[%s1760 + $0x2c] sm:$0xf]
        %v1773 = vld [vmem:[%s1760 + $0x30] sm:$0xf]
        %v1774 = vld [vmem:[%s1760 + $0x34] sm:$0xf]
        %v1775 = vld [vmem:[%s1760 + $0x38] sm:$0xf]
        %v1776 = vld [vmem:[%s1760 + $0x3c] sm:$0xf]
        %v1793 = vunpack.c.l.b16 %v1761
        %v1794 = vunpack.c.l.b16 %v1762
        %v1795 = vunpack.c.l.b16 %v1763
        %v1796 = vunpack.c.l.b16 %v1764
        %v1797 = vunpack.c.l.b16 %v1765
        %v1798 = vunpack.c.l.b16 %v1766
        %v1799 = vunpack.c.l.b16 %v1767
        %v1800 = vunpack.c.l.b16 %v1768
        %v1801 = vunpack.c.l.b16 %v1769
        %v1802 = vunpack.c.l.b16 %v1770
        %v1803 = vunpack.c.l.b16 %v1771
        %v1804 = vunpack.c.l.b16 %v1772
        %v1805 = vunpack.c.l.b16 %v1773
        %v1806 = vunpack.c.l.b16 %v1774
        %v1807 = vunpack.c.l.b16 %v1775
        %v1808 = vunpack.c.l.b16 %v1776
        %v1809 = vpack.c.b16 %v1794, %v1793
        %v1810 = vpack.c.b16 %v1796, %v1795
        %v1811 = vpack.c.b16 %v1798, %v1797
        %v1812 = vpack.c.b16 %v1800, %v1799
        %v1813 = vpack.c.b16 %v1802, %v1801
        %v1814 = vpack.c.b16 %v1804, %v1803
        %v1815 = vpack.c.b16 %v1806, %v1805
        %v1816 = vpack.c.b16 %v1808, %v1807
        %1825 = vmatpush.bf16.msra.mxu0 %v1816
        %1826 = vmatpush.bf16.msra.mxu0 %v1815
        %1827 = vmatpush.bf16.msra.mxu0 %v1814
        %1828 = vmatpush.bf16.msra.mxu0 %v1813
        %1829 = vmatpush.bf16.msra.mxu0 %v1812
        %1830 = vmatpush.bf16.msra.mxu0 %v1811
        %1831 = vmatpush.bf16.msra.mxu0 %v1810
        %1832 = vmatpush.bf16.msra.mxu0 %v1809
        %1833 = vmatmul.bf16.gmra.mxu0 %v1752
        %v1834 = vpop.f32.mrf.mxu0
        %v1835 = vadd.f32 0.0, %v1834
        %v1836 = vpop.f32.mrf.mxu0
        %v1837 = vadd.f32 0.0, %v1836
        %1838 = vmatmul.bf16.gmra.mxu0 %v1753
        %v1839 = vpop.f32.mrf.mxu0
        %v1840 = vadd.f32 0.0, %v1839
        %v1841 = vpop.f32.mrf.mxu0
        %v1842 = vadd.f32 0.0, %v1841
        %1843 = vmatmul.bf16.gmra.mxu0 %v1754
        %v1844 = vpop.f32.mrf.mxu0
        %v1845 = vadd.f32 0.0, %v1844
        %v1846 = vpop.f32.mrf.mxu0
        %v1847 = vadd.f32 0.0, %v1846
        %1848 = vmatmul.bf16.gmra.mxu0 %v1755
        %v1849 = vpop.f32.mrf.mxu0
        %v1850 = vadd.f32 0.0, %v1849
        %v1851 = vpop.f32.mrf.mxu0
        %v1852 = vadd.f32 0.0, %v1851
        %1853 = vmatmul.bf16.gmra.mxu0 %v1756
        %v1854 = vpop.f32.mrf.mxu0
        %v1855 = vadd.f32 0.0, %v1854
        %v1856 = vpop.f32.mrf.mxu0
        %v1857 = vadd.f32 0.0, %v1856
        %1858 = vmatmul.bf16.gmra.mxu0 %v1757
        %v1859 = vpop.f32.mrf.mxu0
        %v1860 = vadd.f32 0.0, %v1859
        %v1861 = vpop.f32.mrf.mxu0
        %v1862 = vadd.f32 0.0, %v1861
        %1863 = vmatmul.bf16.gmra.mxu0 %v1758
        %v1864 = vpop.f32.mrf.mxu0
        %v1865 = vadd.f32 0.0, %v1864
        %v1866 = vpop.f32.mrf.mxu0
        %v1867 = vadd.f32 0.0, %v1866
        %1868 = vmatmul.bf16.gmra.mxu0 %v1759
        %v1869 = vpop.f32.mrf.mxu0
        %v1870 = vadd.f32 0.0, %v1869
        %v1871 = vpop.f32.mrf.mxu0
        %v1872 = vadd.f32 0.0, %v1871
        %1873 = vdwg.mxu0
        %v1874 = vadd.f32 %v1720, %v1835
        %v1875 = vadd.f32 %v1721, %v1837
        %v1876 = vadd.f32 %v1722, %v1840
        %v1877 = vadd.f32 %v1723, %v1842
        %v1878 = vadd.f32 %v1724, %v1845
        %v1879 = vadd.f32 %v1725, %v1847
        %v1880 = vadd.f32 %v1726, %v1850
        %v1881 = vadd.f32 %v1727, %v1852
        %v1882 = vadd.f32 %v1728, %v1855
        %v1883 = vadd.f32 %v1729, %v1857
        %v1884 = vadd.f32 %v1730, %v1860
        %v1885 = vadd.f32 %v1731, %v1862
        %v1886 = vadd.f32 %v1732, %v1865
        %v1887 = vadd.f32 %v1733, %v1867
        %v1888 = vadd.f32 %v1734, %v1870
        %v1889 = vadd.f32 %v1735, %v1872
        %s1890 = scalar_lea.vmem [#allocation2], 48
        %v1891 = vld [vmem:[%s1890] sm:$0xff]
        %v1892 = vld [vmem:[%s1890 + $0x8] sm:$0xff]
        %v1893 = vld [vmem:[%s1890 + $0x18] sm:$0xff]
        %v1894 = vld [vmem:[%s1890 + $0x20] sm:$0xff]
        %v1895 = vld [vmem:[%s1890 + $0x30] sm:$0xff]
        %v1896 = vld [vmem:[%s1890 + $0x38] sm:$0xff]
        %v1897 = vld [vmem:[%s1890 + $0x48] sm:$0xff]
        %v1898 = vld [vmem:[%s1890 + $0x50] sm:$0xff]
        %v1899 = vld [vmem:[%s1890 + $0x60] sm:$0xff]
        %v1900 = vld [vmem:[%s1890 + $0x68] sm:$0xff]
        %v1901 = vld [vmem:[%s1890 + $0x78] sm:$0xff]
        %v1902 = vld [vmem:[%s1890 + $0x80] sm:$0xff]
        %v1903 = vld [vmem:[%s1890 + $0x90] sm:$0xff]
        %v1904 = vld [vmem:[%s1890 + $0x98] sm:$0xff]
        %v1905 = vld [vmem:[%s1890 + $0xa8] sm:$0xff]
        %v1906 = vld [vmem:[%s1890 + $0xb0] sm:$0xff]
        %v1907 = vpack.c.bf16 %v1892, %v1891
        %v1908 = vpack.c.bf16 %v1894, %v1893
        %v1909 = vpack.c.bf16 %v1896, %v1895
        %v1910 = vpack.c.bf16 %v1898, %v1897
        %v1911 = vpack.c.bf16 %v1900, %v1899
        %v1912 = vpack.c.bf16 %v1902, %v1901
        %v1913 = vpack.c.bf16 %v1904, %v1903
        %v1914 = vpack.c.bf16 %v1906, %v1905
        %s1915 = scalar_lea.vmem [#allocation8], 384
        %v1916 = vld [vmem:[%s1915] sm:$0xf]
        %v1917 = vld [vmem:[%s1915 + $0x4] sm:$0xf]
        %v1918 = vld [vmem:[%s1915 + $0x8] sm:$0xf]
        %v1919 = vld [vmem:[%s1915 + $0xc] sm:$0xf]
        %v1920 = vld [vmem:[%s1915 + $0x10] sm:$0xf]
        %v1921 = vld [vmem:[%s1915 + $0x14] sm:$0xf]
        %v1922 = vld [vmem:[%s1915 + $0x18] sm:$0xf]
        %v1923 = vld [vmem:[%s1915 + $0x1c] sm:$0xf]
        %v1924 = vld [vmem:[%s1915 + $0x20] sm:$0xf]
        %v1925 = vld [vmem:[%s1915 + $0x24] sm:$0xf]
        %v1926 = vld [vmem:[%s1915 + $0x28] sm:$0xf]
        %v1927 = vld [vmem:[%s1915 + $0x2c] sm:$0xf]
        %v1928 = vld [vmem:[%s1915 + $0x30] sm:$0xf]
        %v1929 = vld [vmem:[%s1915 + $0x34] sm:$0xf]
        %v1930 = vld [vmem:[%s1915 + $0x38] sm:$0xf]
        %v1931 = vld [vmem:[%s1915 + $0x3c] sm:$0xf]
        %v1948 = vunpack.c.l.b16 %v1916
        %v1949 = vunpack.c.l.b16 %v1917
        %v1950 = vunpack.c.l.b16 %v1918
        %v1951 = vunpack.c.l.b16 %v1919
        %v1952 = vunpack.c.l.b16 %v1920
        %v1953 = vunpack.c.l.b16 %v1921
        %v1954 = vunpack.c.l.b16 %v1922
        %v1955 = vunpack.c.l.b16 %v1923
        %v1956 = vunpack.c.l.b16 %v1924
        %v1957 = vunpack.c.l.b16 %v1925
        %v1958 = vunpack.c.l.b16 %v1926
        %v1959 = vunpack.c.l.b16 %v1927
        %v1960 = vunpack.c.l.b16 %v1928
        %v1961 = vunpack.c.l.b16 %v1929
        %v1962 = vunpack.c.l.b16 %v1930
        %v1963 = vunpack.c.l.b16 %v1931
        %v1964 = vpack.c.b16 %v1949, %v1948
        %v1965 = vpack.c.b16 %v1951, %v1950
        %v1966 = vpack.c.b16 %v1953, %v1952
        %v1967 = vpack.c.b16 %v1955, %v1954
        %v1968 = vpack.c.b16 %v1957, %v1956
        %v1969 = vpack.c.b16 %v1959, %v1958
        %v1970 = vpack.c.b16 %v1961, %v1960
        %v1971 = vpack.c.b16 %v1963, %v1962
        %1980 = vmatpush.bf16.msra.mxu0 %v1971
        %1981 = vmatpush.bf16.msra.mxu0 %v1970
        %1982 = vmatpush.bf16.msra.mxu0 %v1969
        %1983 = vmatpush.bf16.msra.mxu0 %v1968
        %1984 = vmatpush.bf16.msra.mxu0 %v1967
        %1985 = vmatpush.bf16.msra.mxu0 %v1966
        %1986 = vmatpush.bf16.msra.mxu0 %v1965
        %1987 = vmatpush.bf16.msra.mxu0 %v1964
        %1988 = vmatmul.bf16.gmra.mxu0 %v1907
        %v1989 = vpop.f32.mrf.mxu0
        %v1990 = vadd.f32 0.0, %v1989
        %v1991 = vpop.f32.mrf.mxu0
        %v1992 = vadd.f32 0.0, %v1991
        %1993 = vmatmul.bf16.gmra.mxu0 %v1908
        %v1994 = vpop.f32.mrf.mxu0
        %v1995 = vadd.f32 0.0, %v1994
        %v1996 = vpop.f32.mrf.mxu0
        %v1997 = vadd.f32 0.0, %v1996
        %1998 = vmatmul.bf16.gmra.mxu0 %v1909
        %v1999 = vpop.f32.mrf.mxu0
        %v2000 = vadd.f32 0.0, %v1999
        %v2001 = vpop.f32.mrf.mxu0
        %v2002 = vadd.f32 0.0, %v2001
        %2003 = vmatmul.bf16.gmra.mxu0 %v1910
        %v2004 = vpop.f32.mrf.mxu0
        %v2005 = vadd.f32 0.0, %v2004
        %v2006 = vpop.f32.mrf.mxu0
        %v2007 = vadd.f32 0.0, %v2006
        %2008 = vmatmul.bf16.gmra.mxu0 %v1911
        %v2009 = vpop.f32.mrf.mxu0
        %v2010 = vadd.f32 0.0, %v2009
        %v2011 = vpop.f32.mrf.mxu0
        %v2012 = vadd.f32 0.0, %v2011
        %2013 = vmatmul.bf16.gmra.mxu0 %v1912
        %v2014 = vpop.f32.mrf.mxu0
        %v2015 = vadd.f32 0.0, %v2014
        %v2016 = vpop.f32.mrf.mxu0
        %v2017 = vadd.f32 0.0, %v2016
        %2018 = vmatmul.bf16.gmra.mxu0 %v1913
        %v2019 = vpop.f32.mrf.mxu0
        %v2020 = vadd.f32 0.0, %v2019
        %v2021 = vpop.f32.mrf.mxu0
        %v2022 = vadd.f32 0.0, %v2021
        %2023 = vmatmul.bf16.gmra.mxu0 %v1914
        %v2024 = vpop.f32.mrf.mxu0
        %v2025 = vadd.f32 0.0, %v2024
        %v2026 = vpop.f32.mrf.mxu0
        %v2027 = vadd.f32 0.0, %v2026
        %2028 = vdwg.mxu0
        %v2029 = vadd.f32 %v1874, %v1990
        %v2030 = vadd.f32 %v1875, %v1992
        %v2031 = vadd.f32 %v1876, %v1995
        %v2032 = vadd.f32 %v1877, %v1997
        %v2033 = vadd.f32 %v1878, %v2000
        %v2034 = vadd.f32 %v1879, %v2002
        %v2035 = vadd.f32 %v1880, %v2005
        %v2036 = vadd.f32 %v1881, %v2007
        %v2037 = vadd.f32 %v1882, %v2010
        %v2038 = vadd.f32 %v1883, %v2012
        %v2039 = vadd.f32 %v1884, %v2015
        %v2040 = vadd.f32 %v1885, %v2017
        %v2041 = vadd.f32 %v1886, %v2020
        %v2042 = vadd.f32 %v1887, %v2022
        %v2043 = vadd.f32 %v1888, %v2025
        %v2044 = vadd.f32 %v1889, %v2027
        %v2045 = vld [vmem:[%s1890 + $0x1] sm:$0xff]
        %v2046 = vld [vmem:[%s1890 + $0x9] sm:$0xff]
        %v2047 = vld [vmem:[%s1890 + $0x19] sm:$0xff]
        %v2048 = vld [vmem:[%s1890 + $0x21] sm:$0xff]
        %v2049 = vld [vmem:[%s1890 + $0x31] sm:$0xff]
        %v2050 = vld [vmem:[%s1890 + $0x39] sm:$0xff]
        %v2051 = vld [vmem:[%s1890 + $0x49] sm:$0xff]
        %v2052 = vld [vmem:[%s1890 + $0x51] sm:$0xff]
        %v2053 = vld [vmem:[%s1890 + $0x61] sm:$0xff]
        %v2054 = vld [vmem:[%s1890 + $0x69] sm:$0xff]
        %v2055 = vld [vmem:[%s1890 + $0x79] sm:$0xff]
        %v2056 = vld [vmem:[%s1890 + $0x81] sm:$0xff]
        %v2057 = vld [vmem:[%s1890 + $0x91] sm:$0xff]
        %v2058 = vld [vmem:[%s1890 + $0x99] sm:$0xff]
        %v2059 = vld [vmem:[%s1890 + $0xa9] sm:$0xff]
        %v2060 = vld [vmem:[%s1890 + $0xb1] sm:$0xff]
        %v2061 = vpack.c.bf16 %v2046, %v2045
        %v2062 = vpack.c.bf16 %v2048, %v2047
        %v2063 = vpack.c.bf16 %v2050, %v2049
        %v2064 = vpack.c.bf16 %v2052, %v2051
        %v2065 = vpack.c.bf16 %v2054, %v2053
        %v2066 = vpack.c.bf16 %v2056, %v2055
        %v2067 = vpack.c.bf16 %v2058, %v2057
        %v2068 = vpack.c.bf16 %v2060, %v2059
        %s2069 = scalar_lea.vmem [#allocation8], 448
        %v2070 = vld [vmem:[%s2069] sm:$0xf]
        %v2071 = vld [vmem:[%s2069 + $0x4] sm:$0xf]
        %v2072 = vld [vmem:[%s2069 + $0x8] sm:$0xf]
        %v2073 = vld [vmem:[%s2069 + $0xc] sm:$0xf]
        %v2074 = vld [vmem:[%s2069 + $0x10] sm:$0xf]
        %v2075 = vld [vmem:[%s2069 + $0x14] sm:$0xf]
        %v2076 = vld [vmem:[%s2069 + $0x18] sm:$0xf]
        %v2077 = vld [vmem:[%s2069 + $0x1c] sm:$0xf]
        %v2078 = vld [vmem:[%s2069 + $0x20] sm:$0xf]
        %v2079 = vld [vmem:[%s2069 + $0x24] sm:$0xf]
        %v2080 = vld [vmem:[%s2069 + $0x28] sm:$0xf]
        %v2081 = vld [vmem:[%s2069 + $0x2c] sm:$0xf]
        %v2082 = vld [vmem:[%s2069 + $0x30] sm:$0xf]
        %v2083 = vld [vmem:[%s2069 + $0x34] sm:$0xf]
        %v2084 = vld [vmem:[%s2069 + $0x38] sm:$0xf]
        %v2085 = vld [vmem:[%s2069 + $0x3c] sm:$0xf]
        %v2102 = vunpack.c.l.b16 %v2070
        %v2103 = vunpack.c.l.b16 %v2071
        %v2104 = vunpack.c.l.b16 %v2072
        %v2105 = vunpack.c.l.b16 %v2073
        %v2106 = vunpack.c.l.b16 %v2074
        %v2107 = vunpack.c.l.b16 %v2075
        %v2108 = vunpack.c.l.b16 %v2076
        %v2109 = vunpack.c.l.b16 %v2077
        %v2110 = vunpack.c.l.b16 %v2078
        %v2111 = vunpack.c.l.b16 %v2079
        %v2112 = vunpack.c.l.b16 %v2080
        %v2113 = vunpack.c.l.b16 %v2081
        %v2114 = vunpack.c.l.b16 %v2082
        %v2115 = vunpack.c.l.b16 %v2083
        %v2116 = vunpack.c.l.b16 %v2084
        %v2117 = vunpack.c.l.b16 %v2085
        %v2118 = vpack.c.b16 %v2103, %v2102
        %v2119 = vpack.c.b16 %v2105, %v2104
        %v2120 = vpack.c.b16 %v2107, %v2106
        %v2121 = vpack.c.b16 %v2109, %v2108
        %v2122 = vpack.c.b16 %v2111, %v2110
        %v2123 = vpack.c.b16 %v2113, %v2112
        %v2124 = vpack.c.b16 %v2115, %v2114
        %v2125 = vpack.c.b16 %v2117, %v2116
        %2134 = vmatpush.bf16.msra.mxu0 %v2125
        %2135 = vmatpush.bf16.msra.mxu0 %v2124
        %2136 = vmatpush.bf16.msra.mxu0 %v2123
        %2137 = vmatpush.bf16.msra.mxu0 %v2122
        %2138 = vmatpush.bf16.msra.mxu0 %v2121
        %2139 = vmatpush.bf16.msra.mxu0 %v2120
        %2140 = vmatpush.bf16.msra.mxu0 %v2119
        %2141 = vmatpush.bf16.msra.mxu0 %v2118
        %2142 = vmatmul.bf16.gmra.mxu0 %v2061
        %v2143 = vpop.f32.mrf.mxu0
        %v2144 = vadd.f32 0.0, %v2143
        %v2145 = vpop.f32.mrf.mxu0
        %v2146 = vadd.f32 0.0, %v2145
        %2147 = vmatmul.bf16.gmra.mxu0 %v2062
        %v2148 = vpop.f32.mrf.mxu0
        %v2149 = vadd.f32 0.0, %v2148
        %v2150 = vpop.f32.mrf.mxu0
        %v2151 = vadd.f32 0.0, %v2150
        %2152 = vmatmul.bf16.gmra.mxu0 %v2063
        %v2153 = vpop.f32.mrf.mxu0
        %v2154 = vadd.f32 0.0, %v2153
        %v2155 = vpop.f32.mrf.mxu0
        %v2156 = vadd.f32 0.0, %v2155
        %2157 = vmatmul.bf16.gmra.mxu0 %v2064
        %v2158 = vpop.f32.mrf.mxu0
        %v2159 = vadd.f32 0.0, %v2158
        %v2160 = vpop.f32.mrf.mxu0
        %v2161 = vadd.f32 0.0, %v2160
        %2162 = vmatmul.bf16.gmra.mxu0 %v2065
        %v2163 = vpop.f32.mrf.mxu0
        %v2164 = vadd.f32 0.0, %v2163
        %v2165 = vpop.f32.mrf.mxu0
        %v2166 = vadd.f32 0.0, %v2165
        %2167 = vmatmul.bf16.gmra.mxu0 %v2066
        %v2168 = vpop.f32.mrf.mxu0
        %v2169 = vadd.f32 0.0, %v2168
        %v2170 = vpop.f32.mrf.mxu0
        %v2171 = vadd.f32 0.0, %v2170
        %2172 = vmatmul.bf16.gmra.mxu0 %v2067
        %v2173 = vpop.f32.mrf.mxu0
        %v2174 = vadd.f32 0.0, %v2173
        %v2175 = vpop.f32.mrf.mxu0
        %v2176 = vadd.f32 0.0, %v2175
        %2177 = vmatmul.bf16.gmra.mxu0 %v2068
        %v2178 = vpop.f32.mrf.mxu0
        %v2179 = vadd.f32 0.0, %v2178
        %v2180 = vpop.f32.mrf.mxu0
        %v2181 = vadd.f32 0.0, %v2180
        %2182 = vdwg.mxu0
        %v2183 = vadd.f32 %v2029, %v2144
        %v2184 = vadd.f32 %v2030, %v2146
        %v2185 = vadd.f32 %v2031, %v2149
        %v2186 = vadd.f32 %v2032, %v2151
        %v2187 = vadd.f32 %v2033, %v2154
        %v2188 = vadd.f32 %v2034, %v2156
        %v2189 = vadd.f32 %v2035, %v2159
        %v2190 = vadd.f32 %v2036, %v2161
        %v2191 = vadd.f32 %v2037, %v2164
        %v2192 = vadd.f32 %v2038, %v2166
        %v2193 = vadd.f32 %v2039, %v2169
        %v2194 = vadd.f32 %v2040, %v2171
        %v2195 = vadd.f32 %v2041, %v2174
        %v2196 = vadd.f32 %v2042, %v2176
        %v2197 = vadd.f32 %v2043, %v2179
        %v2198 = vadd.f32 %v2044, %v2181
        %v2199 = vld [vmem:[%s1890 + $0x2] sm:$0xff]
        %v2200 = vld [vmem:[%s1890 + $0xa] sm:$0xff]
        %v2201 = vld [vmem:[%s1890 + $0x1a] sm:$0xff]
        %v2202 = vld [vmem:[%s1890 + $0x22] sm:$0xff]
        %v2203 = vld [vmem:[%s1890 + $0x32] sm:$0xff]
        %v2204 = vld [vmem:[%s1890 + $0x3a] sm:$0xff]
        %v2205 = vld [vmem:[%s1890 + $0x4a] sm:$0xff]
        %v2206 = vld [vmem:[%s1890 + $0x52] sm:$0xff]
        %v2207 = vld [vmem:[%s1890 + $0x62] sm:$0xff]
        %v2208 = vld [vmem:[%s1890 + $0x6a] sm:$0xff]
        %v2209 = vld [vmem:[%s1890 + $0x7a] sm:$0xff]
        %v2210 = vld [vmem:[%s1890 + $0x82] sm:$0xff]
        %v2211 = vld [vmem:[%s1890 + $0x92] sm:$0xff]
        %v2212 = vld [vmem:[%s1890 + $0x9a] sm:$0xff]
        %v2213 = vld [vmem:[%s1890 + $0xaa] sm:$0xff]
        %v2214 = vld [vmem:[%s1890 + $0xb2] sm:$0xff]
        %v2215 = vpack.c.bf16 %v2200, %v2199
        %v2216 = vpack.c.bf16 %v2202, %v2201
        %v2217 = vpack.c.bf16 %v2204, %v2203
        %v2218 = vpack.c.bf16 %v2206, %v2205
        %v2219 = vpack.c.bf16 %v2208, %v2207
        %v2220 = vpack.c.bf16 %v2210, %v2209
        %v2221 = vpack.c.bf16 %v2212, %v2211
        %v2222 = vpack.c.bf16 %v2214, %v2213
        %s2223 = scalar_lea.vmem [#allocation8], 512
        %v2224 = vld [vmem:[%s2223] sm:$0xf]
        %v2225 = vld [vmem:[%s2223 + $0x4] sm:$0xf]
        %v2226 = vld [vmem:[%s2223 + $0x8] sm:$0xf]
        %v2227 = vld [vmem:[%s2223 + $0xc] sm:$0xf]
        %v2228 = vld [vmem:[%s2223 + $0x10] sm:$0xf]
        %v2229 = vld [vmem:[%s2223 + $0x14] sm:$0xf]
        %v2230 = vld [vmem:[%s2223 + $0x18] sm:$0xf]
        %v2231 = vld [vmem:[%s2223 + $0x1c] sm:$0xf]
        %v2232 = vld [vmem:[%s2223 + $0x20] sm:$0xf]
        %v2233 = vld [vmem:[%s2223 + $0x24] sm:$0xf]
        %v2234 = vld [vmem:[%s2223 + $0x28] sm:$0xf]
        %v2235 = vld [vmem:[%s2223 + $0x2c] sm:$0xf]
        %v2236 = vld [vmem:[%s2223 + $0x30] sm:$0xf]
        %v2237 = vld [vmem:[%s2223 + $0x34] sm:$0xf]
        %v2238 = vld [vmem:[%s2223 + $0x38] sm:$0xf]
        %v2239 = vld [vmem:[%s2223 + $0x3c] sm:$0xf]
        %v2256 = vunpack.c.l.b16 %v2224
        %v2257 = vunpack.c.l.b16 %v2225
        %v2258 = vunpack.c.l.b16 %v2226
        %v2259 = vunpack.c.l.b16 %v2227
        %v2260 = vunpack.c.l.b16 %v2228
        %v2261 = vunpack.c.l.b16 %v2229
        %v2262 = vunpack.c.l.b16 %v2230
        %v2263 = vunpack.c.l.b16 %v2231
        %v2264 = vunpack.c.l.b16 %v2232
        %v2265 = vunpack.c.l.b16 %v2233
        %v2266 = vunpack.c.l.b16 %v2234
        %v2267 = vunpack.c.l.b16 %v2235
        %v2268 = vunpack.c.l.b16 %v2236
        %v2269 = vunpack.c.l.b16 %v2237
        %v2270 = vunpack.c.l.b16 %v2238
        %v2271 = vunpack.c.l.b16 %v2239
        %v2272 = vpack.c.b16 %v2257, %v2256
        %v2273 = vpack.c.b16 %v2259, %v2258
        %v2274 = vpack.c.b16 %v2261, %v2260
        %v2275 = vpack.c.b16 %v2263, %v2262
        %v2276 = vpack.c.b16 %v2265, %v2264
        %v2277 = vpack.c.b16 %v2267, %v2266
        %v2278 = vpack.c.b16 %v2269, %v2268
        %v2279 = vpack.c.b16 %v2271, %v2270
        %2288 = vmatpush.bf16.msra.mxu0 %v2279
        %2289 = vmatpush.bf16.msra.mxu0 %v2278
        %2290 = vmatpush.bf16.msra.mxu0 %v2277
        %2291 = vmatpush.bf16.msra.mxu0 %v2276
        %2292 = vmatpush.bf16.msra.mxu0 %v2275
        %2293 = vmatpush.bf16.msra.mxu0 %v2274
        %2294 = vmatpush.bf16.msra.mxu0 %v2273
        %2295 = vmatpush.bf16.msra.mxu0 %v2272
        %2296 = vmatmul.bf16.gmra.mxu0 %v2215
        %v2297 = vpop.f32.mrf.mxu0
        %v2298 = vadd.f32 0.0, %v2297
        %v2299 = vpop.f32.mrf.mxu0
        %v2300 = vadd.f32 0.0, %v2299
        %2301 = vmatmul.bf16.gmra.mxu0 %v2216
        %v2302 = vpop.f32.mrf.mxu0
        %v2303 = vadd.f32 0.0, %v2302
        %v2304 = vpop.f32.mrf.mxu0
        %v2305 = vadd.f32 0.0, %v2304
        %2306 = vmatmul.bf16.gmra.mxu0 %v2217
        %v2307 = vpop.f32.mrf.mxu0
        %v2308 = vadd.f32 0.0, %v2307
        %v2309 = vpop.f32.mrf.mxu0
        %v2310 = vadd.f32 0.0, %v2309
        %2311 = vmatmul.bf16.gmra.mxu0 %v2218
        %v2312 = vpop.f32.mrf.mxu0
        %v2313 = vadd.f32 0.0, %v2312
        %v2314 = vpop.f32.mrf.mxu0
        %v2315 = vadd.f32 0.0, %v2314
        %2316 = vmatmul.bf16.gmra.mxu0 %v2219
        %v2317 = vpop.f32.mrf.mxu0
        %v2318 = vadd.f32 0.0, %v2317
        %v2319 = vpop.f32.mrf.mxu0
        %v2320 = vadd.f32 0.0, %v2319
        %2321 = vmatmul.bf16.gmra.mxu0 %v2220
        %v2322 = vpop.f32.mrf.mxu0
        %v2323 = vadd.f32 0.0, %v2322
        %v2324 = vpop.f32.mrf.mxu0
        %v2325 = vadd.f32 0.0, %v2324
        %2326 = vmatmul.bf16.gmra.mxu0 %v2221
        %v2327 = vpop.f32.mrf.mxu0
        %v2328 = vadd.f32 0.0, %v2327
        %v2329 = vpop.f32.mrf.mxu0
        %v2330 = vadd.f32 0.0, %v2329
        %2331 = vmatmul.bf16.gmra.mxu0 %v2222
        %v2332 = vpop.f32.mrf.mxu0
        %v2333 = vadd.f32 0.0, %v2332
        %v2334 = vpop.f32.mrf.mxu0
        %v2335 = vadd.f32 0.0, %v2334
        %2336 = vdwg.mxu0
        %v2337 = vadd.f32 %v2183, %v2298
        %v2338 = vadd.f32 %v2184, %v2300
        %v2339 = vadd.f32 %v2185, %v2303
        %v2340 = vadd.f32 %v2186, %v2305
        %v2341 = vadd.f32 %v2187, %v2308
        %v2342 = vadd.f32 %v2188, %v2310
        %v2343 = vadd.f32 %v2189, %v2313
        %v2344 = vadd.f32 %v2190, %v2315
        %v2345 = vadd.f32 %v2191, %v2318
        %v2346 = vadd.f32 %v2192, %v2320
        %v2347 = vadd.f32 %v2193, %v2323
        %v2348 = vadd.f32 %v2194, %v2325
        %v2349 = vadd.f32 %v2195, %v2328
        %v2350 = vadd.f32 %v2196, %v2330
        %v2351 = vadd.f32 %v2197, %v2333
        %v2352 = vadd.f32 %v2198, %v2335
        %v2353 = vld [vmem:[%s5] sm:$0x1]
        %v2355 = vperm.slane %v2353, 0
        %v2357 = vmul.f32 %v2337, %v2355
        %v2358 = vmul.f32 %v2338, %v2355
        %v2359 = vmul.f32 %v2339, %v2355
        %v2360 = vmul.f32 %v2340, %v2355
        %v2361 = vmul.f32 %v2341, %v2355
        %v2362 = vmul.f32 %v2342, %v2355
        %v2363 = vmul.f32 %v2343, %v2355
        %v2364 = vmul.f32 %v2344, %v2355
        %v2365 = vmul.f32 %v2345, %v2355
        %v2366 = vmul.f32 %v2346, %v2355
        %v2367 = vmul.f32 %v2347, %v2355
        %v2368 = vmul.f32 %v2348, %v2355
        %v2369 = vmul.f32 %v2349, %v2355
        %v2370 = vmul.f32 %v2350, %v2355
        %v2371 = vmul.f32 %v2351, %v2355
        %v2372 = vmul.f32 %v2352, %v2355
        %v2373 = vld [vmem:[%s6] sm:$0x1]
        %v2375 = vperm.slane %v2373, 0
        %v2377 = vadd.f32 %v2357, %v2375
        %v2378 = vadd.f32 %v2358, %v2375
        %v2379 = vadd.f32 %v2359, %v2375
        %v2380 = vadd.f32 %v2360, %v2375
        %v2381 = vadd.f32 %v2361, %v2375
        %v2382 = vadd.f32 %v2362, %v2375
        %v2383 = vadd.f32 %v2363, %v2375
        %v2384 = vadd.f32 %v2364, %v2375
        %v2385 = vadd.f32 %v2365, %v2375
        %v2386 = vadd.f32 %v2366, %v2375
        %v2387 = vadd.f32 %v2367, %v2375
        %v2388 = vadd.f32 %v2368, %v2375
        %v2389 = vadd.f32 %v2369, %v2375
        %v2390 = vadd.f32 %v2370, %v2375
        %v2391 = vadd.f32 %v2371, %v2375
        %v2392 = vadd.f32 %v2372, %v2375
        %v2393 = vmax.f32 %v2377, 0.0
        %v2394 = vmax.f32 %v2378, 0.0
        %v2395 = vmax.f32 %v2379, 0.0
        %v2396 = vmax.f32 %v2380, 0.0
        %v2397 = vmax.f32 %v2381, 0.0
        %v2398 = vmax.f32 %v2382, 0.0
        %v2399 = vmax.f32 %v2383, 0.0
        %v2400 = vmax.f32 %v2384, 0.0
        %v2401 = vmax.f32 %v2385, 0.0
        %v2402 = vmax.f32 %v2386, 0.0
        %v2403 = vmax.f32 %v2387, 0.0
        %v2404 = vmax.f32 %v2388, 0.0
        %v2405 = vmax.f32 %v2389, 0.0
        %v2406 = vmax.f32 %v2390, 0.0
        %v2407 = vmax.f32 %v2391, 0.0
        %v2408 = vmax.f32 %v2392, 0.0
        %v2409 = vpack.c.bf16 %v2394, %v2393
        %v2410 = vpack.c.bf16 %v2396, %v2395
        %v2411 = vpack.c.bf16 %v2398, %v2397
        %v2412 = vpack.c.bf16 %v2400, %v2399
        %v2413 = vpack.c.bf16 %v2402, %v2401
        %v2414 = vpack.c.bf16 %v2404, %v2403
        %v2415 = vpack.c.bf16 %v2406, %v2405
        %v2416 = vpack.c.bf16 %v2408, %v2407
        %v2417 = vld [vmem:[#allocation9] sm:$0xf]
        %v2418 = vld [vmem:[#allocation9 + $0x4] sm:$0xf]
        %v2419 = vld [vmem:[#allocation9 + $0x8] sm:$0xf]
        %v2420 = vld [vmem:[#allocation9 + $0xc] sm:$0xf]
        %v2421 = vld [vmem:[#allocation9 + $0x10] sm:$0xf]
        %v2422 = vld [vmem:[#allocation9 + $0x14] sm:$0xf]
        %v2423 = vld [vmem:[#allocation9 + $0x18] sm:$0xf]
        %v2424 = vld [vmem:[#allocation9 + $0x1c] sm:$0xf]
        %v2425 = vld [vmem:[#allocation9 + $0x20] sm:$0xf]
        %v2426 = vld [vmem:[#allocation9 + $0x24] sm:$0xf]
        %v2427 = vld [vmem:[#allocation9 + $0x28] sm:$0xf]
        %v2428 = vld [vmem:[#allocation9 + $0x2c] sm:$0xf]
        %v2429 = vld [vmem:[#allocation9 + $0x30] sm:$0xf]
        %v2430 = vld [vmem:[#allocation9 + $0x34] sm:$0xf]
        %v2431 = vld [vmem:[#allocation9 + $0x38] sm:$0xf]
        %v2432 = vld [vmem:[#allocation9 + $0x3c] sm:$0xf]
        %v2449 = vunpack.c.l.b16 %v2417
        %v2450 = vunpack.c.l.b16 %v2418
        %v2451 = vunpack.c.l.b16 %v2419
        %v2452 = vunpack.c.l.b16 %v2420
        %v2453 = vunpack.c.l.b16 %v2421
        %v2454 = vunpack.c.l.b16 %v2422
        %v2455 = vunpack.c.l.b16 %v2423
        %v2456 = vunpack.c.l.b16 %v2424
        %v2457 = vunpack.c.l.b16 %v2425
        %v2458 = vunpack.c.l.b16 %v2426
        %v2459 = vunpack.c.l.b16 %v2427
        %v2460 = vunpack.c.l.b16 %v2428
        %v2461 = vunpack.c.l.b16 %v2429
        %v2462 = vunpack.c.l.b16 %v2430
        %v2463 = vunpack.c.l.b16 %v2431
        %v2464 = vunpack.c.l.b16 %v2432
        %v2465 = vpack.c.b16 %v2450, %v2449
        %v2466 = vpack.c.b16 %v2452, %v2451
        %v2467 = vpack.c.b16 %v2454, %v2453
        %v2468 = vpack.c.b16 %v2456, %v2455
        %v2469 = vpack.c.b16 %v2458, %v2457
        %v2470 = vpack.c.b16 %v2460, %v2459
        %v2471 = vpack.c.b16 %v2462, %v2461
        %v2472 = vpack.c.b16 %v2464, %v2463
        %2481 = vmatpush.bf16.msra.mxu0 %v2472
        %2482 = vmatpush.bf16.msra.mxu0 %v2471
        %2483 = vmatpush.bf16.msra.mxu0 %v2470
        %2484 = vmatpush.bf16.msra.mxu0 %v2469
        %2485 = vmatpush.bf16.msra.mxu0 %v2468
        %2486 = vmatpush.bf16.msra.mxu0 %v2467
        %2487 = vmatpush.bf16.msra.mxu0 %v2466
        %2488 = vmatpush.bf16.msra.mxu0 %v2465
        %2489 = vmatmul.bf16.gmra.mxu0 %v2409
        %v2490 = vpop.f32.mrf.mxu0
        %v2491 = vadd.f32 0.0, %v2490
        %v2492 = vpop.f32.mrf.mxu0
        %v2493 = vadd.f32 0.0, %v2492
        %2494 = vmatmul.bf16.gmra.mxu0 %v2410
        %v2495 = vpop.f32.mrf.mxu0
        %v2496 = vadd.f32 0.0, %v2495
        %v2497 = vpop.f32.mrf.mxu0
        %v2498 = vadd.f32 0.0, %v2497
        %2499 = vmatmul.bf16.gmra.mxu0 %v2411
        %v2500 = vpop.f32.mrf.mxu0
        %v2501 = vadd.f32 0.0, %v2500
        %v2502 = vpop.f32.mrf.mxu0
        %v2503 = vadd.f32 0.0, %v2502
        %2504 = vmatmul.bf16.gmra.mxu0 %v2412
        %v2505 = vpop.f32.mrf.mxu0
        %v2506 = vadd.f32 0.0, %v2505
        %v2507 = vpop.f32.mrf.mxu0
        %v2508 = vadd.f32 0.0, %v2507
        %2509 = vmatmul.bf16.gmra.mxu0 %v2413
        %v2510 = vpop.f32.mrf.mxu0
        %v2511 = vadd.f32 0.0, %v2510
        %v2512 = vpop.f32.mrf.mxu0
        %v2513 = vadd.f32 0.0, %v2512
        %2514 = vmatmul.bf16.gmra.mxu0 %v2414
        %v2515 = vpop.f32.mrf.mxu0
        %v2516 = vadd.f32 0.0, %v2515
        %v2517 = vpop.f32.mrf.mxu0
        %v2518 = vadd.f32 0.0, %v2517
        %2519 = vmatmul.bf16.gmra.mxu0 %v2415
        %v2520 = vpop.f32.mrf.mxu0
        %v2521 = vadd.f32 0.0, %v2520
        %v2522 = vpop.f32.mrf.mxu0
        %v2523 = vadd.f32 0.0, %v2522
        %2524 = vmatmul.bf16.gmra.mxu0 %v2416
        %v2525 = vpop.f32.mrf.mxu0
        %v2526 = vadd.f32 0.0, %v2525
        %v2527 = vpop.f32.mrf.mxu0
        %v2528 = vadd.f32 0.0, %v2527
        %2529 = vdwg.mxu0
        %v2530 = vld [vmem:[%s8] sm:$0x1]
        %v2532 = vperm.slane %v2530, 0
        %v2534 = vmul.f32 %v2491, %v2532
        %v2535 = vmul.f32 %v2493, %v2532
        %v2536 = vmul.f32 %v2496, %v2532
        %v2537 = vmul.f32 %v2498, %v2532
        %v2538 = vmul.f32 %v2501, %v2532
        %v2539 = vmul.f32 %v2503, %v2532
        %v2540 = vmul.f32 %v2506, %v2532
        %v2541 = vmul.f32 %v2508, %v2532
        %v2542 = vmul.f32 %v2511, %v2532
        %v2543 = vmul.f32 %v2513, %v2532
        %v2544 = vmul.f32 %v2516, %v2532
        %v2545 = vmul.f32 %v2518, %v2532
        %v2546 = vmul.f32 %v2521, %v2532
        %v2547 = vmul.f32 %v2523, %v2532
        %v2548 = vmul.f32 %v2526, %v2532
        %v2549 = vmul.f32 %v2528, %v2532
        %v2550 = vld [vmem:[%s9] sm:$0x1]
        %v2552 = vperm.slane %v2550, 0
        %v2554 = vadd.f32 %v2534, %v2552
        %v2555 = vadd.f32 %v2535, %v2552
        %v2556 = vadd.f32 %v2536, %v2552
        %v2557 = vadd.f32 %v2537, %v2552
        %v2558 = vadd.f32 %v2538, %v2552
        %v2559 = vadd.f32 %v2539, %v2552
        %v2560 = vadd.f32 %v2540, %v2552
        %v2561 = vadd.f32 %v2541, %v2552
        %v2562 = vadd.f32 %v2542, %v2552
        %v2563 = vadd.f32 %v2543, %v2552
        %v2564 = vadd.f32 %v2544, %v2552
        %v2565 = vadd.f32 %v2545, %v2552
        %v2566 = vadd.f32 %v2546, %v2552
        %v2567 = vadd.f32 %v2547, %v2552
        %v2568 = vadd.f32 %v2548, %v2552
        %v2569 = vadd.f32 %v2549, %v2552
        %v2570 = vld [vmem:[%s544] sm:$0xff]
        %v2571 = vld [vmem:[%s544 + $0x8] sm:$0xff]
        %v2572 = vld [vmem:[%s544 + $0x10] sm:$0xff]
        %v2573 = vld [vmem:[%s544 + $0x18] sm:$0xff]
        %v2574 = vld [vmem:[%s544 + $0x20] sm:$0xff]
        %v2575 = vld [vmem:[%s544 + $0x28] sm:$0xff]
        %v2576 = vld [vmem:[%s544 + $0x30] sm:$0xff]
        %v2577 = vld [vmem:[%s544 + $0x38] sm:$0xff]
        %v2578 = vld [vmem:[%s544 + $0x40] sm:$0xff]
        %v2579 = vld [vmem:[%s544 + $0x48] sm:$0xff]
        %v2580 = vld [vmem:[%s544 + $0x50] sm:$0xff]
        %v2581 = vld [vmem:[%s544 + $0x58] sm:$0xff]
        %v2582 = vld [vmem:[%s544 + $0x60] sm:$0xff]
        %v2583 = vld [vmem:[%s544 + $0x68] sm:$0xff]
        %v2584 = vld [vmem:[%s544 + $0x70] sm:$0xff]
        %v2585 = vld [vmem:[%s544 + $0x78] sm:$0xff]
        %v2586 = vpack.c.bf16 %v2571, %v2570
        %v2587 = vpack.c.bf16 %v2573, %v2572
        %v2588 = vpack.c.bf16 %v2575, %v2574
        %v2589 = vpack.c.bf16 %v2577, %v2576
        %v2590 = vpack.c.bf16 %v2579, %v2578
        %v2591 = vpack.c.bf16 %v2581, %v2580
        %v2592 = vpack.c.bf16 %v2583, %v2582
        %v2593 = vpack.c.bf16 %v2585, %v2584
        %v2594 = vld [vmem:[#allocation11] sm:$0xf]
        %v2595 = vld [vmem:[#allocation11 + $0x4] sm:$0xf]
        %v2596 = vld [vmem:[#allocation11 + $0x8] sm:$0xf]
        %v2597 = vld [vmem:[#allocation11 + $0xc] sm:$0xf]
        %v2598 = vld [vmem:[#allocation11 + $0x10] sm:$0xf]
        %v2599 = vld [vmem:[#allocation11 + $0x14] sm:$0xf]
        %v2600 = vld [vmem:[#allocation11 + $0x18] sm:$0xf]
        %v2601 = vld [vmem:[#allocation11 + $0x1c] sm:$0xf]
        %v2602 = vld [vmem:[#allocation11 + $0x20] sm:$0xf]
        %v2603 = vld [vmem:[#allocation11 + $0x24] sm:$0xf]
        %v2604 = vld [vmem:[#allocation11 + $0x28] sm:$0xf]
        %v2605 = vld [vmem:[#allocation11 + $0x2c] sm:$0xf]
        %v2606 = vld [vmem:[#allocation11 + $0x30] sm:$0xf]
        %v2607 = vld [vmem:[#allocation11 + $0x34] sm:$0xf]
        %v2608 = vld [vmem:[#allocation11 + $0x38] sm:$0xf]
        %v2609 = vld [vmem:[#allocation11 + $0x3c] sm:$0xf]
        %v2626 = vunpack.c.l.b16 %v2594
        %v2627 = vunpack.c.l.b16 %v2595
        %v2628 = vunpack.c.l.b16 %v2596
        %v2629 = vunpack.c.l.b16 %v2597
        %v2630 = vunpack.c.l.b16 %v2598
        %v2631 = vunpack.c.l.b16 %v2599
        %v2632 = vunpack.c.l.b16 %v2600
        %v2633 = vunpack.c.l.b16 %v2601
        %v2634 = vunpack.c.l.b16 %v2602
        %v2635 = vunpack.c.l.b16 %v2603
        %v2636 = vunpack.c.l.b16 %v2604
        %v2637 = vunpack.c.l.b16 %v2605
        %v2638 = vunpack.c.l.b16 %v2606
        %v2639 = vunpack.c.l.b16 %v2607
        %v2640 = vunpack.c.l.b16 %v2608
        %v2641 = vunpack.c.l.b16 %v2609
        %v2642 = vpack.c.b16 %v2627, %v2626
        %v2643 = vpack.c.b16 %v2629, %v2628
        %v2644 = vpack.c.b16 %v2631, %v2630
        %v2645 = vpack.c.b16 %v2633, %v2632
        %v2646 = vpack.c.b16 %v2635, %v2634
        %v2647 = vpack.c.b16 %v2637, %v2636
        %v2648 = vpack.c.b16 %v2639, %v2638
        %v2649 = vpack.c.b16 %v2641, %v2640
        %2658 = vmatpush.bf16.msra.mxu0 %v2649
        %2659 = vmatpush.bf16.msra.mxu0 %v2648
        %2660 = vmatpush.bf16.msra.mxu0 %v2647
        %2661 = vmatpush.bf16.msra.mxu0 %v2646
        %2662 = vmatpush.bf16.msra.mxu0 %v2645
        %2663 = vmatpush.bf16.msra.mxu0 %v2644
        %2664 = vmatpush.bf16.msra.mxu0 %v2643
        %2665 = vmatpush.bf16.msra.mxu0 %v2642
        %2666 = vmatmul.bf16.gmra.mxu0 %v2586
        %v2667 = vpop.f32.mrf.mxu0
        %v2668 = vadd.f32 0.0, %v2667
        %v2669 = vpop.f32.mrf.mxu0
        %v2670 = vadd.f32 0.0, %v2669
        %2671 = vmatmul.bf16.gmra.mxu0 %v2587
        %v2672 = vpop.f32.mrf.mxu0
        %v2673 = vadd.f32 0.0, %v2672
        %v2674 = vpop.f32.mrf.mxu0
        %v2675 = vadd.f32 0.0, %v2674
        %2676 = vmatmul.bf16.gmra.mxu0 %v2588
        %v2677 = vpop.f32.mrf.mxu0
        %v2678 = vadd.f32 0.0, %v2677
        %v2679 = vpop.f32.mrf.mxu0
        %v2680 = vadd.f32 0.0, %v2679
        %2681 = vmatmul.bf16.gmra.mxu0 %v2589
        %v2682 = vpop.f32.mrf.mxu0
        %v2683 = vadd.f32 0.0, %v2682
        %v2684 = vpop.f32.mrf.mxu0
        %v2685 = vadd.f32 0.0, %v2684
        %2686 = vmatmul.bf16.gmra.mxu0 %v2590
        %v2687 = vpop.f32.mrf.mxu0
        %v2688 = vadd.f32 0.0, %v2687
        %v2689 = vpop.f32.mrf.mxu0
        %v2690 = vadd.f32 0.0, %v2689
        %2691 = vmatmul.bf16.gmra.mxu0 %v2591
        %v2692 = vpop.f32.mrf.mxu0
        %v2693 = vadd.f32 0.0, %v2692
        %v2694 = vpop.f32.mrf.mxu0
        %v2695 = vadd.f32 0.0, %v2694
        %2696 = vmatmul.bf16.gmra.mxu0 %v2592
        %v2697 = vpop.f32.mrf.mxu0
        %v2698 = vadd.f32 0.0, %v2697
        %v2699 = vpop.f32.mrf.mxu0
        %v2700 = vadd.f32 0.0, %v2699
        %2701 = vmatmul.bf16.gmra.mxu0 %v2593
        %v2702 = vpop.f32.mrf.mxu0
        %v2703 = vadd.f32 0.0, %v2702
        %v2704 = vpop.f32.mrf.mxu0
        %v2705 = vadd.f32 0.0, %v2704
        %2706 = vdwg.mxu0
        %v2707 = vld [vmem:[%s11] sm:$0x1]
        %v2709 = vperm.slane %v2707, 0
        %v2711 = vmul.f32 %v2668, %v2709
        %v2712 = vmul.f32 %v2670, %v2709
        %v2713 = vmul.f32 %v2673, %v2709
        %v2714 = vmul.f32 %v2675, %v2709
        %v2715 = vmul.f32 %v2678, %v2709
        %v2716 = vmul.f32 %v2680, %v2709
        %v2717 = vmul.f32 %v2683, %v2709
        %v2718 = vmul.f32 %v2685, %v2709
        %v2719 = vmul.f32 %v2688, %v2709
        %v2720 = vmul.f32 %v2690, %v2709
        %v2721 = vmul.f32 %v2693, %v2709
        %v2722 = vmul.f32 %v2695, %v2709
        %v2723 = vmul.f32 %v2698, %v2709
        %v2724 = vmul.f32 %v2700, %v2709
        %v2725 = vmul.f32 %v2703, %v2709
        %v2726 = vmul.f32 %v2705, %v2709
        %v2727 = vld [vmem:[%s12] sm:$0x1]
        %v2729 = vperm.slane %v2727, 0
        %v2731 = vadd.f32 %v2711, %v2729
        %v2732 = vadd.f32 %v2712, %v2729
        %v2733 = vadd.f32 %v2713, %v2729
        %v2734 = vadd.f32 %v2714, %v2729
        %v2735 = vadd.f32 %v2715, %v2729
        %v2736 = vadd.f32 %v2716, %v2729
        %v2737 = vadd.f32 %v2717, %v2729
        %v2738 = vadd.f32 %v2718, %v2729
        %v2739 = vadd.f32 %v2719, %v2729
        %v2740 = vadd.f32 %v2720, %v2729
        %v2741 = vadd.f32 %v2721, %v2729
        %v2742 = vadd.f32 %v2722, %v2729
        %v2743 = vadd.f32 %v2723, %v2729
        %v2744 = vadd.f32 %v2724, %v2729
        %v2745 = vadd.f32 %v2725, %v2729
        %v2746 = vadd.f32 %v2726, %v2729
        %v2747 = vadd.f32 %v2554, %v2731
        %v2748 = vadd.f32 %v2555, %v2732
        %v2749 = vadd.f32 %v2556, %v2733
        %v2750 = vadd.f32 %v2557, %v2734
        %v2751 = vadd.f32 %v2558, %v2735
        %v2752 = vadd.f32 %v2559, %v2736
        %v2753 = vadd.f32 %v2560, %v2737
        %v2754 = vadd.f32 %v2561, %v2738
        %v2755 = vadd.f32 %v2562, %v2739
        %v2756 = vadd.f32 %v2563, %v2740
        %v2757 = vadd.f32 %v2564, %v2741
        %v2758 = vadd.f32 %v2565, %v2742
        %v2759 = vadd.f32 %v2566, %v2743
        %v2760 = vadd.f32 %v2567, %v2744
        %v2761 = vadd.f32 %v2568, %v2745
        %v2762 = vadd.f32 %v2569, %v2746
        %v2763 = vmax.f32 %v2747, 0.0
        %v2764 = vmax.f32 %v2748, 0.0
        %v2765 = vmax.f32 %v2749, 0.0
        %v2766 = vmax.f32 %v2750, 0.0
        %v2767 = vmax.f32 %v2751, 0.0
        %v2768 = vmax.f32 %v2752, 0.0
        %v2769 = vmax.f32 %v2753, 0.0
        %v2770 = vmax.f32 %v2754, 0.0
        %v2771 = vmax.f32 %v2755, 0.0
        %v2772 = vmax.f32 %v2756, 0.0
        %v2773 = vmax.f32 %v2757, 0.0
        %v2774 = vmax.f32 %v2758, 0.0
        %v2775 = vmax.f32 %v2759, 0.0
        %v2776 = vmax.f32 %v2760, 0.0
        %v2777 = vmax.f32 %v2761, 0.0
        %v2778 = vmax.f32 %v2762, 0.0
        %2779 = vst [vmem:[%s540] sm:$0xff] %v2763
        %2780 = vst [vmem:[%s540 + $0x8] sm:$0xff] %v2764
        %2781 = vst [vmem:[%s540 + $0x10] sm:$0xff] %v2765
        %2782 = vst [vmem:[%s540 + $0x18] sm:$0xff] %v2766
        %2783 = vst [vmem:[%s540 + $0x20] sm:$0xff] %v2767
        %2784 = vst [vmem:[%s540 + $0x28] sm:$0xff] %v2768
        %2785 = vst [vmem:[%s540 + $0x30] sm:$0xff] %v2769
        %2786 = vst [vmem:[%s540 + $0x38] sm:$0xff] %v2770
        %2787 = vst [vmem:[%s540 + $0x40] sm:$0xff] %v2771
        %2788 = vst [vmem:[%s540 + $0x48] sm:$0xff] %v2772
        %2789 = vst [vmem:[%s540 + $0x50] sm:$0xff] %v2773
        %2790 = vst [vmem:[%s540 + $0x58] sm:$0xff] %v2774
        %2791 = vst [vmem:[%s540 + $0x60] sm:$0xff] %v2775
        %2792 = vst [vmem:[%s540 + $0x68] sm:$0xff] %v2776
        %2793 = vst [vmem:[%s540 + $0x70] sm:$0xff] %v2777
        %2794 = vst [vmem:[%s540 + $0x78] sm:$0xff] %v2778
        %s2795 = sand.u32 %s332, 1
        %s2796 = scalar_lea.sflag [#allocation5], %s2795
        %s2797 = sand.u32 %s332, 1
        %s2798 = smul.addr %s2797, 128
        %s2799 = scalar_lea.vmem [#allocation12], %s2798
        // Predicated region
        $region109: #{tpu_custom_call.1} parent=71 // pred_check
          %p2800 = pneg %p342
        $region110: #{tpu_custom_call.1} parent=71 // pred_check_branch
          %2802 = sbr.rel (%p2800) target = $region112
        $region111: #{tpu_custom_call.1} parent=71 // pred_region
          %s2803 = smul.u32 8, %s37
          %2805 = vsyncadd %s2796, 0
          %s2806 = smul.addr %s2803, 2
          %s2807 = smul.addr %s36, 32
          %s2808 = sadd.s32 %s2806, %s2807
          %s2809 = smul.addr %s2808, 8
          %s2810 = scalar_lea.hbm %s13, %s2809
          %s2811 = sshll.u32 %s2799, 4
          %s2812 = int_to_ptr.vmem [resolvable:$true] %s2811
          %s2813 = sshll.u32 %s2810, 4
          %s2814 = int_to_ptr.hbm [resolvable:$true] %s2813
          %2819 = dma.vmem_to_hbm [thread:$0]  %s2812, 2048, %s2814, %s2796, 128, 128, 8
        $region112: #{tpu_custom_call.1} parent=71 // pred_fallthru
          _
      $region72: #{tpu_custom_call.1} parent=5 // pred_fallthru
        _
      %p2820 = scmp.le.s32.totalorder 2, %s27
      // Predicated region
      $region113: #{tpu_custom_call.1} parent=5 // pred_check
        %p2821 = pneg %p2820
      $region114: #{tpu_custom_call.1} parent=5 // pred_check_branch
        %2823 = sbr.rel (%p2821) target = $region116
      $region115: #{tpu_custom_call.1} parent=5 // pred_region
        %s2824 = ssub.s32 %s27, 2
        // Predicated region
        $region117: #{tpu_custom_call.1} parent=115 // pred_check
          %p2825 = pneg %p348
        $region118: #{tpu_custom_call.1} parent=115 // pred_check_branch
          %2827 = sbr.rel (%p2825) target = $region120
        $region119: #{tpu_custom_call.1} parent=115 // pred_region
          %s2828 = sand.u32 %s333, 1
          %s2829 = scalar_lea.sflag [#allocation5], %s2828
          %s2830 = sand.u32 %s333, 1
          %s2831 = smul.addr %s2830, 128
          %s2832 = scalar_lea.vmem [#allocation12], %s2831
          %2834 = dma.done %s2829, 2048
        $region120: #{tpu_custom_call.1} parent=115 // pred_fallthru
          _
      $region116: #{tpu_custom_call.1} parent=5 // pred_fallthru
        _
    $region6: #{tpu_custom_call.1} parent=1 // loop_footer
      %s31 = sadd.s32 1, %s27
    $region7: #{tpu_custom_call.1} parent=1 // loop_footer_branch
      %26 = sbr.rel target = $region3
    $region8: #{tpu_custom_call.1} parent=1 // loop_exit
      _
    %2835 = vsyncpa [#allocation4], 1
    %s2836 = scalar_lea.sflag [#allocation4], 1
    %2837 = vsyncpa %s2836, 1
    %2838 = vsyncpa [#allocation7], 1
    %2839 = vsyncpa [#allocation10], 1
    %2840 = vsyncpa [#allocation5], 1
    %s2841 = scalar_lea.sflag [#allocation5], 1
    %2842 = vsyncpa %s2841, 1

</llo_original>
